<compile_context>
chip_gen: v7x
topology: tpu7x:2x2x1
jax: 0.10.0
libtpu: 0.0.40
codegen_flags: <defaults>
</compile_context>

<pallas_src>
import functools

import jax
import jax.numpy as jnp
from jax.experimental import pallas as pl
from jax.experimental.pallas import tpu as pltpu


def make_mstn_kernel(n_features, n_class, dis_hidden, out_w):
    def mstn_kernel(x_ref,
                    w1_ref, b1_ref,      # Generator layer 1 (bf16 W, f32 b)
                    w2_ref, b2_ref,      # Generator layer 2 -> n_features
                    wcd_ref, bcd_ref,    # fused [Classifier | Disc-L1], padded to 128
                    wd2_ref, bd2_ref,    # Disc-L2 as (1, dis_hidden) row + scalar bias
                    out_ref):            # (TILE_B, 128) packed output slab
        tile_b = x_ref.shape[0]

        # ---- Generator: feats = relu(relu(x @ W1 + b1) @ W2 + b2) ----
        h1 = jnp.dot(x_ref[...], w1_ref[...],
                     preferred_element_type=jnp.float32) + b1_ref[...]
        h1 = jnp.maximum(h1, 0.0)
        feats = jnp.dot(h1.astype(jnp.bfloat16), w2_ref[...],
                        preferred_element_type=jnp.float32) + b2_ref[...]
        feats = jnp.maximum(feats, 0.0)

        # ---- Fused Classifier + Discriminator layer 1 (shared LHS) ----
        cd = jnp.dot(feats.astype(jnp.bfloat16), wcd_ref[...],
                     preferred_element_type=jnp.float32) + bcd_ref[...]
        c_out = cd[:, :n_class]
        d1 = jnp.maximum(cd[:, n_class:n_class + dis_hidden], 0.0)

        # ---- Rx (gradient reversal) is identity in forward ----
        # ---- Discriminator layer 2: N=1 matmul -> VPU multiply-reduce ----
        d2 = jnp.sum(d1 * wd2_ref[...].astype(jnp.float32),
                     axis=-1, keepdims=True) + bd2_ref[...]
        d_out = jax.nn.sigmoid(d2)

        # ---- Pack into one lane-dense 128-wide slab ----
        out_ref[:, :n_features] = feats.astype(out_ref.dtype)
        out_ref[:, n_features:n_features + n_class] = c_out.astype(out_ref.dtype)
        # d_out broadcast across the remaining lanes (only col n_features+n_class
        # is read back in the wrapper; the rest is padding).
        out_ref[:, n_features + n_class:] = jnp.broadcast_to(
            d_out, (tile_b, out_w - n_features - n_class)).astype(out_ref.dtype)

    return mstn_kernel


def mstn_forward(x_nchw, params, *, tile_b=512):
    """Returns (C_out, features, D_out) like the PyTorch MSTN.forward."""
    B = x_nchw.shape[0]
    x_flat = x_nchw.reshape(B, -1)
    d_in = x_flat.shape[1]

    (w1, b1, w2, b2, wc, bc, wd1, bd1, wd2, bd2) = params
    gen_hidden = w1.shape[1]
    n_features = w2.shape[1]
    n_class = wc.shape[1]
    dis_hidden = wd1.shape[1]
    out_w = 128                                  # lane-dense output slab width
    assert n_features + n_class + 1 <= out_w

    # --- Parameter prep: bf16 weights, fused & zero-padded classifier/disc-L1 ---
    bf16 = jnp.bfloat16
    w1b = w1.astype(bf16)
    w2b = w2.astype(bf16)
    wcd = jnp.concatenate([wc, wd1], axis=1)                       # (nf, nc+dh)
    wcd = jnp.pad(wcd, ((0, 0), (0, out_w - wcd.shape[1]))).astype(bf16)
    bcd = jnp.concatenate([bc, bd1], axis=1)                       # (1, nc+dh)
    bcd = jnp.pad(bcd, ((0, 0), (0, out_w - bcd.shape[1]))).astype(jnp.float32)
    wd2row = wd2.reshape(1, dis_hidden).astype(bf16)               # (1, dh)
    bd2s = bd2.reshape(1, 1).astype(jnp.float32)
    b1f = b1.astype(jnp.float32)
    b2f = b2.astype(jnp.float32)

    # --- Pad batch to a multiple of the (sublane-aligned) batch tile ---
    n_tiles = pl.cdiv(B, tile_b)
    b_pad = n_tiles * tile_b
    x_pad = jnp.zeros((b_pad, d_in), bf16).at[:B].set(x_flat.astype(bf16))

    const2 = lambda i: (0, 0)        # weights/biases resident across grid steps
    in_specs = [
        pl.BlockSpec((tile_b, d_in), lambda i: (i, 0)),
        pl.BlockSpec(w1b.shape, const2), pl.BlockSpec(b1f.shape, const2),
        pl.BlockSpec(w2b.shape, const2), pl.BlockSpec(b2f.shape, const2),
        pl.BlockSpec(wcd.shape, const2), pl.BlockSpec(bcd.shape, const2),
        pl.BlockSpec(wd2row.shape, const2), pl.BlockSpec(bd2s.shape, const2),
    ]
    out_specs = pl.BlockSpec((tile_b, out_w), lambda i: (i, 0))
    out_shape = jax.ShapeDtypeStruct((b_pad, out_w), jnp.float32)

    weight_bytes = sum(int(a.size) * a.dtype.itemsize
                       for a in (w1b, b1f, w2b, b2f, wcd, bcd, wd2row, bd2s))
    cost = pl.CostEstimate(
        flops=int(2 * b_pad * (d_in * gen_hidden + gen_hidden * n_features
                               + n_features * out_w + dis_hidden)),
        transcendentals=int(b_pad),
        bytes_accessed=int(x_pad.size * 2 + weight_bytes + b_pad * out_w * 4),
    )

    slab = pl.pallas_call(
        make_mstn_kernel(n_features, n_class, dis_hidden, out_w),
        out_shape=out_shape,
        grid=(n_tiles,),
        in_specs=in_specs,
        out_specs=out_specs,
        compiler_params=pltpu.CompilerParams(
            dimension_semantics=("parallel",),     # v7x: shard batch over 2 TCs
            vmem_limit_bytes=32 * 1024 * 1024,     # fits v7x's 64 MiB physical VMEM
        ),
        cost_estimate=cost,
    )(x_pad, w1b, b1f, w2b, b2f, wcd, bcd, wd2row, bd2s)

    feats = slab[:B, :n_features]
    c_out = slab[:B, n_features:n_features + n_class]
    d_out = slab[:B, n_features + n_class:n_features + n_class + 1]
    return c_out, feats, d_out


def init_params(key, d_in, gen_hidden, n_features, n_class, dis_hidden):
    keys = jax.random.split(key, 10)

    def lin(kw, kb, fan_in, fan_out):
        w = jax.random.normal(kw, (fan_in, fan_out), jnp.float32) * (1.0 / jnp.sqrt(fan_in))
        b = jax.random.normal(kb, (1, fan_out), jnp.float32) * 0.01
        return w, b

    w1, b1 = lin(keys[0], keys[1], d_in, gen_hidden)
    w2, b2 = lin(keys[2], keys[3], gen_hidden, n_features)
    wc, bc = lin(keys[4], keys[5], n_features, n_class)
    wd1, bd1 = lin(keys[6], keys[7], n_features, dis_hidden)
    wd2, bd2 = lin(keys[8], keys[9], dis_hidden, 1)
    return (w1, b1, w2, b2, wc, bc, wd1, bd1, wd2, bd2)


def _reference_forward(x, params):
    """Pure-JAX reference with the same bf16 operand rounding as the kernel."""
    (w1, b1, w2, b2, wc, bc, wd1, bd1, wd2, bd2) = params
    bf = lambda a: a.astype(jnp.bfloat16).astype(jnp.float32)
    xf = bf(x.reshape(x.shape[0], -1))
    h1 = jnp.maximum(xf @ bf(w1) + b1, 0.0)
    f = jnp.maximum(bf(h1) @ bf(w2) + b2, 0.0)
    fb = bf(f)
    c = fb @ bf(wc) + bc
    d1 = jnp.maximum(fb @ bf(wd1) + bd1, 0.0)
    d = jax.nn.sigmoid(d1 @ bf(wd2) + bd2)
    return c, f, d


if __name__ == "__main__":
    # Small, module-consistent demo shapes (production batches use the same
    # kernel; they just fill more 512-row grid steps).
    B, C, H, W = 2, 4, 16, 16          # NCHW image input
    n_features = 32                    # args.n_features
    n_class = 8                        # args.n_class
    gen_hidden = 64
    dis_hidden = 32
    d_in = C * H * W

    key = jax.random.PRNGKey(0)
    kx, kp = jax.random.split(key)
    x = jax.random.normal(kx, (B, C, H, W), jnp.float32)
    params = init_params(kp, d_in, gen_hidden, n_features, n_class, dis_hidden)

    c_out, feats, d_out = mstn_forward(x, params)
    jax.block_until_ready((c_out, feats, d_out))

    c_ref, f_ref, d_ref = _reference_forward(x, params)
    assert c_out.shape == (B, n_class)
    assert feats.shape == (B, n_features)
    assert d_out.shape == (B, 1)
    assert jnp.allclose(c_out, c_ref, atol=1e-2, rtol=1e-2)
    assert jnp.allclose(feats, f_ref, atol=1e-2, rtol=1e-2)
    assert jnp.allclose(d_out, d_ref, atol=1e-2, rtol=1e-2)

    print("KERNEL_OK")
</pallas_src>

<mosaic_0001>
module attributes {stable_mosaic.version = 11 : i64} {
  func.func @mstn_kernel(%arg0: i32, %arg1: memref<512x1024xbf16, #tpu.memory_space<vmem>>, %arg2: memref<1024x64xbf16, #tpu.memory_space<vmem>>, %arg3: memref<1x64xf32, #tpu.memory_space<vmem>>, %arg4: memref<64x32xbf16, #tpu.memory_space<vmem>>, %arg5: memref<1x32xf32, #tpu.memory_space<vmem>>, %arg6: memref<32x128xbf16, #tpu.memory_space<vmem>>, %arg7: memref<1x128xf32, #tpu.memory_space<vmem>>, %arg8: memref<1x32xbf16, #tpu.memory_space<vmem>>, %arg9: memref<1x1xf32, #tpu.memory_space<vmem>>, %arg10: memref<512x128xf32, #tpu.memory_space<vmem>>) attributes {dimension_semantics = [#tpu.dimension_semantics<parallel>], iteration_bounds = array<i64: 1>, scalar_prefetch = 0 : i64, scratch_operands = 0 : i64, tpu.core_type = #tpu.core_type<tc>, window_params = [{transform_indices = @transform_0, window_bounds = array<i64: 512, 1024>}, {pipeline_mode = #tpu.pipeline_mode<synchronous>, transform_indices = @transform_1, window_bounds = array<i64: 1024, 64>}, {pipeline_mode = #tpu.pipeline_mode<synchronous>, transform_indices = @transform_2, window_bounds = array<i64: 1, 64>}, {pipeline_mode = #tpu.pipeline_mode<synchronous>, transform_indices = @transform_3, window_bounds = array<i64: 64, 32>}, {pipeline_mode = #tpu.pipeline_mode<synchronous>, transform_indices = @transform_4, window_bounds = array<i64: 1, 32>}, {pipeline_mode = #tpu.pipeline_mode<synchronous>, transform_indices = @transform_5, window_bounds = array<i64: 32, 128>}, {pipeline_mode = #tpu.pipeline_mode<synchronous>, transform_indices = @transform_6, window_bounds = array<i64: 1, 128>}, {pipeline_mode = #tpu.pipeline_mode<synchronous>, transform_indices = @transform_7, window_bounds = array<i64: 1, 32>}, {pipeline_mode = #tpu.pipeline_mode<synchronous>, transform_indices = @transform_8, window_bounds = array<i64: 1, 1>}, {transform_indices = @transform_9, window_bounds = array<i64: 512, 128>}]} {
    %c0 = arith.constant 0 : index
    %c0_0 = arith.constant 0 : index
    %0 = vector.load %arg1[%c0, %c0_0] : memref<512x1024xbf16, #tpu.memory_space<vmem>>, vector<512x1024xbf16>
    %c0_1 = arith.constant 0 : index
    %c0_2 = arith.constant 0 : index
    %1 = vector.load %arg2[%c0_1, %c0_2] : memref<1024x64xbf16, #tpu.memory_space<vmem>>, vector<1024x64xbf16>
    %cst = arith.constant dense<0.000000e+00> : vector<512x64xf32>
    %2 = tpu.matmul %0, %1, %cst {dimension_numbers = #tpu.dot_dimension_numbers<[1], [0], [0], [1], [0, 0, 1, 1], [], []>} : vector<512x1024xbf16>, vector<1024x64xbf16>, vector<512x64xf32> -> vector<512x64xf32>
    %c0_3 = arith.constant 0 : index
    %c0_4 = arith.constant 0 : index
    %3 = vector.load %arg3[%c0_3, %c0_4] : memref<1x64xf32, #tpu.memory_space<vmem>>, vector<1x64xf32>
    %4 = vector.broadcast %3 : vector<1x64xf32> to vector<512x64xf32>
    %5 = arith.addf %2, %4 : vector<512x64xf32>
    %cst_5 = arith.constant 0.000000e+00 : f32
    %6 = vector.broadcast %cst_5 : f32 to vector<512x64xf32>
    %7 = arith.maximumf %5, %6 : vector<512x64xf32>
    %8 = arith.truncf %7 : vector<512x64xf32> to vector<512x64xbf16>
    %c0_6 = arith.constant 0 : index
    %c0_7 = arith.constant 0 : index
    %9 = vector.load %arg4[%c0_6, %c0_7] : memref<64x32xbf16, #tpu.memory_space<vmem>>, vector<64x32xbf16>
    %cst_8 = arith.constant dense<0.000000e+00> : vector<512x32xf32>
    %10 = tpu.matmul %8, %9, %cst_8 {dimension_numbers = #tpu.dot_dimension_numbers<[1], [0], [0], [1], [0, 0, 1, 1], [], []>} : vector<512x64xbf16>, vector<64x32xbf16>, vector<512x32xf32> -> vector<512x32xf32>
    %c0_9 = arith.constant 0 : index
    %c0_10 = arith.constant 0 : index
    %11 = vector.load %arg5[%c0_9, %c0_10] : memref<1x32xf32, #tpu.memory_space<vmem>>, vector<1x32xf32>
    %12 = vector.broadcast %11 : vector<1x32xf32> to vector<512x32xf32>
    %13 = arith.addf %10, %12 : vector<512x32xf32>
    %cst_11 = arith.constant 0.000000e+00 : f32
    %14 = vector.broadcast %cst_11 : f32 to vector<512x32xf32>
    %15 = arith.maximumf %13, %14 : vector<512x32xf32>
    %16 = arith.truncf %15 : vector<512x32xf32> to vector<512x32xbf16>
    %c0_12 = arith.constant 0 : index
    %c0_13 = arith.constant 0 : index
    %17 = vector.load %arg6[%c0_12, %c0_13] : memref<32x128xbf16, #tpu.memory_space<vmem>>, vector<32x128xbf16>
    %cst_14 = arith.constant dense<0.000000e+00> : vector<512x128xf32>
    %18 = tpu.matmul %16, %17, %cst_14 {dimension_numbers = #tpu.dot_dimension_numbers<[1], [0], [0], [1], [0, 0, 1, 1], [], []>} : vector<512x32xbf16>, vector<32x128xbf16>, vector<512x128xf32> -> vector<512x128xf32>
    %c0_15 = arith.constant 0 : index
    %c0_16 = arith.constant 0 : index
    %19 = vector.load %arg7[%c0_15, %c0_16] : memref<1x128xf32, #tpu.memory_space<vmem>>, vector<1x128xf32>
    %20 = vector.broadcast %19 : vector<1x128xf32> to vector<512x128xf32>
    %21 = arith.addf %18, %20 : vector<512x128xf32>
    %22 = vector.extract_strided_slice %21 {offsets = [0, 0], sizes = [512, 8], strides = [1, 1]} : vector<512x128xf32> to vector<512x8xf32>
    %23 = vector.extract_strided_slice %21 {offsets = [0, 8], sizes = [512, 32], strides = [1, 1]} : vector<512x128xf32> to vector<512x32xf32>
    %cst_17 = arith.constant 0.000000e+00 : f32
    %24 = vector.broadcast %cst_17 : f32 to vector<512x32xf32>
    %25 = arith.maximumf %23, %24 : vector<512x32xf32>
    %c0_18 = arith.constant 0 : index
    %c0_19 = arith.constant 0 : index
    %26 = vector.load %arg8[%c0_18, %c0_19] : memref<1x32xbf16, #tpu.memory_space<vmem>>, vector<1x32xbf16>
    %27 = arith.extf %26 : vector<1x32xbf16> to vector<1x32xf32>
    %28 = vector.broadcast %27 : vector<1x32xf32> to vector<512x32xf32>
    %29 = arith.mulf %25, %28 : vector<512x32xf32>
    %cst_20 = arith.constant dense<0.000000e+00> : vector<512xf32>
    %30 = vector.multi_reduction <add>, %29, %cst_20 [1] : vector<512x32xf32> to vector<512xf32>
    %31 = vector.shape_cast %30 : vector<512xf32> to vector<512x1xf32>
    %c0_21 = arith.constant 0 : index
    %c0_22 = arith.constant 0 : index
    %32 = vector.load %arg9[%c0_21, %c0_22] : memref<1x1xf32, #tpu.memory_space<vmem>>, vector<1x1xf32>
    %33 = vector.broadcast %32 : vector<1x1xf32> to vector<512x1xf32>
    %34 = arith.addf %31, %33 : vector<512x1xf32>
    %35 = arith.negf %34 : vector<512x1xf32>
    %36 = math.exp %35 : vector<512x1xf32>
    %cst_23 = arith.constant 1.000000e+00 : f32
    %37 = vector.broadcast %cst_23 : f32 to vector<512x1xf32>
    %38 = arith.addf %37, %36 : vector<512x1xf32>
    %39 = arith.divf %37, %38 : vector<512x1xf32>
    %c0_24 = arith.constant 0 : index
    %c0_25 = arith.constant 0 : index
    %40 = vector.load %arg10[%c0_24, %c0_25] : memref<512x128xf32, #tpu.memory_space<vmem>>, vector<512x32xf32>
    tpu.vector_store %arg10[%c0_24, %c0_25], %15 {strides = array<i32>} : memref<512x128xf32, #tpu.memory_space<vmem>>, vector<512x32xf32>,
    %c0_26 = arith.constant 0 : index
    %c32 = arith.constant 32 : index
    %41 = vector.load %arg10[%c0_26, %c32] : memref<512x128xf32, #tpu.memory_space<vmem>>, vector<512x8xf32>
    tpu.vector_store %arg10[%c0_26, %c32], %22 {strides = array<i32>} : memref<512x128xf32, #tpu.memory_space<vmem>>, vector<512x8xf32>,
    %42 = vector.shape_cast %39 : vector<512x1xf32> to vector<512x1xf32>
    %43 = vector.broadcast %42 : vector<512x1xf32> to vector<512x88xf32>
    %c0_27 = arith.constant 0 : index
    %c40 = arith.constant 40 : index
    %44 = vector.load %arg10[%c0_27, %c40] : memref<512x128xf32, #tpu.memory_space<vmem>>, vector<512x88xf32>
    tpu.vector_store %arg10[%c0_27, %c40], %43 {strides = array<i32>} : memref<512x128xf32, #tpu.memory_space<vmem>>, vector<512x88xf32>,
    return
  }
  func.func @transform_0(%arg0: i32) -> (i32, i32) {
    %c0_i32 = arith.constant 0 : i32
    %c0_i32_0 = arith.constant 0 : i32
    return %arg0, %c0_i32 : i32, i32
  }
  func.func @transform_1(%arg0: i32) -> (i32, i32) {
    %c0_i32 = arith.constant 0 : i32
    %c0_i32_0 = arith.constant 0 : i32
    %c0_i32_1 = arith.constant 0 : i32
    return %c0_i32, %c0_i32_0 : i32, i32
  }
  func.func @transform_2(%arg0: i32) -> (i32, i32) {
    %c0_i32 = arith.constant 0 : i32
    %c0_i32_0 = arith.constant 0 : i32
    %c0_i32_1 = arith.constant 0 : i32
    return %c0_i32, %c0_i32_0 : i32, i32
  }
  func.func @transform_3(%arg0: i32) -> (i32, i32) {
    %c0_i32 = arith.constant 0 : i32
    %c0_i32_0 = arith.constant 0 : i32
    %c0_i32_1 = arith.constant 0 : i32
    return %c0_i32, %c0_i32_0 : i32, i32
  }
  func.func @transform_4(%arg0: i32) -> (i32, i32) {
    %c0_i32 = arith.constant 0 : i32
    %c0_i32_0 = arith.constant 0 : i32
    %c0_i32_1 = arith.constant 0 : i32
    return %c0_i32, %c0_i32_0 : i32, i32
  }
  func.func @transform_5(%arg0: i32) -> (i32, i32) {
    %c0_i32 = arith.constant 0 : i32
    %c0_i32_0 = arith.constant 0 : i32
    %c0_i32_1 = arith.constant 0 : i32
    return %c0_i32, %c0_i32_0 : i32, i32
  }
  func.func @transform_6(%arg0: i32) -> (i32, i32) {
    %c0_i32 = arith.constant 0 : i32
    %c0_i32_0 = arith.constant 0 : i32
    %c0_i32_1 = arith.constant 0 : i32
    return %c0_i32, %c0_i32_0 : i32, i32
  }
  func.func @transform_7(%arg0: i32) -> (i32, i32) {
    %c0_i32 = arith.constant 0 : i32
    %c0_i32_0 = arith.constant 0 : i32
    %c0_i32_1 = arith.constant 0 : i32
    return %c0_i32, %c0_i32_0 : i32, i32
  }
  func.func @transform_8(%arg0: i32) -> (i32, i32) {
    %c0_i32 = arith.constant 0 : i32
    %c0_i32_0 = arith.constant 0 : i32
    %c0_i32_1 = arith.constant 0 : i32
    return %c0_i32, %c0_i32_0 : i32, i32
  }
  func.func @transform_9(%arg0: i32) -> (i32, i32) {
    %c0_i32 = arith.constant 0 : i32
    %c0_i32_0 = arith.constant 0 : i32
    return %arg0, %c0_i32 : i32, i32
  }
}

</mosaic_0001>

<llo_original>
// kernel: tpu_custom_call.1
$region0: #{tpu_custom_call.1}
  #allocation0 [shape = 'u32[]', space=smem, size = 0x4, offset = 0x4, fixed_abs, tag = 'smem constant byte address 0x4 - core index']
  #allocation1 [shape = 'u32[144,128]{1,0:T(1,128)}', space=vmem, size = 0x12000, scoped, tag = 'internal scratch']
  #allocation2 [shape = 'f32[1,1]{1,0:T(1,128)S(1)}', space=vmem, size = 0x200, scoped, tag = 'scoped memory for tpu_custom_call.1']
  %s0 = inlined_call_operand.hbm [shape: bf16[512,1024], index: 0, kind: input, shape index: {}]
  %s1 = inlined_call_operand.vmem [shape: bf16[1024,64], index: 1, kind: input, shape index: {}]
  %s2 = inlined_call_operand.vmem [shape: f32[1,64], index: 2, kind: input, shape index: {}]
  %s3 = inlined_call_operand.vmem [shape: bf16[64,32], index: 3, kind: input, shape index: {}]
  %s4 = inlined_call_operand.vmem [shape: f32[1,32], index: 4, kind: input, shape index: {}]
  %s5 = inlined_call_operand.vmem [shape: bf16[32,128], index: 5, kind: input, shape index: {}]
  %s6 = inlined_call_operand.vmem [shape: f32[1,128], index: 6, kind: input, shape index: {}]
  %s7 = inlined_call_operand.vmem [shape: bf16[1,32], index: 7, kind: input, shape index: {}]
  %s8 = inlined_call_operand.<no memory space> [shape: f32[1,1], index: 8, kind: input, shape index: {}]
  %s9 = inlined_call_operand.hbm [shape: f32[512,128], index: 9, kind: output, shape index: {}]
  %s10 = sld [smem:[#allocation0]]
  $region50: #{tpu_custom_call.1} parent=0
    _
  %s12 = ssub.s32 1, %s10
  %s13 = scalar_select 0, %s12, %s10
  %v14 = vstv %s8
  %15 = vst [vmem:[#allocation2] sm:$0x1] %v14
  $region1: #{tpu_custom_call.1} parent=0
    #allocation3 [shape = 'u8[1048576]{0}', space=vmem, size = 0x100000, scoped, tag = 'input window, operand 0, single buffered']
    #allocation4 [shape = 's32[1]{0}', space=sflag, size = 0x4, scoped, tag = 'scoped memory for tpu_custom_call.1']
    #allocation5 [shape = 's32[1]{0}', space=sflag, size = 0x4, scoped, tag = 'scoped memory for tpu_custom_call.1']
    #allocation6 [shape = 'u8[262144]{0}', space=vmem, size = 0x40000, scoped, tag = 'output window, operand 0, single buffered']
    %16 = vsyncpa [#allocation4], 0
    %17 = vsyncpa [#allocation5], 0
    // Predicated region
    $region2: #{tpu_custom_call.1} parent=1 // pred_check
      _
    $region3: #{tpu_custom_call.1} parent=1 // pred_check_branch
      %19 = sbr.rel (0) target = $region5
    $region4: #{tpu_custom_call.1} parent=1 // pred_region
      %s21 = ssub.s32 32768, 32768
      %22 = vsyncadd [#allocation4], %s21
      %s23 = sshll.u32 [#allocation3], 4
      %s24 = int_to_ptr.vmem [resolvable:$true] %s23
      %29 = dma.hbm_to_vmem [thread:$0]  %s0, 32768, %s24, [#allocation4], 512, 512, 32
    $region5: #{tpu_custom_call.1} parent=1 // pred_fallthru
      _
    // Predicated region
    $region6: #{tpu_custom_call.1} parent=1 // pred_check
      _
    $region7: #{tpu_custom_call.1} parent=1 // pred_check_branch
      %31 = sbr.rel (0) target = $region9
    $region8: #{tpu_custom_call.1} parent=1 // pred_region
      _
    $region9: #{tpu_custom_call.1} parent=1 // pred_fallthru
      _
    // Predicated region
    $region10: #{tpu_custom_call.1} parent=1 // pred_check
      _
    $region11: #{tpu_custom_call.1} parent=1 // pred_check_branch
      %33 = sbr.rel (0) target = $region13
    $region12: #{tpu_custom_call.1} parent=1 // pred_region
      _
    $region13: #{tpu_custom_call.1} parent=1 // pred_fallthru
      _
    // Predicated region
    $region14: #{tpu_custom_call.1} parent=1 // pred_check
      _
    $region15: #{tpu_custom_call.1} parent=1 // pred_check_branch
      %35 = sbr.rel (0) target = $region17
    $region16: #{tpu_custom_call.1} parent=1 // pred_region
      _
    $region17: #{tpu_custom_call.1} parent=1 // pred_fallthru
      _
    // Predicated region
    $region18: #{tpu_custom_call.1} parent=1 // pred_check
      _
    $region19: #{tpu_custom_call.1} parent=1 // pred_check_branch
      %37 = sbr.rel (0) target = $region21
    $region20: #{tpu_custom_call.1} parent=1 // pred_region
      _
    $region21: #{tpu_custom_call.1} parent=1 // pred_fallthru
      _
    // Predicated region
    $region22: #{tpu_custom_call.1} parent=1 // pred_check
      _
    $region23: #{tpu_custom_call.1} parent=1 // pred_check_branch
      %39 = sbr.rel (0) target = $region25
    $region24: #{tpu_custom_call.1} parent=1 // pred_region
      _
    $region25: #{tpu_custom_call.1} parent=1 // pred_fallthru
      _
    // Predicated region
    $region26: #{tpu_custom_call.1} parent=1 // pred_check
      _
    $region27: #{tpu_custom_call.1} parent=1 // pred_check_branch
      %41 = sbr.rel (0) target = $region29
    $region28: #{tpu_custom_call.1} parent=1 // pred_region
      _
    $region29: #{tpu_custom_call.1} parent=1 // pred_fallthru
      _
    // Predicated region
    $region30: #{tpu_custom_call.1} parent=1 // pred_check
      _
    $region31: #{tpu_custom_call.1} parent=1 // pred_check_branch
      %43 = sbr.rel (0) target = $region33
    $region32: #{tpu_custom_call.1} parent=1 // pred_region
      _
    $region33: #{tpu_custom_call.1} parent=1 // pred_fallthru
      _
    // Predicated region
    $region34: #{tpu_custom_call.1} parent=1 // pred_check
      _
    $region35: #{tpu_custom_call.1} parent=1 // pred_check_branch
      %45 = sbr.rel (0) target = $region37
    $region36: #{tpu_custom_call.1} parent=1 // pred_region
      _
    $region37: #{tpu_custom_call.1} parent=1 // pred_fallthru
      _
    // Predicated region
    $region38: #{tpu_custom_call.1} parent=1 // pred_check
      _
    $region39: #{tpu_custom_call.1} parent=1 // pred_check_branch
      %47 = sbr.rel (0) target = $region41
    $region40: #{tpu_custom_call.1} parent=1 // pred_region
      %48 = dma.done [#allocation4], 32768
    $region41: #{tpu_custom_call.1} parent=1 // pred_fallthru
      _
    %v50 = vld [vmem:[#allocation3] sm:$0xff]
    %v51 = vld [vmem:[#allocation3 + $0x8] sm:$0xff]
    %v52 = vld [vmem:[#allocation3 + $0x10] sm:$0xff]
    %v53 = vld [vmem:[#allocation3 + $0x18] sm:$0xff]
    %v54 = vld [vmem:[#allocation3 + $0x20] sm:$0xff]
    %v55 = vld [vmem:[#allocation3 + $0x28] sm:$0xff]
    %v56 = vld [vmem:[#allocation3 + $0x30] sm:$0xff]
    %v57 = vld [vmem:[#allocation3 + $0x38] sm:$0xff]
    %v58 = vld [vmem:[#allocation3 + $0x40] sm:$0xff]
    %v59 = vld [vmem:[#allocation3 + $0x48] sm:$0xff]
    %v60 = vld [vmem:[#allocation3 + $0x50] sm:$0xff]
    %v61 = vld [vmem:[#allocation3 + $0x58] sm:$0xff]
    %v62 = vld [vmem:[#allocation3 + $0x60] sm:$0xff]
    %v63 = vld [vmem:[#allocation3 + $0x68] sm:$0xff]
    %v64 = vld [vmem:[#allocation3 + $0x70] sm:$0xff]
    %v65 = vld [vmem:[#allocation3 + $0x78] sm:$0xff]
    %v66 = vld [vmem:[#allocation3 + $0x80] sm:$0xff]
    %v67 = vld [vmem:[#allocation3 + $0x88] sm:$0xff]
    %v68 = vld [vmem:[#allocation3 + $0x90] sm:$0xff]
    %v69 = vld [vmem:[#allocation3 + $0x98] sm:$0xff]
    %v70 = vld [vmem:[#allocation3 + $0xa0] sm:$0xff]
    %v71 = vld [vmem:[#allocation3 + $0xa8] sm:$0xff]
    %v72 = vld [vmem:[#allocation3 + $0xb0] sm:$0xff]
    %v73 = vld [vmem:[#allocation3 + $0xb8] sm:$0xff]
    %v74 = vld [vmem:[#allocation3 + $0xc0] sm:$0xff]
    %v75 = vld [vmem:[#allocation3 + $0xc8] sm:$0xff]
    %v76 = vld [vmem:[#allocation3 + $0xd0] sm:$0xff]
    %v77 = vld [vmem:[#allocation3 + $0xd8] sm:$0xff]
    %v78 = vld [vmem:[#allocation3 + $0xe0] sm:$0xff]
    %v79 = vld [vmem:[#allocation3 + $0xe8] sm:$0xff]
    %v80 = vld [vmem:[#allocation3 + $0xf0] sm:$0xff]
    %v81 = vld [vmem:[#allocation3 + $0xf8] sm:$0xff]
    %v82 = vld [vmem:[#allocation3 + $0x100] sm:$0xff]
    %v83 = vld [vmem:[#allocation3 + $0x108] sm:$0xff]
    %v84 = vld [vmem:[#allocation3 + $0x110] sm:$0xff]
    %v85 = vld [vmem:[#allocation3 + $0x118] sm:$0xff]
    %v86 = vld [vmem:[#allocation3 + $0x120] sm:$0xff]
    %v87 = vld [vmem:[#allocation3 + $0x128] sm:$0xff]
    %v88 = vld [vmem:[#allocation3 + $0x130] sm:$0xff]
    %v89 = vld [vmem:[#allocation3 + $0x138] sm:$0xff]
    %v90 = vld [vmem:[#allocation3 + $0x140] sm:$0xff]
    %v91 = vld [vmem:[#allocation3 + $0x148] sm:$0xff]
    %v92 = vld [vmem:[#allocation3 + $0x150] sm:$0xff]
    %v93 = vld [vmem:[#allocation3 + $0x158] sm:$0xff]
    %v94 = vld [vmem:[#allocation3 + $0x160] sm:$0xff]
    %v95 = vld [vmem:[#allocation3 + $0x168] sm:$0xff]
    %v96 = vld [vmem:[#allocation3 + $0x170] sm:$0xff]
    %v97 = vld [vmem:[#allocation3 + $0x178] sm:$0xff]
    %v98 = vld [vmem:[#allocation3 + $0x180] sm:$0xff]
    %v99 = vld [vmem:[#allocation3 + $0x188] sm:$0xff]
    %v100 = vld [vmem:[#allocation3 + $0x190] sm:$0xff]
    %v101 = vld [vmem:[#allocation3 + $0x198] sm:$0xff]
    %v102 = vld [vmem:[#allocation3 + $0x1a0] sm:$0xff]
    %v103 = vld [vmem:[#allocation3 + $0x1a8] sm:$0xff]
    %v104 = vld [vmem:[#allocation3 + $0x1b0] sm:$0xff]
    %v105 = vld [vmem:[#allocation3 + $0x1b8] sm:$0xff]
    %v106 = vld [vmem:[#allocation3 + $0x1c0] sm:$0xff]
    %v107 = vld [vmem:[#allocation3 + $0x1c8] sm:$0xff]
    %v108 = vld [vmem:[#allocation3 + $0x1d0] sm:$0xff]
    %v109 = vld [vmem:[#allocation3 + $0x1d8] sm:$0xff]
    %v110 = vld [vmem:[#allocation3 + $0x1e0] sm:$0xff]
    %v111 = vld [vmem:[#allocation3 + $0x1e8] sm:$0xff]
    %v112 = vld [vmem:[#allocation3 + $0x1f0] sm:$0xff]
    %v113 = vld [vmem:[#allocation3 + $0x1f8] sm:$0xff]
    %v114 = vld [vmem:[#allocation3 + $0x200] sm:$0xff]
    %v115 = vld [vmem:[#allocation3 + $0x208] sm:$0xff]
    %v116 = vld [vmem:[#allocation3 + $0x210] sm:$0xff]
    %v117 = vld [vmem:[#allocation3 + $0x218] sm:$0xff]
    %v118 = vld [vmem:[#allocation3 + $0x220] sm:$0xff]
    %v119 = vld [vmem:[#allocation3 + $0x228] sm:$0xff]
    %v120 = vld [vmem:[#allocation3 + $0x230] sm:$0xff]
    %v121 = vld [vmem:[#allocation3 + $0x238] sm:$0xff]
    %v122 = vld [vmem:[#allocation3 + $0x240] sm:$0xff]
    %v123 = vld [vmem:[#allocation3 + $0x248] sm:$0xff]
    %v124 = vld [vmem:[#allocation3 + $0x250] sm:$0xff]
    %v125 = vld [vmem:[#allocation3 + $0x258] sm:$0xff]
    %v126 = vld [vmem:[#allocation3 + $0x260] sm:$0xff]
    %v127 = vld [vmem:[#allocation3 + $0x268] sm:$0xff]
    %v128 = vld [vmem:[#allocation3 + $0x270] sm:$0xff]
    %v129 = vld [vmem:[#allocation3 + $0x278] sm:$0xff]
    %v130 = vld [vmem:[#allocation3 + $0x280] sm:$0xff]
    %v131 = vld [vmem:[#allocation3 + $0x288] sm:$0xff]
    %v132 = vld [vmem:[#allocation3 + $0x290] sm:$0xff]
    %v133 = vld [vmem:[#allocation3 + $0x298] sm:$0xff]
    %v134 = vld [vmem:[#allocation3 + $0x2a0] sm:$0xff]
    %v135 = vld [vmem:[#allocation3 + $0x2a8] sm:$0xff]
    %v136 = vld [vmem:[#allocation3 + $0x2b0] sm:$0xff]
    %v137 = vld [vmem:[#allocation3 + $0x2b8] sm:$0xff]
    %v138 = vld [vmem:[#allocation3 + $0x2c0] sm:$0xff]
    %v139 = vld [vmem:[#allocation3 + $0x2c8] sm:$0xff]
    %v140 = vld [vmem:[#allocation3 + $0x2d0] sm:$0xff]
    %v141 = vld [vmem:[#allocation3 + $0x2d8] sm:$0xff]
    %v142 = vld [vmem:[#allocation3 + $0x2e0] sm:$0xff]
    %v143 = vld [vmem:[#allocation3 + $0x2e8] sm:$0xff]
    %v144 = vld [vmem:[#allocation3 + $0x2f0] sm:$0xff]
    %v145 = vld [vmem:[#allocation3 + $0x2f8] sm:$0xff]
    %v146 = vld [vmem:[#allocation3 + $0x300] sm:$0xff]
    %v147 = vld [vmem:[#allocation3 + $0x308] sm:$0xff]
    %v148 = vld [vmem:[#allocation3 + $0x310] sm:$0xff]
    %v149 = vld [vmem:[#allocation3 + $0x318] sm:$0xff]
    %v150 = vld [vmem:[#allocation3 + $0x320] sm:$0xff]
    %v151 = vld [vmem:[#allocation3 + $0x328] sm:$0xff]
    %v152 = vld [vmem:[#allocation3 + $0x330] sm:$0xff]
    %v153 = vld [vmem:[#allocation3 + $0x338] sm:$0xff]
    %v154 = vld [vmem:[#allocation3 + $0x340] sm:$0xff]
    %v155 = vld [vmem:[#allocation3 + $0x348] sm:$0xff]
    %v156 = vld [vmem:[#allocation3 + $0x350] sm:$0xff]
    %v157 = vld [vmem:[#allocation3 + $0x358] sm:$0xff]
    %v158 = vld [vmem:[#allocation3 + $0x360] sm:$0xff]
    %v159 = vld [vmem:[#allocation3 + $0x368] sm:$0xff]
    %v160 = vld [vmem:[#allocation3 + $0x370] sm:$0xff]
    %v161 = vld [vmem:[#allocation3 + $0x378] sm:$0xff]
    %v162 = vld [vmem:[#allocation3 + $0x380] sm:$0xff]
    %v163 = vld [vmem:[#allocation3 + $0x388] sm:$0xff]
    %v164 = vld [vmem:[#allocation3 + $0x390] sm:$0xff]
    %v165 = vld [vmem:[#allocation3 + $0x398] sm:$0xff]
    %v166 = vld [vmem:[#allocation3 + $0x3a0] sm:$0xff]
    %v167 = vld [vmem:[#allocation3 + $0x3a8] sm:$0xff]
    %v168 = vld [vmem:[#allocation3 + $0x3b0] sm:$0xff]
    %v169 = vld [vmem:[#allocation3 + $0x3b8] sm:$0xff]
    %v170 = vld [vmem:[#allocation3 + $0x3c0] sm:$0xff]
    %v171 = vld [vmem:[#allocation3 + $0x3c8] sm:$0xff]
    %v172 = vld [vmem:[#allocation3 + $0x3d0] sm:$0xff]
    %v173 = vld [vmem:[#allocation3 + $0x3d8] sm:$0xff]
    %v174 = vld [vmem:[#allocation3 + $0x3e0] sm:$0xff]
    %v175 = vld [vmem:[#allocation3 + $0x3e8] sm:$0xff]
    %v176 = vld [vmem:[#allocation3 + $0x3f0] sm:$0xff]
    %v177 = vld [vmem:[#allocation3 + $0x3f8] sm:$0xff]
    %v178 = vld [vmem:[#allocation3 + $0x400] sm:$0xff]
    %v179 = vld [vmem:[#allocation3 + $0x408] sm:$0xff]
    %v180 = vld [vmem:[#allocation3 + $0x410] sm:$0xff]
    %v181 = vld [vmem:[#allocation3 + $0x418] sm:$0xff]
    %v182 = vld [vmem:[#allocation3 + $0x420] sm:$0xff]
    %v183 = vld [vmem:[#allocation3 + $0x428] sm:$0xff]
    %v184 = vld [vmem:[#allocation3 + $0x430] sm:$0xff]
    %v185 = vld [vmem:[#allocation3 + $0x438] sm:$0xff]
    %v186 = vld [vmem:[#allocation3 + $0x440] sm:$0xff]
    %v187 = vld [vmem:[#allocation3 + $0x448] sm:$0xff]
    %v188 = vld [vmem:[#allocation3 + $0x450] sm:$0xff]
    %v189 = vld [vmem:[#allocation3 + $0x458] sm:$0xff]
    %v190 = vld [vmem:[#allocation3 + $0x460] sm:$0xff]
    %v191 = vld [vmem:[#allocation3 + $0x468] sm:$0xff]
    %v192 = vld [vmem:[#allocation3 + $0x470] sm:$0xff]
    %v193 = vld [vmem:[#allocation3 + $0x478] sm:$0xff]
    %v194 = vld [vmem:[#allocation3 + $0x480] sm:$0xff]
    %v195 = vld [vmem:[#allocation3 + $0x488] sm:$0xff]
    %v196 = vld [vmem:[#allocation3 + $0x490] sm:$0xff]
    %v197 = vld [vmem:[#allocation3 + $0x498] sm:$0xff]
    %v198 = vld [vmem:[#allocation3 + $0x4a0] sm:$0xff]
    %v199 = vld [vmem:[#allocation3 + $0x4a8] sm:$0xff]
    %v200 = vld [vmem:[#allocation3 + $0x4b0] sm:$0xff]
    %v201 = vld [vmem:[#allocation3 + $0x4b8] sm:$0xff]
    %v202 = vld [vmem:[#allocation3 + $0x4c0] sm:$0xff]
    %v203 = vld [vmem:[#allocation3 + $0x4c8] sm:$0xff]
    %v204 = vld [vmem:[#allocation3 + $0x4d0] sm:$0xff]
    %v205 = vld [vmem:[#allocation3 + $0x4d8] sm:$0xff]
    %v206 = vld [vmem:[#allocation3 + $0x4e0] sm:$0xff]
    %v207 = vld [vmem:[#allocation3 + $0x4e8] sm:$0xff]
    %v208 = vld [vmem:[#allocation3 + $0x4f0] sm:$0xff]
    %v209 = vld [vmem:[#allocation3 + $0x4f8] sm:$0xff]
    %v210 = vld [vmem:[#allocation3 + $0x500] sm:$0xff]
    %v211 = vld [vmem:[#allocation3 + $0x508] sm:$0xff]
    %v212 = vld [vmem:[#allocation3 + $0x510] sm:$0xff]
    %v213 = vld [vmem:[#allocation3 + $0x518] sm:$0xff]
    %v214 = vld [vmem:[#allocation3 + $0x520] sm:$0xff]
    %v215 = vld [vmem:[#allocation3 + $0x528] sm:$0xff]
    %v216 = vld [vmem:[#allocation3 + $0x530] sm:$0xff]
    %v217 = vld [vmem:[#allocation3 + $0x538] sm:$0xff]
    %v218 = vld [vmem:[#allocation3 + $0x540] sm:$0xff]
    %v219 = vld [vmem:[#allocation3 + $0x548] sm:$0xff]
    %v220 = vld [vmem:[#allocation3 + $0x550] sm:$0xff]
    %v221 = vld [vmem:[#allocation3 + $0x558] sm:$0xff]
    %v222 = vld [vmem:[#allocation3 + $0x560] sm:$0xff]
    %v223 = vld [vmem:[#allocation3 + $0x568] sm:$0xff]
    %v224 = vld [vmem:[#allocation3 + $0x570] sm:$0xff]
    %v225 = vld [vmem:[#allocation3 + $0x578] sm:$0xff]
    %v226 = vld [vmem:[#allocation3 + $0x580] sm:$0xff]
    %v227 = vld [vmem:[#allocation3 + $0x588] sm:$0xff]
    %v228 = vld [vmem:[#allocation3 + $0x590] sm:$0xff]
    %v229 = vld [vmem:[#allocation3 + $0x598] sm:$0xff]
    %v230 = vld [vmem:[#allocation3 + $0x5a0] sm:$0xff]
    %v231 = vld [vmem:[#allocation3 + $0x5a8] sm:$0xff]
    %v232 = vld [vmem:[#allocation3 + $0x5b0] sm:$0xff]
    %v233 = vld [vmem:[#allocation3 + $0x5b8] sm:$0xff]
    %v234 = vld [vmem:[#allocation3 + $0x5c0] sm:$0xff]
    %v235 = vld [vmem:[#allocation3 + $0x5c8] sm:$0xff]
    %v236 = vld [vmem:[#allocation3 + $0x5d0] sm:$0xff]
    %v237 = vld [vmem:[#allocation3 + $0x5d8] sm:$0xff]
    %v238 = vld [vmem:[#allocation3 + $0x5e0] sm:$0xff]
    %v239 = vld [vmem:[#allocation3 + $0x5e8] sm:$0xff]
    %v240 = vld [vmem:[#allocation3 + $0x5f0] sm:$0xff]
    %v241 = vld [vmem:[#allocation3 + $0x5f8] sm:$0xff]
    %v242 = vld [vmem:[#allocation3 + $0x600] sm:$0xff]
    %v243 = vld [vmem:[#allocation3 + $0x608] sm:$0xff]
    %v244 = vld [vmem:[#allocation3 + $0x610] sm:$0xff]
    %v245 = vld [vmem:[#allocation3 + $0x618] sm:$0xff]
    %v246 = vld [vmem:[#allocation3 + $0x620] sm:$0xff]
    %v247 = vld [vmem:[#allocation3 + $0x628] sm:$0xff]
    %v248 = vld [vmem:[#allocation3 + $0x630] sm:$0xff]
    %v249 = vld [vmem:[#allocation3 + $0x638] sm:$0xff]
    %v250 = vld [vmem:[#allocation3 + $0x640] sm:$0xff]
    %v251 = vld [vmem:[#allocation3 + $0x648] sm:$0xff]
    %v252 = vld [vmem:[#allocation3 + $0x650] sm:$0xff]
    %v253 = vld [vmem:[#allocation3 + $0x658] sm:$0xff]
    %v254 = vld [vmem:[#allocation3 + $0x660] sm:$0xff]
    %v255 = vld [vmem:[#allocation3 + $0x668] sm:$0xff]
    %v256 = vld [vmem:[#allocation3 + $0x670] sm:$0xff]
    %v257 = vld [vmem:[#allocation3 + $0x678] sm:$0xff]
    %v258 = vld [vmem:[#allocation3 + $0x680] sm:$0xff]
    %v259 = vld [vmem:[#allocation3 + $0x688] sm:$0xff]
    %v260 = vld [vmem:[#allocation3 + $0x690] sm:$0xff]
    %v261 = vld [vmem:[#allocation3 + $0x698] sm:$0xff]
    %v262 = vld [vmem:[#allocation3 + $0x6a0] sm:$0xff]
    %v263 = vld [vmem:[#allocation3 + $0x6a8] sm:$0xff]
    %v264 = vld [vmem:[#allocation3 + $0x6b0] sm:$0xff]
    %v265 = vld [vmem:[#allocation3 + $0x6b8] sm:$0xff]
    %v266 = vld [vmem:[#allocation3 + $0x6c0] sm:$0xff]
    %v267 = vld [vmem:[#allocation3 + $0x6c8] sm:$0xff]
    %v268 = vld [vmem:[#allocation3 + $0x6d0] sm:$0xff]
    %v269 = vld [vmem:[#allocation3 + $0x6d8] sm:$0xff]
    %v270 = vld [vmem:[#allocation3 + $0x6e0] sm:$0xff]
    %v271 = vld [vmem:[#allocation3 + $0x6e8] sm:$0xff]
    %v272 = vld [vmem:[#allocation3 + $0x6f0] sm:$0xff]
    %v273 = vld [vmem:[#allocation3 + $0x6f8] sm:$0xff]
    %v274 = vld [vmem:[#allocation3 + $0x700] sm:$0xff]
    %v275 = vld [vmem:[#allocation3 + $0x708] sm:$0xff]
    %v276 = vld [vmem:[#allocation3 + $0x710] sm:$0xff]
    %v277 = vld [vmem:[#allocation3 + $0x718] sm:$0xff]
    %v278 = vld [vmem:[#allocation3 + $0x720] sm:$0xff]
    %v279 = vld [vmem:[#allocation3 + $0x728] sm:$0xff]
    %v280 = vld [vmem:[#allocation3 + $0x730] sm:$0xff]
    %v281 = vld [vmem:[#allocation3 + $0x738] sm:$0xff]
    %v282 = vld [vmem:[#allocation3 + $0x740] sm:$0xff]
    %v283 = vld [vmem:[#allocation3 + $0x748] sm:$0xff]
    %v284 = vld [vmem:[#allocation3 + $0x750] sm:$0xff]
    %v285 = vld [vmem:[#allocation3 + $0x758] sm:$0xff]
    %v286 = vld [vmem:[#allocation3 + $0x760] sm:$0xff]
    %v287 = vld [vmem:[#allocation3 + $0x768] sm:$0xff]
    %v288 = vld [vmem:[#allocation3 + $0x770] sm:$0xff]
    %v289 = vld [vmem:[#allocation3 + $0x778] sm:$0xff]
    %v290 = vld [vmem:[#allocation3 + $0x780] sm:$0xff]
    %v291 = vld [vmem:[#allocation3 + $0x788] sm:$0xff]
    %v292 = vld [vmem:[#allocation3 + $0x790] sm:$0xff]
    %v293 = vld [vmem:[#allocation3 + $0x798] sm:$0xff]
    %v294 = vld [vmem:[#allocation3 + $0x7a0] sm:$0xff]
    %v295 = vld [vmem:[#allocation3 + $0x7a8] sm:$0xff]
    %v296 = vld [vmem:[#allocation3 + $0x7b0] sm:$0xff]
    %v297 = vld [vmem:[#allocation3 + $0x7b8] sm:$0xff]
    %v298 = vld [vmem:[#allocation3 + $0x7c0] sm:$0xff]
    %v299 = vld [vmem:[#allocation3 + $0x7c8] sm:$0xff]
    %v300 = vld [vmem:[#allocation3 + $0x7d0] sm:$0xff]
    %v301 = vld [vmem:[#allocation3 + $0x7d8] sm:$0xff]
    %v302 = vld [vmem:[#allocation3 + $0x7e0] sm:$0xff]
    %v303 = vld [vmem:[#allocation3 + $0x7e8] sm:$0xff]
    %v304 = vld [vmem:[#allocation3 + $0x7f0] sm:$0xff]
    %v305 = vld [vmem:[#allocation3 + $0x7f8] sm:$0xff]
    %v306 = vld [vmem:[%s1] sm:$0xf]
    %v307 = vld [vmem:[%s1 + $0x4] sm:$0xf]
    %v308 = vld [vmem:[%s1 + $0x8] sm:$0xf]
    %v309 = vld [vmem:[%s1 + $0xc] sm:$0xf]
    %v310 = vld [vmem:[%s1 + $0x10] sm:$0xf]
    %v311 = vld [vmem:[%s1 + $0x14] sm:$0xf]
    %v312 = vld [vmem:[%s1 + $0x18] sm:$0xf]
    %v313 = vld [vmem:[%s1 + $0x1c] sm:$0xf]
    %v314 = vld [vmem:[%s1 + $0x20] sm:$0xf]
    %v315 = vld [vmem:[%s1 + $0x24] sm:$0xf]
    %v316 = vld [vmem:[%s1 + $0x28] sm:$0xf]
    %v317 = vld [vmem:[%s1 + $0x2c] sm:$0xf]
    %v318 = vld [vmem:[%s1 + $0x30] sm:$0xf]
    %v319 = vld [vmem:[%s1 + $0x34] sm:$0xf]
    %v320 = vld [vmem:[%s1 + $0x38] sm:$0xf]
    %v321 = vld [vmem:[%s1 + $0x3c] sm:$0xf]
    %v322 = vld [vmem:[%s1 + $0x40] sm:$0xf]
    %v323 = vld [vmem:[%s1 + $0x44] sm:$0xf]
    %v324 = vld [vmem:[%s1 + $0x48] sm:$0xf]
    %v325 = vld [vmem:[%s1 + $0x4c] sm:$0xf]
    %v326 = vld [vmem:[%s1 + $0x50] sm:$0xf]
    %v327 = vld [vmem:[%s1 + $0x54] sm:$0xf]
    %v328 = vld [vmem:[%s1 + $0x58] sm:$0xf]
    %v329 = vld [vmem:[%s1 + $0x5c] sm:$0xf]
    %v330 = vld [vmem:[%s1 + $0x60] sm:$0xf]
    %v331 = vld [vmem:[%s1 + $0x64] sm:$0xf]
    %v332 = vld [vmem:[%s1 + $0x68] sm:$0xf]
    %v333 = vld [vmem:[%s1 + $0x6c] sm:$0xf]
    %v334 = vld [vmem:[%s1 + $0x70] sm:$0xf]
    %v335 = vld [vmem:[%s1 + $0x74] sm:$0xf]
    %v336 = vld [vmem:[%s1 + $0x78] sm:$0xf]
    %v337 = vld [vmem:[%s1 + $0x7c] sm:$0xf]
    %v338 = vld [vmem:[%s1 + $0x80] sm:$0xf]
    %v339 = vld [vmem:[%s1 + $0x84] sm:$0xf]
    %v340 = vld [vmem:[%s1 + $0x88] sm:$0xf]
    %v341 = vld [vmem:[%s1 + $0x8c] sm:$0xf]
    %v342 = vld [vmem:[%s1 + $0x90] sm:$0xf]
    %v343 = vld [vmem:[%s1 + $0x94] sm:$0xf]
    %v344 = vld [vmem:[%s1 + $0x98] sm:$0xf]
    %v345 = vld [vmem:[%s1 + $0x9c] sm:$0xf]
    %v346 = vld [vmem:[%s1 + $0xa0] sm:$0xf]
    %v347 = vld [vmem:[%s1 + $0xa4] sm:$0xf]
    %v348 = vld [vmem:[%s1 + $0xa8] sm:$0xf]
    %v349 = vld [vmem:[%s1 + $0xac] sm:$0xf]
    %v350 = vld [vmem:[%s1 + $0xb0] sm:$0xf]
    %v351 = vld [vmem:[%s1 + $0xb4] sm:$0xf]
    %v352 = vld [vmem:[%s1 + $0xb8] sm:$0xf]
    %v353 = vld [vmem:[%s1 + $0xbc] sm:$0xf]
    %v354 = vld [vmem:[%s1 + $0xc0] sm:$0xf]
    %v355 = vld [vmem:[%s1 + $0xc4] sm:$0xf]
    %v356 = vld [vmem:[%s1 + $0xc8] sm:$0xf]
    %v357 = vld [vmem:[%s1 + $0xcc] sm:$0xf]
    %v358 = vld [vmem:[%s1 + $0xd0] sm:$0xf]
    %v359 = vld [vmem:[%s1 + $0xd4] sm:$0xf]
    %v360 = vld [vmem:[%s1 + $0xd8] sm:$0xf]
    %v361 = vld [vmem:[%s1 + $0xdc] sm:$0xf]
    %v362 = vld [vmem:[%s1 + $0xe0] sm:$0xf]
    %v363 = vld [vmem:[%s1 + $0xe4] sm:$0xf]
    %v364 = vld [vmem:[%s1 + $0xe8] sm:$0xf]
    %v365 = vld [vmem:[%s1 + $0xec] sm:$0xf]
    %v366 = vld [vmem:[%s1 + $0xf0] sm:$0xf]
    %v367 = vld [vmem:[%s1 + $0xf4] sm:$0xf]
    %v368 = vld [vmem:[%s1 + $0xf8] sm:$0xf]
    %v369 = vld [vmem:[%s1 + $0xfc] sm:$0xf]
    %v370 = vld [vmem:[%s1 + $0x100] sm:$0xf]
    %v371 = vld [vmem:[%s1 + $0x104] sm:$0xf]
    %v372 = vld [vmem:[%s1 + $0x108] sm:$0xf]
    %v373 = vld [vmem:[%s1 + $0x10c] sm:$0xf]
    %v374 = vld [vmem:[%s1 + $0x110] sm:$0xf]
    %v375 = vld [vmem:[%s1 + $0x114] sm:$0xf]
    %v376 = vld [vmem:[%s1 + $0x118] sm:$0xf]
    %v377 = vld [vmem:[%s1 + $0x11c] sm:$0xf]
    %v378 = vld [vmem:[%s1 + $0x120] sm:$0xf]
    %v379 = vld [vmem:[%s1 + $0x124] sm:$0xf]
    %v380 = vld [vmem:[%s1 + $0x128] sm:$0xf]
    %v381 = vld [vmem:[%s1 + $0x12c] sm:$0xf]
    %v382 = vld [vmem:[%s1 + $0x130] sm:$0xf]
    %v383 = vld [vmem:[%s1 + $0x134] sm:$0xf]
    %v384 = vld [vmem:[%s1 + $0x138] sm:$0xf]
    %v385 = vld [vmem:[%s1 + $0x13c] sm:$0xf]
    %v386 = vld [vmem:[%s1 + $0x140] sm:$0xf]
    %v387 = vld [vmem:[%s1 + $0x144] sm:$0xf]
    %v388 = vld [vmem:[%s1 + $0x148] sm:$0xf]
    %v389 = vld [vmem:[%s1 + $0x14c] sm:$0xf]
    %v390 = vld [vmem:[%s1 + $0x150] sm:$0xf]
    %v391 = vld [vmem:[%s1 + $0x154] sm:$0xf]
    %v392 = vld [vmem:[%s1 + $0x158] sm:$0xf]
    %v393 = vld [vmem:[%s1 + $0x15c] sm:$0xf]
    %v394 = vld [vmem:[%s1 + $0x160] sm:$0xf]
    %v395 = vld [vmem:[%s1 + $0x164] sm:$0xf]
    %v396 = vld [vmem:[%s1 + $0x168] sm:$0xf]
    %v397 = vld [vmem:[%s1 + $0x16c] sm:$0xf]
    %v398 = vld [vmem:[%s1 + $0x170] sm:$0xf]
    %v399 = vld [vmem:[%s1 + $0x174] sm:$0xf]
    %v400 = vld [vmem:[%s1 + $0x178] sm:$0xf]
    %v401 = vld [vmem:[%s1 + $0x17c] sm:$0xf]
    %v402 = vld [vmem:[%s1 + $0x180] sm:$0xf]
    %v403 = vld [vmem:[%s1 + $0x184] sm:$0xf]
    %v404 = vld [vmem:[%s1 + $0x188] sm:$0xf]
    %v405 = vld [vmem:[%s1 + $0x18c] sm:$0xf]
    %v406 = vld [vmem:[%s1 + $0x190] sm:$0xf]
    %v407 = vld [vmem:[%s1 + $0x194] sm:$0xf]
    %v408 = vld [vmem:[%s1 + $0x198] sm:$0xf]
    %v409 = vld [vmem:[%s1 + $0x19c] sm:$0xf]
    %v410 = vld [vmem:[%s1 + $0x1a0] sm:$0xf]
    %v411 = vld [vmem:[%s1 + $0x1a4] sm:$0xf]
    %v412 = vld [vmem:[%s1 + $0x1a8] sm:$0xf]
    %v413 = vld [vmem:[%s1 + $0x1ac] sm:$0xf]
    %v414 = vld [vmem:[%s1 + $0x1b0] sm:$0xf]
    %v415 = vld [vmem:[%s1 + $0x1b4] sm:$0xf]
    %v416 = vld [vmem:[%s1 + $0x1b8] sm:$0xf]
    %v417 = vld [vmem:[%s1 + $0x1bc] sm:$0xf]
    %v418 = vld [vmem:[%s1 + $0x1c0] sm:$0xf]
    %v419 = vld [vmem:[%s1 + $0x1c4] sm:$0xf]
    %v420 = vld [vmem:[%s1 + $0x1c8] sm:$0xf]
    %v421 = vld [vmem:[%s1 + $0x1cc] sm:$0xf]
    %v422 = vld [vmem:[%s1 + $0x1d0] sm:$0xf]
    %v423 = vld [vmem:[%s1 + $0x1d4] sm:$0xf]
    %v424 = vld [vmem:[%s1 + $0x1d8] sm:$0xf]
    %v425 = vld [vmem:[%s1 + $0x1dc] sm:$0xf]
    %v426 = vld [vmem:[%s1 + $0x1e0] sm:$0xf]
    %v427 = vld [vmem:[%s1 + $0x1e4] sm:$0xf]
    %v428 = vld [vmem:[%s1 + $0x1e8] sm:$0xf]
    %v429 = vld [vmem:[%s1 + $0x1ec] sm:$0xf]
    %v430 = vld [vmem:[%s1 + $0x1f0] sm:$0xf]
    %v431 = vld [vmem:[%s1 + $0x1f4] sm:$0xf]
    %v432 = vld [vmem:[%s1 + $0x1f8] sm:$0xf]
    %v433 = vld [vmem:[%s1 + $0x1fc] sm:$0xf]
    %v434 = vld [vmem:[%s2] sm:$0x1]
    %v436 = vlaneseq
    %v437 = vshrl.u32 %v436, 7
    %v438 = vsub.s32 0, %v437
    %v439 = vrot.slane %v434, %v438
    %v697 = vunpack.c.l.b16 %v50
    %v698 = vunpack.c.h.b16 %v50
    %v699 = vunpack.c.l.b16 %v51
    %v700 = vunpack.c.h.b16 %v51
    %v701 = vunpack.c.l.b16 %v52
    %v702 = vunpack.c.h.b16 %v52
    %v703 = vunpack.c.l.b16 %v53
    %v704 = vunpack.c.h.b16 %v53
    %v705 = vunpack.c.l.b16 %v54
    %v706 = vunpack.c.h.b16 %v54
    %v707 = vunpack.c.l.b16 %v55
    %v708 = vunpack.c.h.b16 %v55
    %v709 = vunpack.c.l.b16 %v56
    %v710 = vunpack.c.h.b16 %v56
    %v711 = vunpack.c.l.b16 %v57
    %v712 = vunpack.c.h.b16 %v57
    %v713 = vunpack.c.l.b16 %v58
    %v714 = vunpack.c.h.b16 %v58
    %v715 = vunpack.c.l.b16 %v59
    %v716 = vunpack.c.h.b16 %v59
    %v717 = vunpack.c.l.b16 %v60
    %v718 = vunpack.c.h.b16 %v60
    %v719 = vunpack.c.l.b16 %v61
    %v720 = vunpack.c.h.b16 %v61
    %v721 = vunpack.c.l.b16 %v62
    %v722 = vunpack.c.h.b16 %v62
    %v723 = vunpack.c.l.b16 %v63
    %v724 = vunpack.c.h.b16 %v63
    %v725 = vunpack.c.l.b16 %v64
    %v726 = vunpack.c.h.b16 %v64
    %v727 = vunpack.c.l.b16 %v65
    %v728 = vunpack.c.h.b16 %v65
    %v729 = vunpack.c.l.b16 %v66
    %v730 = vunpack.c.h.b16 %v66
    %v731 = vunpack.c.l.b16 %v67
    %v732 = vunpack.c.h.b16 %v67
    %v733 = vunpack.c.l.b16 %v68
    %v734 = vunpack.c.h.b16 %v68
    %v735 = vunpack.c.l.b16 %v69
    %v736 = vunpack.c.h.b16 %v69
    %v737 = vunpack.c.l.b16 %v70
    %v738 = vunpack.c.h.b16 %v70
    %v739 = vunpack.c.l.b16 %v71
    %v740 = vunpack.c.h.b16 %v71
    %v741 = vunpack.c.l.b16 %v72
    %v742 = vunpack.c.h.b16 %v72
    %v743 = vunpack.c.l.b16 %v73
    %v744 = vunpack.c.h.b16 %v73
    %v745 = vunpack.c.l.b16 %v74
    %v746 = vunpack.c.h.b16 %v74
    %v747 = vunpack.c.l.b16 %v75
    %v748 = vunpack.c.h.b16 %v75
    %v749 = vunpack.c.l.b16 %v76
    %v750 = vunpack.c.h.b16 %v76
    %v751 = vunpack.c.l.b16 %v77
    %v752 = vunpack.c.h.b16 %v77
    %v753 = vunpack.c.l.b16 %v78
    %v754 = vunpack.c.h.b16 %v78
    %v755 = vunpack.c.l.b16 %v79
    %v756 = vunpack.c.h.b16 %v79
    %v757 = vunpack.c.l.b16 %v80
    %v758 = vunpack.c.h.b16 %v80
    %v759 = vunpack.c.l.b16 %v81
    %v760 = vunpack.c.h.b16 %v81
    %v761 = vunpack.c.l.b16 %v82
    %v762 = vunpack.c.h.b16 %v82
    %v763 = vunpack.c.l.b16 %v83
    %v764 = vunpack.c.h.b16 %v83
    %v765 = vunpack.c.l.b16 %v84
    %v766 = vunpack.c.h.b16 %v84
    %v767 = vunpack.c.l.b16 %v85
    %v768 = vunpack.c.h.b16 %v85
    %v769 = vunpack.c.l.b16 %v86
    %v770 = vunpack.c.h.b16 %v86
    %v771 = vunpack.c.l.b16 %v87
    %v772 = vunpack.c.h.b16 %v87
    %v773 = vunpack.c.l.b16 %v88
    %v774 = vunpack.c.h.b16 %v88
    %v775 = vunpack.c.l.b16 %v89
    %v776 = vunpack.c.h.b16 %v89
    %v777 = vunpack.c.l.b16 %v90
    %v778 = vunpack.c.h.b16 %v90
    %v779 = vunpack.c.l.b16 %v91
    %v780 = vunpack.c.h.b16 %v91
    %v781 = vunpack.c.l.b16 %v92
    %v782 = vunpack.c.h.b16 %v92
    %v783 = vunpack.c.l.b16 %v93
    %v784 = vunpack.c.h.b16 %v93
    %v785 = vunpack.c.l.b16 %v94
    %v786 = vunpack.c.h.b16 %v94
    %v787 = vunpack.c.l.b16 %v95
    %v788 = vunpack.c.h.b16 %v95
    %v789 = vunpack.c.l.b16 %v96
    %v790 = vunpack.c.h.b16 %v96
    %v791 = vunpack.c.l.b16 %v97
    %v792 = vunpack.c.h.b16 %v97
    %v793 = vunpack.c.l.b16 %v98
    %v794 = vunpack.c.h.b16 %v98
    %v795 = vunpack.c.l.b16 %v99
    %v796 = vunpack.c.h.b16 %v99
    %v797 = vunpack.c.l.b16 %v100
    %v798 = vunpack.c.h.b16 %v100
    %v799 = vunpack.c.l.b16 %v101
    %v800 = vunpack.c.h.b16 %v101
    %v801 = vunpack.c.l.b16 %v102
    %v802 = vunpack.c.h.b16 %v102
    %v803 = vunpack.c.l.b16 %v103
    %v804 = vunpack.c.h.b16 %v103
    %v805 = vunpack.c.l.b16 %v104
    %v806 = vunpack.c.h.b16 %v104
    %v807 = vunpack.c.l.b16 %v105
    %v808 = vunpack.c.h.b16 %v105
    %v809 = vunpack.c.l.b16 %v106
    %v810 = vunpack.c.h.b16 %v106
    %v811 = vunpack.c.l.b16 %v107
    %v812 = vunpack.c.h.b16 %v107
    %v813 = vunpack.c.l.b16 %v108
    %v814 = vunpack.c.h.b16 %v108
    %v815 = vunpack.c.l.b16 %v109
    %v816 = vunpack.c.h.b16 %v109
    %v817 = vunpack.c.l.b16 %v110
    %v818 = vunpack.c.h.b16 %v110
    %v819 = vunpack.c.l.b16 %v111
    %v820 = vunpack.c.h.b16 %v111
    %v821 = vunpack.c.l.b16 %v112
    %v822 = vunpack.c.h.b16 %v112
    %v823 = vunpack.c.l.b16 %v113
    %v824 = vunpack.c.h.b16 %v113
    %v825 = vunpack.c.l.b16 %v114
    %v826 = vunpack.c.h.b16 %v114
    %v827 = vunpack.c.l.b16 %v115
    %v828 = vunpack.c.h.b16 %v115
    %v829 = vunpack.c.l.b16 %v116
    %v830 = vunpack.c.h.b16 %v116
    %v831 = vunpack.c.l.b16 %v117
    %v832 = vunpack.c.h.b16 %v117
    %v833 = vunpack.c.l.b16 %v118
    %v834 = vunpack.c.h.b16 %v118
    %v835 = vunpack.c.l.b16 %v119
    %v836 = vunpack.c.h.b16 %v119
    %v837 = vunpack.c.l.b16 %v120
    %v838 = vunpack.c.h.b16 %v120
    %v839 = vunpack.c.l.b16 %v121
    %v840 = vunpack.c.h.b16 %v121
    %v841 = vunpack.c.l.b16 %v122
    %v842 = vunpack.c.h.b16 %v122
    %v843 = vunpack.c.l.b16 %v123
    %v844 = vunpack.c.h.b16 %v123
    %v845 = vunpack.c.l.b16 %v124
    %v846 = vunpack.c.h.b16 %v124
    %v847 = vunpack.c.l.b16 %v125
    %v848 = vunpack.c.h.b16 %v125
    %v849 = vunpack.c.l.b16 %v126
    %v850 = vunpack.c.h.b16 %v126
    %v851 = vunpack.c.l.b16 %v127
    %v852 = vunpack.c.h.b16 %v127
    %v853 = vunpack.c.l.b16 %v128
    %v854 = vunpack.c.h.b16 %v128
    %v855 = vunpack.c.l.b16 %v129
    %v856 = vunpack.c.h.b16 %v129
    %v857 = vunpack.c.l.b16 %v130
    %v858 = vunpack.c.h.b16 %v130
    %v859 = vunpack.c.l.b16 %v131
    %v860 = vunpack.c.h.b16 %v131
    %v861 = vunpack.c.l.b16 %v132
    %v862 = vunpack.c.h.b16 %v132
    %v863 = vunpack.c.l.b16 %v133
    %v864 = vunpack.c.h.b16 %v133
    %v865 = vunpack.c.l.b16 %v134
    %v866 = vunpack.c.h.b16 %v134
    %v867 = vunpack.c.l.b16 %v135
    %v868 = vunpack.c.h.b16 %v135
    %v869 = vunpack.c.l.b16 %v136
    %v870 = vunpack.c.h.b16 %v136
    %v871 = vunpack.c.l.b16 %v137
    %v872 = vunpack.c.h.b16 %v137
    %v873 = vunpack.c.l.b16 %v138
    %v874 = vunpack.c.h.b16 %v138
    %v875 = vunpack.c.l.b16 %v139
    %v876 = vunpack.c.h.b16 %v139
    %v877 = vunpack.c.l.b16 %v140
    %v878 = vunpack.c.h.b16 %v140
    %v879 = vunpack.c.l.b16 %v141
    %v880 = vunpack.c.h.b16 %v141
    %v881 = vunpack.c.l.b16 %v142
    %v882 = vunpack.c.h.b16 %v142
    %v883 = vunpack.c.l.b16 %v143
    %v884 = vunpack.c.h.b16 %v143
    %v885 = vunpack.c.l.b16 %v144
    %v886 = vunpack.c.h.b16 %v144
    %v887 = vunpack.c.l.b16 %v145
    %v888 = vunpack.c.h.b16 %v145
    %v889 = vunpack.c.l.b16 %v146
    %v890 = vunpack.c.h.b16 %v146
    %v891 = vunpack.c.l.b16 %v147
    %v892 = vunpack.c.h.b16 %v147
    %v893 = vunpack.c.l.b16 %v148
    %v894 = vunpack.c.h.b16 %v148
    %v895 = vunpack.c.l.b16 %v149
    %v896 = vunpack.c.h.b16 %v149
    %v897 = vunpack.c.l.b16 %v150
    %v898 = vunpack.c.h.b16 %v150
    %v899 = vunpack.c.l.b16 %v151
    %v900 = vunpack.c.h.b16 %v151
    %v901 = vunpack.c.l.b16 %v152
    %v902 = vunpack.c.h.b16 %v152
    %v903 = vunpack.c.l.b16 %v153
    %v904 = vunpack.c.h.b16 %v153
    %v905 = vunpack.c.l.b16 %v154
    %v906 = vunpack.c.h.b16 %v154
    %v907 = vunpack.c.l.b16 %v155
    %v908 = vunpack.c.h.b16 %v155
    %v909 = vunpack.c.l.b16 %v156
    %v910 = vunpack.c.h.b16 %v156
    %v911 = vunpack.c.l.b16 %v157
    %v912 = vunpack.c.h.b16 %v157
    %v913 = vunpack.c.l.b16 %v158
    %v914 = vunpack.c.h.b16 %v158
    %v915 = vunpack.c.l.b16 %v159
    %v916 = vunpack.c.h.b16 %v159
    %v917 = vunpack.c.l.b16 %v160
    %v918 = vunpack.c.h.b16 %v160
    %v919 = vunpack.c.l.b16 %v161
    %v920 = vunpack.c.h.b16 %v161
    %v921 = vunpack.c.l.b16 %v162
    %v922 = vunpack.c.h.b16 %v162
    %v923 = vunpack.c.l.b16 %v163
    %v924 = vunpack.c.h.b16 %v163
    %v925 = vunpack.c.l.b16 %v164
    %v926 = vunpack.c.h.b16 %v164
    %v927 = vunpack.c.l.b16 %v165
    %v928 = vunpack.c.h.b16 %v165
    %v929 = vunpack.c.l.b16 %v166
    %v930 = vunpack.c.h.b16 %v166
    %v931 = vunpack.c.l.b16 %v167
    %v932 = vunpack.c.h.b16 %v167
    %v933 = vunpack.c.l.b16 %v168
    %v934 = vunpack.c.h.b16 %v168
    %v935 = vunpack.c.l.b16 %v169
    %v936 = vunpack.c.h.b16 %v169
    %v937 = vunpack.c.l.b16 %v170
    %v938 = vunpack.c.h.b16 %v170
    %v939 = vunpack.c.l.b16 %v171
    %v940 = vunpack.c.h.b16 %v171
    %v941 = vunpack.c.l.b16 %v172
    %v942 = vunpack.c.h.b16 %v172
    %v943 = vunpack.c.l.b16 %v173
    %v944 = vunpack.c.h.b16 %v173
    %v945 = vunpack.c.l.b16 %v174
    %v946 = vunpack.c.h.b16 %v174
    %v947 = vunpack.c.l.b16 %v175
    %v948 = vunpack.c.h.b16 %v175
    %v949 = vunpack.c.l.b16 %v176
    %v950 = vunpack.c.h.b16 %v176
    %v951 = vunpack.c.l.b16 %v177
    %v952 = vunpack.c.h.b16 %v177
    %v953 = vunpack.c.l.b16 %v178
    %v954 = vunpack.c.h.b16 %v178
    %v955 = vunpack.c.l.b16 %v179
    %v956 = vunpack.c.h.b16 %v179
    %v957 = vunpack.c.l.b16 %v180
    %v958 = vunpack.c.h.b16 %v180
    %v959 = vunpack.c.l.b16 %v181
    %v960 = vunpack.c.h.b16 %v181
    %v961 = vunpack.c.l.b16 %v182
    %v962 = vunpack.c.h.b16 %v182
    %v963 = vunpack.c.l.b16 %v183
    %v964 = vunpack.c.h.b16 %v183
    %v965 = vunpack.c.l.b16 %v184
    %v966 = vunpack.c.h.b16 %v184
    %v967 = vunpack.c.l.b16 %v185
    %v968 = vunpack.c.h.b16 %v185
    %v969 = vunpack.c.l.b16 %v186
    %v970 = vunpack.c.h.b16 %v186
    %v971 = vunpack.c.l.b16 %v187
    %v972 = vunpack.c.h.b16 %v187
    %v973 = vunpack.c.l.b16 %v188
    %v974 = vunpack.c.h.b16 %v188
    %v975 = vunpack.c.l.b16 %v189
    %v976 = vunpack.c.h.b16 %v189
    %v977 = vunpack.c.l.b16 %v190
    %v978 = vunpack.c.h.b16 %v190
    %v979 = vunpack.c.l.b16 %v191
    %v980 = vunpack.c.h.b16 %v191
    %v981 = vunpack.c.l.b16 %v192
    %v982 = vunpack.c.h.b16 %v192
    %v983 = vunpack.c.l.b16 %v193
    %v984 = vunpack.c.h.b16 %v193
    %v985 = vunpack.c.l.b16 %v194
    %v986 = vunpack.c.h.b16 %v194
    %v987 = vunpack.c.l.b16 %v195
    %v988 = vunpack.c.h.b16 %v195
    %v989 = vunpack.c.l.b16 %v196
    %v990 = vunpack.c.h.b16 %v196
    %v991 = vunpack.c.l.b16 %v197
    %v992 = vunpack.c.h.b16 %v197
    %v993 = vunpack.c.l.b16 %v198
    %v994 = vunpack.c.h.b16 %v198
    %v995 = vunpack.c.l.b16 %v199
    %v996 = vunpack.c.h.b16 %v199
    %v997 = vunpack.c.l.b16 %v200
    %v998 = vunpack.c.h.b16 %v200
    %v999 = vunpack.c.l.b16 %v201
    %v1000 = vunpack.c.h.b16 %v201
    %v1001 = vunpack.c.l.b16 %v202
    %v1002 = vunpack.c.h.b16 %v202
    %v1003 = vunpack.c.l.b16 %v203
    %v1004 = vunpack.c.h.b16 %v203
    %v1005 = vunpack.c.l.b16 %v204
    %v1006 = vunpack.c.h.b16 %v204
    %v1007 = vunpack.c.l.b16 %v205
    %v1008 = vunpack.c.h.b16 %v205
    %v1009 = vunpack.c.l.b16 %v206
    %v1010 = vunpack.c.h.b16 %v206
    %v1011 = vunpack.c.l.b16 %v207
    %v1012 = vunpack.c.h.b16 %v207
    %v1013 = vunpack.c.l.b16 %v208
    %v1014 = vunpack.c.h.b16 %v208
    %v1015 = vunpack.c.l.b16 %v209
    %v1016 = vunpack.c.h.b16 %v209
    %v1017 = vunpack.c.l.b16 %v210
    %v1018 = vunpack.c.h.b16 %v210
    %v1019 = vunpack.c.l.b16 %v211
    %v1020 = vunpack.c.h.b16 %v211
    %v1021 = vunpack.c.l.b16 %v212
    %v1022 = vunpack.c.h.b16 %v212
    %v1023 = vunpack.c.l.b16 %v213
    %v1024 = vunpack.c.h.b16 %v213
    %v1025 = vunpack.c.l.b16 %v214
    %v1026 = vunpack.c.h.b16 %v214
    %v1027 = vunpack.c.l.b16 %v215
    %v1028 = vunpack.c.h.b16 %v215
    %v1029 = vunpack.c.l.b16 %v216
    %v1030 = vunpack.c.h.b16 %v216
    %v1031 = vunpack.c.l.b16 %v217
    %v1032 = vunpack.c.h.b16 %v217
    %v1033 = vunpack.c.l.b16 %v218
    %v1034 = vunpack.c.h.b16 %v218
    %v1035 = vunpack.c.l.b16 %v219
    %v1036 = vunpack.c.h.b16 %v219
    %v1037 = vunpack.c.l.b16 %v220
    %v1038 = vunpack.c.h.b16 %v220
    %v1039 = vunpack.c.l.b16 %v221
    %v1040 = vunpack.c.h.b16 %v221
    %v1041 = vunpack.c.l.b16 %v222
    %v1042 = vunpack.c.h.b16 %v222
    %v1043 = vunpack.c.l.b16 %v223
    %v1044 = vunpack.c.h.b16 %v223
    %v1045 = vunpack.c.l.b16 %v224
    %v1046 = vunpack.c.h.b16 %v224
    %v1047 = vunpack.c.l.b16 %v225
    %v1048 = vunpack.c.h.b16 %v225
    %v1049 = vunpack.c.l.b16 %v226
    %v1050 = vunpack.c.h.b16 %v226
    %v1051 = vunpack.c.l.b16 %v227
    %v1052 = vunpack.c.h.b16 %v227
    %v1053 = vunpack.c.l.b16 %v228
    %v1054 = vunpack.c.h.b16 %v228
    %v1055 = vunpack.c.l.b16 %v229
    %v1056 = vunpack.c.h.b16 %v229
    %v1057 = vunpack.c.l.b16 %v230
    %v1058 = vunpack.c.h.b16 %v230
    %v1059 = vunpack.c.l.b16 %v231
    %v1060 = vunpack.c.h.b16 %v231
    %v1061 = vunpack.c.l.b16 %v232
    %v1062 = vunpack.c.h.b16 %v232
    %v1063 = vunpack.c.l.b16 %v233
    %v1064 = vunpack.c.h.b16 %v233
    %v1065 = vunpack.c.l.b16 %v234
    %v1066 = vunpack.c.h.b16 %v234
    %v1067 = vunpack.c.l.b16 %v235
    %v1068 = vunpack.c.h.b16 %v235
    %v1069 = vunpack.c.l.b16 %v236
    %v1070 = vunpack.c.h.b16 %v236
    %v1071 = vunpack.c.l.b16 %v237
    %v1072 = vunpack.c.h.b16 %v237
    %v1073 = vunpack.c.l.b16 %v238
    %v1074 = vunpack.c.h.b16 %v238
    %v1075 = vunpack.c.l.b16 %v239
    %v1076 = vunpack.c.h.b16 %v239
    %v1077 = vunpack.c.l.b16 %v240
    %v1078 = vunpack.c.h.b16 %v240
    %v1079 = vunpack.c.l.b16 %v241
    %v1080 = vunpack.c.h.b16 %v241
    %v1081 = vunpack.c.l.b16 %v242
    %v1082 = vunpack.c.h.b16 %v242
    %v1083 = vunpack.c.l.b16 %v243
    %v1084 = vunpack.c.h.b16 %v243
    %v1085 = vunpack.c.l.b16 %v244
    %v1086 = vunpack.c.h.b16 %v244
    %v1087 = vunpack.c.l.b16 %v245
    %v1088 = vunpack.c.h.b16 %v245
    %v1089 = vunpack.c.l.b16 %v246
    %v1090 = vunpack.c.h.b16 %v246
    %v1091 = vunpack.c.l.b16 %v247
    %v1092 = vunpack.c.h.b16 %v247
    %v1093 = vunpack.c.l.b16 %v248
    %v1094 = vunpack.c.h.b16 %v248
    %v1095 = vunpack.c.l.b16 %v249
    %v1096 = vunpack.c.h.b16 %v249
    %v1097 = vunpack.c.l.b16 %v250
    %v1098 = vunpack.c.h.b16 %v250
    %v1099 = vunpack.c.l.b16 %v251
    %v1100 = vunpack.c.h.b16 %v251
    %v1101 = vunpack.c.l.b16 %v252
    %v1102 = vunpack.c.h.b16 %v252
    %v1103 = vunpack.c.l.b16 %v253
    %v1104 = vunpack.c.h.b16 %v253
    %v1105 = vunpack.c.l.b16 %v254
    %v1106 = vunpack.c.h.b16 %v254
    %v1107 = vunpack.c.l.b16 %v255
    %v1108 = vunpack.c.h.b16 %v255
    %v1109 = vunpack.c.l.b16 %v256
    %v1110 = vunpack.c.h.b16 %v256
    %v1111 = vunpack.c.l.b16 %v257
    %v1112 = vunpack.c.h.b16 %v257
    %v1113 = vunpack.c.l.b16 %v258
    %v1114 = vunpack.c.h.b16 %v258
    %v1115 = vunpack.c.l.b16 %v259
    %v1116 = vunpack.c.h.b16 %v259
    %v1117 = vunpack.c.l.b16 %v260
    %v1118 = vunpack.c.h.b16 %v260
    %v1119 = vunpack.c.l.b16 %v261
    %v1120 = vunpack.c.h.b16 %v261
    %v1121 = vunpack.c.l.b16 %v262
    %v1122 = vunpack.c.h.b16 %v262
    %v1123 = vunpack.c.l.b16 %v263
    %v1124 = vunpack.c.h.b16 %v263
    %v1125 = vunpack.c.l.b16 %v264
    %v1126 = vunpack.c.h.b16 %v264
    %v1127 = vunpack.c.l.b16 %v265
    %v1128 = vunpack.c.h.b16 %v265
    %v1129 = vunpack.c.l.b16 %v266
    %v1130 = vunpack.c.h.b16 %v266
    %v1131 = vunpack.c.l.b16 %v267
    %v1132 = vunpack.c.h.b16 %v267
    %v1133 = vunpack.c.l.b16 %v268
    %v1134 = vunpack.c.h.b16 %v268
    %v1135 = vunpack.c.l.b16 %v269
    %v1136 = vunpack.c.h.b16 %v269
    %v1137 = vunpack.c.l.b16 %v270
    %v1138 = vunpack.c.h.b16 %v270
    %v1139 = vunpack.c.l.b16 %v271
    %v1140 = vunpack.c.h.b16 %v271
    %v1141 = vunpack.c.l.b16 %v272
    %v1142 = vunpack.c.h.b16 %v272
    %v1143 = vunpack.c.l.b16 %v273
    %v1144 = vunpack.c.h.b16 %v273
    %v1145 = vunpack.c.l.b16 %v274
    %v1146 = vunpack.c.h.b16 %v274
    %v1147 = vunpack.c.l.b16 %v275
    %v1148 = vunpack.c.h.b16 %v275
    %v1149 = vunpack.c.l.b16 %v276
    %v1150 = vunpack.c.h.b16 %v276
    %v1151 = vunpack.c.l.b16 %v277
    %v1152 = vunpack.c.h.b16 %v277
    %v1153 = vunpack.c.l.b16 %v278
    %v1154 = vunpack.c.h.b16 %v278
    %v1155 = vunpack.c.l.b16 %v279
    %v1156 = vunpack.c.h.b16 %v279
    %v1157 = vunpack.c.l.b16 %v280
    %v1158 = vunpack.c.h.b16 %v280
    %v1159 = vunpack.c.l.b16 %v281
    %v1160 = vunpack.c.h.b16 %v281
    %v1161 = vunpack.c.l.b16 %v282
    %v1162 = vunpack.c.h.b16 %v282
    %v1163 = vunpack.c.l.b16 %v283
    %v1164 = vunpack.c.h.b16 %v283
    %v1165 = vunpack.c.l.b16 %v284
    %v1166 = vunpack.c.h.b16 %v284
    %v1167 = vunpack.c.l.b16 %v285
    %v1168 = vunpack.c.h.b16 %v285
    %v1169 = vunpack.c.l.b16 %v286
    %v1170 = vunpack.c.h.b16 %v286
    %v1171 = vunpack.c.l.b16 %v287
    %v1172 = vunpack.c.h.b16 %v287
    %v1173 = vunpack.c.l.b16 %v288
    %v1174 = vunpack.c.h.b16 %v288
    %v1175 = vunpack.c.l.b16 %v289
    %v1176 = vunpack.c.h.b16 %v289
    %v1177 = vunpack.c.l.b16 %v290
    %v1178 = vunpack.c.h.b16 %v290
    %v1179 = vunpack.c.l.b16 %v291
    %v1180 = vunpack.c.h.b16 %v291
    %v1181 = vunpack.c.l.b16 %v292
    %v1182 = vunpack.c.h.b16 %v292
    %v1183 = vunpack.c.l.b16 %v293
    %v1184 = vunpack.c.h.b16 %v293
    %v1185 = vunpack.c.l.b16 %v294
    %v1186 = vunpack.c.h.b16 %v294
    %v1187 = vunpack.c.l.b16 %v295
    %v1188 = vunpack.c.h.b16 %v295
    %v1189 = vunpack.c.l.b16 %v296
    %v1190 = vunpack.c.h.b16 %v296
    %v1191 = vunpack.c.l.b16 %v297
    %v1192 = vunpack.c.h.b16 %v297
    %v1193 = vunpack.c.l.b16 %v298
    %v1194 = vunpack.c.h.b16 %v298
    %v1195 = vunpack.c.l.b16 %v299
    %v1196 = vunpack.c.h.b16 %v299
    %v1197 = vunpack.c.l.b16 %v300
    %v1198 = vunpack.c.h.b16 %v300
    %v1199 = vunpack.c.l.b16 %v301
    %v1200 = vunpack.c.h.b16 %v301
    %v1201 = vunpack.c.l.b16 %v302
    %v1202 = vunpack.c.h.b16 %v302
    %v1203 = vunpack.c.l.b16 %v303
    %v1204 = vunpack.c.h.b16 %v303
    %v1205 = vunpack.c.l.b16 %v304
    %v1206 = vunpack.c.h.b16 %v304
    %v1207 = vunpack.c.l.b16 %v305
    %v1208 = vunpack.c.h.b16 %v305
    %v1209 = vpack.c.b16 %v705, %v697
    %v1210 = vpack.c.b16 %v706, %v698
    %v1211 = vpack.c.b16 %v707, %v699
    %v1212 = vpack.c.b16 %v708, %v700
    %v1213 = vpack.c.b16 %v709, %v701
    %v1214 = vpack.c.b16 %v710, %v702
    %v1215 = vpack.c.b16 %v711, %v703
    %v1216 = vpack.c.b16 %v712, %v704
    %v1217 = vpack.c.b16 %v721, %v713
    %v1218 = vpack.c.b16 %v722, %v714
    %v1219 = vpack.c.b16 %v723, %v715
    %v1220 = vpack.c.b16 %v724, %v716
    %v1221 = vpack.c.b16 %v725, %v717
    %v1222 = vpack.c.b16 %v726, %v718
    %v1223 = vpack.c.b16 %v727, %v719
    %v1224 = vpack.c.b16 %v728, %v720
    %v1225 = vpack.c.b16 %v737, %v729
    %v1226 = vpack.c.b16 %v738, %v730
    %v1227 = vpack.c.b16 %v739, %v731
    %v1228 = vpack.c.b16 %v740, %v732
    %v1229 = vpack.c.b16 %v741, %v733
    %v1230 = vpack.c.b16 %v742, %v734
    %v1231 = vpack.c.b16 %v743, %v735
    %v1232 = vpack.c.b16 %v744, %v736
    %v1233 = vpack.c.b16 %v753, %v745
    %v1234 = vpack.c.b16 %v754, %v746
    %v1235 = vpack.c.b16 %v755, %v747
    %v1236 = vpack.c.b16 %v756, %v748
    %v1237 = vpack.c.b16 %v757, %v749
    %v1238 = vpack.c.b16 %v758, %v750
    %v1239 = vpack.c.b16 %v759, %v751
    %v1240 = vpack.c.b16 %v760, %v752
    %v1241 = vpack.c.b16 %v769, %v761
    %v1242 = vpack.c.b16 %v770, %v762
    %v1243 = vpack.c.b16 %v771, %v763
    %v1244 = vpack.c.b16 %v772, %v764
    %v1245 = vpack.c.b16 %v773, %v765
    %v1246 = vpack.c.b16 %v774, %v766
    %v1247 = vpack.c.b16 %v775, %v767
    %v1248 = vpack.c.b16 %v776, %v768
    %v1249 = vpack.c.b16 %v785, %v777
    %v1250 = vpack.c.b16 %v786, %v778
    %v1251 = vpack.c.b16 %v787, %v779
    %v1252 = vpack.c.b16 %v788, %v780
    %v1253 = vpack.c.b16 %v789, %v781
    %v1254 = vpack.c.b16 %v790, %v782
    %v1255 = vpack.c.b16 %v791, %v783
    %v1256 = vpack.c.b16 %v792, %v784
    %v1257 = vpack.c.b16 %v801, %v793
    %v1258 = vpack.c.b16 %v802, %v794
    %v1259 = vpack.c.b16 %v803, %v795
    %v1260 = vpack.c.b16 %v804, %v796
    %v1261 = vpack.c.b16 %v805, %v797
    %v1262 = vpack.c.b16 %v806, %v798
    %v1263 = vpack.c.b16 %v807, %v799
    %v1264 = vpack.c.b16 %v808, %v800
    %v1265 = vpack.c.b16 %v817, %v809
    %v1266 = vpack.c.b16 %v818, %v810
    %v1267 = vpack.c.b16 %v819, %v811
    %v1268 = vpack.c.b16 %v820, %v812
    %v1269 = vpack.c.b16 %v821, %v813
    %v1270 = vpack.c.b16 %v822, %v814
    %v1271 = vpack.c.b16 %v823, %v815
    %v1272 = vpack.c.b16 %v824, %v816
    %v1273 = vpack.c.b16 %v833, %v825
    %v1274 = vpack.c.b16 %v834, %v826
    %v1275 = vpack.c.b16 %v835, %v827
    %v1276 = vpack.c.b16 %v836, %v828
    %v1277 = vpack.c.b16 %v837, %v829
    %v1278 = vpack.c.b16 %v838, %v830
    %v1279 = vpack.c.b16 %v839, %v831
    %v1280 = vpack.c.b16 %v840, %v832
    %v1281 = vpack.c.b16 %v849, %v841
    %v1282 = vpack.c.b16 %v850, %v842
    %v1283 = vpack.c.b16 %v851, %v843
    %v1284 = vpack.c.b16 %v852, %v844
    %v1285 = vpack.c.b16 %v853, %v845
    %v1286 = vpack.c.b16 %v854, %v846
    %v1287 = vpack.c.b16 %v855, %v847
    %v1288 = vpack.c.b16 %v856, %v848
    %v1289 = vpack.c.b16 %v865, %v857
    %v1290 = vpack.c.b16 %v866, %v858
    %v1291 = vpack.c.b16 %v867, %v859
    %v1292 = vpack.c.b16 %v868, %v860
    %v1293 = vpack.c.b16 %v869, %v861
    %v1294 = vpack.c.b16 %v870, %v862
    %v1295 = vpack.c.b16 %v871, %v863
    %v1296 = vpack.c.b16 %v872, %v864
    %v1297 = vpack.c.b16 %v881, %v873
    %v1298 = vpack.c.b16 %v882, %v874
    %v1299 = vpack.c.b16 %v883, %v875
    %v1300 = vpack.c.b16 %v884, %v876
    %v1301 = vpack.c.b16 %v885, %v877
    %v1302 = vpack.c.b16 %v886, %v878
    %v1303 = vpack.c.b16 %v887, %v879
    %v1304 = vpack.c.b16 %v888, %v880
    %v1305 = vpack.c.b16 %v897, %v889
    %v1306 = vpack.c.b16 %v898, %v890
    %v1307 = vpack.c.b16 %v899, %v891
    %v1308 = vpack.c.b16 %v900, %v892
    %v1309 = vpack.c.b16 %v901, %v893
    %v1310 = vpack.c.b16 %v902, %v894
    %v1311 = vpack.c.b16 %v903, %v895
    %v1312 = vpack.c.b16 %v904, %v896
    %v1313 = vpack.c.b16 %v913, %v905
    %v1314 = vpack.c.b16 %v914, %v906
    %v1315 = vpack.c.b16 %v915, %v907
    %v1316 = vpack.c.b16 %v916, %v908
    %v1317 = vpack.c.b16 %v917, %v909
    %v1318 = vpack.c.b16 %v918, %v910
    %v1319 = vpack.c.b16 %v919, %v911
    %v1320 = vpack.c.b16 %v920, %v912
    %v1321 = vpack.c.b16 %v929, %v921
    %v1322 = vpack.c.b16 %v930, %v922
    %v1323 = vpack.c.b16 %v931, %v923
    %v1324 = vpack.c.b16 %v932, %v924
    %v1325 = vpack.c.b16 %v933, %v925
    %v1326 = vpack.c.b16 %v934, %v926
    %v1327 = vpack.c.b16 %v935, %v927
    %v1328 = vpack.c.b16 %v936, %v928
    %v1329 = vpack.c.b16 %v945, %v937
    %v1330 = vpack.c.b16 %v946, %v938
    %v1331 = vpack.c.b16 %v947, %v939
    %v1332 = vpack.c.b16 %v948, %v940
    %v1333 = vpack.c.b16 %v949, %v941
    %v1334 = vpack.c.b16 %v950, %v942
    %v1335 = vpack.c.b16 %v951, %v943
    %v1336 = vpack.c.b16 %v952, %v944
    %v1337 = vpack.c.b16 %v961, %v953
    %v1338 = vpack.c.b16 %v962, %v954
    %v1339 = vpack.c.b16 %v963, %v955
    %v1340 = vpack.c.b16 %v964, %v956
    %v1341 = vpack.c.b16 %v965, %v957
    %v1342 = vpack.c.b16 %v966, %v958
    %v1343 = vpack.c.b16 %v967, %v959
    %v1344 = vpack.c.b16 %v968, %v960
    %v1345 = vpack.c.b16 %v977, %v969
    %v1346 = vpack.c.b16 %v978, %v970
    %v1347 = vpack.c.b16 %v979, %v971
    %v1348 = vpack.c.b16 %v980, %v972
    %v1349 = vpack.c.b16 %v981, %v973
    %v1350 = vpack.c.b16 %v982, %v974
    %v1351 = vpack.c.b16 %v983, %v975
    %v1352 = vpack.c.b16 %v984, %v976
    %v1353 = vpack.c.b16 %v993, %v985
    %v1354 = vpack.c.b16 %v994, %v986
    %v1355 = vpack.c.b16 %v995, %v987
    %v1356 = vpack.c.b16 %v996, %v988
    %v1357 = vpack.c.b16 %v997, %v989
    %v1358 = vpack.c.b16 %v998, %v990
    %v1359 = vpack.c.b16 %v999, %v991
    %v1360 = vpack.c.b16 %v1000, %v992
    %v1361 = vpack.c.b16 %v1009, %v1001
    %v1362 = vpack.c.b16 %v1010, %v1002
    %v1363 = vpack.c.b16 %v1011, %v1003
    %v1364 = vpack.c.b16 %v1012, %v1004
    %v1365 = vpack.c.b16 %v1013, %v1005
    %v1366 = vpack.c.b16 %v1014, %v1006
    %v1367 = vpack.c.b16 %v1015, %v1007
    %v1368 = vpack.c.b16 %v1016, %v1008
    %v1369 = vpack.c.b16 %v1025, %v1017
    %v1370 = vpack.c.b16 %v1026, %v1018
    %v1371 = vpack.c.b16 %v1027, %v1019
    %v1372 = vpack.c.b16 %v1028, %v1020
    %v1373 = vpack.c.b16 %v1029, %v1021
    %v1374 = vpack.c.b16 %v1030, %v1022
    %v1375 = vpack.c.b16 %v1031, %v1023
    %v1376 = vpack.c.b16 %v1032, %v1024
    %v1377 = vpack.c.b16 %v1041, %v1033
    %v1378 = vpack.c.b16 %v1042, %v1034
    %v1379 = vpack.c.b16 %v1043, %v1035
    %v1380 = vpack.c.b16 %v1044, %v1036
    %v1381 = vpack.c.b16 %v1045, %v1037
    %v1382 = vpack.c.b16 %v1046, %v1038
    %v1383 = vpack.c.b16 %v1047, %v1039
    %v1384 = vpack.c.b16 %v1048, %v1040
    %v1385 = vpack.c.b16 %v1057, %v1049
    %v1386 = vpack.c.b16 %v1058, %v1050
    %v1387 = vpack.c.b16 %v1059, %v1051
    %v1388 = vpack.c.b16 %v1060, %v1052
    %v1389 = vpack.c.b16 %v1061, %v1053
    %v1390 = vpack.c.b16 %v1062, %v1054
    %v1391 = vpack.c.b16 %v1063, %v1055
    %v1392 = vpack.c.b16 %v1064, %v1056
    %v1393 = vpack.c.b16 %v1073, %v1065
    %v1394 = vpack.c.b16 %v1074, %v1066
    %v1395 = vpack.c.b16 %v1075, %v1067
    %v1396 = vpack.c.b16 %v1076, %v1068
    %v1397 = vpack.c.b16 %v1077, %v1069
    %v1398 = vpack.c.b16 %v1078, %v1070
    %v1399 = vpack.c.b16 %v1079, %v1071
    %v1400 = vpack.c.b16 %v1080, %v1072
    %v1401 = vpack.c.b16 %v1089, %v1081
    %v1402 = vpack.c.b16 %v1090, %v1082
    %v1403 = vpack.c.b16 %v1091, %v1083
    %v1404 = vpack.c.b16 %v1092, %v1084
    %v1405 = vpack.c.b16 %v1093, %v1085
    %v1406 = vpack.c.b16 %v1094, %v1086
    %v1407 = vpack.c.b16 %v1095, %v1087
    %v1408 = vpack.c.b16 %v1096, %v1088
    %v1409 = vpack.c.b16 %v1105, %v1097
    %v1410 = vpack.c.b16 %v1106, %v1098
    %v1411 = vpack.c.b16 %v1107, %v1099
    %v1412 = vpack.c.b16 %v1108, %v1100
    %v1413 = vpack.c.b16 %v1109, %v1101
    %v1414 = vpack.c.b16 %v1110, %v1102
    %v1415 = vpack.c.b16 %v1111, %v1103
    %v1416 = vpack.c.b16 %v1112, %v1104
    %v1417 = vpack.c.b16 %v1121, %v1113
    %v1418 = vpack.c.b16 %v1122, %v1114
    %v1419 = vpack.c.b16 %v1123, %v1115
    %v1420 = vpack.c.b16 %v1124, %v1116
    %v1421 = vpack.c.b16 %v1125, %v1117
    %v1422 = vpack.c.b16 %v1126, %v1118
    %v1423 = vpack.c.b16 %v1127, %v1119
    %v1424 = vpack.c.b16 %v1128, %v1120
    %v1425 = vpack.c.b16 %v1137, %v1129
    %v1426 = vpack.c.b16 %v1138, %v1130
    %v1427 = vpack.c.b16 %v1139, %v1131
    %v1428 = vpack.c.b16 %v1140, %v1132
    %v1429 = vpack.c.b16 %v1141, %v1133
    %v1430 = vpack.c.b16 %v1142, %v1134
    %v1431 = vpack.c.b16 %v1143, %v1135
    %v1432 = vpack.c.b16 %v1144, %v1136
    %v1433 = vpack.c.b16 %v1153, %v1145
    %v1434 = vpack.c.b16 %v1154, %v1146
    %v1435 = vpack.c.b16 %v1155, %v1147
    %v1436 = vpack.c.b16 %v1156, %v1148
    %v1437 = vpack.c.b16 %v1157, %v1149
    %v1438 = vpack.c.b16 %v1158, %v1150
    %v1439 = vpack.c.b16 %v1159, %v1151
    %v1440 = vpack.c.b16 %v1160, %v1152
    %v1441 = vpack.c.b16 %v1169, %v1161
    %v1442 = vpack.c.b16 %v1170, %v1162
    %v1443 = vpack.c.b16 %v1171, %v1163
    %v1444 = vpack.c.b16 %v1172, %v1164
    %v1445 = vpack.c.b16 %v1173, %v1165
    %v1446 = vpack.c.b16 %v1174, %v1166
    %v1447 = vpack.c.b16 %v1175, %v1167
    %v1448 = vpack.c.b16 %v1176, %v1168
    %v1449 = vpack.c.b16 %v1185, %v1177
    %v1450 = vpack.c.b16 %v1186, %v1178
    %v1451 = vpack.c.b16 %v1187, %v1179
    %v1452 = vpack.c.b16 %v1188, %v1180
    %v1453 = vpack.c.b16 %v1189, %v1181
    %v1454 = vpack.c.b16 %v1190, %v1182
    %v1455 = vpack.c.b16 %v1191, %v1183
    %v1456 = vpack.c.b16 %v1192, %v1184
    %v1457 = vpack.c.b16 %v1201, %v1193
    %v1458 = vpack.c.b16 %v1202, %v1194
    %v1459 = vpack.c.b16 %v1203, %v1195
    %v1460 = vpack.c.b16 %v1204, %v1196
    %v1461 = vpack.c.b16 %v1205, %v1197
    %v1462 = vpack.c.b16 %v1206, %v1198
    %v1463 = vpack.c.b16 %v1207, %v1199
    %v1464 = vpack.c.b16 %v1208, %v1200
    %v1849 = vunpack.c.l.b16 %v306
    %v1850 = vunpack.c.l.b16 %v307
    %v1851 = vunpack.c.l.b16 %v308
    %v1852 = vunpack.c.l.b16 %v309
    %v1853 = vunpack.c.l.b16 %v310
    %v1854 = vunpack.c.l.b16 %v311
    %v1855 = vunpack.c.l.b16 %v312
    %v1856 = vunpack.c.l.b16 %v313
    %v1857 = vunpack.c.l.b16 %v314
    %v1858 = vunpack.c.l.b16 %v315
    %v1859 = vunpack.c.l.b16 %v316
    %v1860 = vunpack.c.l.b16 %v317
    %v1861 = vunpack.c.l.b16 %v318
    %v1862 = vunpack.c.l.b16 %v319
    %v1863 = vunpack.c.l.b16 %v320
    %v1864 = vunpack.c.l.b16 %v321
    %v1865 = vunpack.c.l.b16 %v322
    %v1866 = vunpack.c.l.b16 %v323
    %v1867 = vunpack.c.l.b16 %v324
    %v1868 = vunpack.c.l.b16 %v325
    %v1869 = vunpack.c.l.b16 %v326
    %v1870 = vunpack.c.l.b16 %v327
    %v1871 = vunpack.c.l.b16 %v328
    %v1872 = vunpack.c.l.b16 %v329
    %v1873 = vunpack.c.l.b16 %v330
    %v1874 = vunpack.c.l.b16 %v331
    %v1875 = vunpack.c.l.b16 %v332
    %v1876 = vunpack.c.l.b16 %v333
    %v1877 = vunpack.c.l.b16 %v334
    %v1878 = vunpack.c.l.b16 %v335
    %v1879 = vunpack.c.l.b16 %v336
    %v1880 = vunpack.c.l.b16 %v337
    %v1881 = vunpack.c.l.b16 %v338
    %v1882 = vunpack.c.l.b16 %v339
    %v1883 = vunpack.c.l.b16 %v340
    %v1884 = vunpack.c.l.b16 %v341
    %v1885 = vunpack.c.l.b16 %v342
    %v1886 = vunpack.c.l.b16 %v343
    %v1887 = vunpack.c.l.b16 %v344
    %v1888 = vunpack.c.l.b16 %v345
    %v1889 = vunpack.c.l.b16 %v346
    %v1890 = vunpack.c.l.b16 %v347
    %v1891 = vunpack.c.l.b16 %v348
    %v1892 = vunpack.c.l.b16 %v349
    %v1893 = vunpack.c.l.b16 %v350
    %v1894 = vunpack.c.l.b16 %v351
    %v1895 = vunpack.c.l.b16 %v352
    %v1896 = vunpack.c.l.b16 %v353
    %v1897 = vunpack.c.l.b16 %v354
    %v1898 = vunpack.c.l.b16 %v355
    %v1899 = vunpack.c.l.b16 %v356
    %v1900 = vunpack.c.l.b16 %v357
    %v1901 = vunpack.c.l.b16 %v358
    %v1902 = vunpack.c.l.b16 %v359
    %v1903 = vunpack.c.l.b16 %v360
    %v1904 = vunpack.c.l.b16 %v361
    %v1905 = vunpack.c.l.b16 %v362
    %v1906 = vunpack.c.l.b16 %v363
    %v1907 = vunpack.c.l.b16 %v364
    %v1908 = vunpack.c.l.b16 %v365
    %v1909 = vunpack.c.l.b16 %v366
    %v1910 = vunpack.c.l.b16 %v367
    %v1911 = vunpack.c.l.b16 %v368
    %v1912 = vunpack.c.l.b16 %v369
    %v1913 = vunpack.c.l.b16 %v370
    %v1914 = vunpack.c.l.b16 %v371
    %v1915 = vunpack.c.l.b16 %v372
    %v1916 = vunpack.c.l.b16 %v373
    %v1917 = vunpack.c.l.b16 %v374
    %v1918 = vunpack.c.l.b16 %v375
    %v1919 = vunpack.c.l.b16 %v376
    %v1920 = vunpack.c.l.b16 %v377
    %v1921 = vunpack.c.l.b16 %v378
    %v1922 = vunpack.c.l.b16 %v379
    %v1923 = vunpack.c.l.b16 %v380
    %v1924 = vunpack.c.l.b16 %v381
    %v1925 = vunpack.c.l.b16 %v382
    %v1926 = vunpack.c.l.b16 %v383
    %v1927 = vunpack.c.l.b16 %v384
    %v1928 = vunpack.c.l.b16 %v385
    %v1929 = vunpack.c.l.b16 %v386
    %v1930 = vunpack.c.l.b16 %v387
    %v1931 = vunpack.c.l.b16 %v388
    %v1932 = vunpack.c.l.b16 %v389
    %v1933 = vunpack.c.l.b16 %v390
    %v1934 = vunpack.c.l.b16 %v391
    %v1935 = vunpack.c.l.b16 %v392
    %v1936 = vunpack.c.l.b16 %v393
    %v1937 = vunpack.c.l.b16 %v394
    %v1938 = vunpack.c.l.b16 %v395
    %v1939 = vunpack.c.l.b16 %v396
    %v1940 = vunpack.c.l.b16 %v397
    %v1941 = vunpack.c.l.b16 %v398
    %v1942 = vunpack.c.l.b16 %v399
    %v1943 = vunpack.c.l.b16 %v400
    %v1944 = vunpack.c.l.b16 %v401
    %v1945 = vunpack.c.l.b16 %v402
    %v1946 = vunpack.c.l.b16 %v403
    %v1947 = vunpack.c.l.b16 %v404
    %v1948 = vunpack.c.l.b16 %v405
    %v1949 = vunpack.c.l.b16 %v406
    %v1950 = vunpack.c.l.b16 %v407
    %v1951 = vunpack.c.l.b16 %v408
    %v1952 = vunpack.c.l.b16 %v409
    %v1953 = vunpack.c.l.b16 %v410
    %v1954 = vunpack.c.l.b16 %v411
    %v1955 = vunpack.c.l.b16 %v412
    %v1956 = vunpack.c.l.b16 %v413
    %v1957 = vunpack.c.l.b16 %v414
    %v1958 = vunpack.c.l.b16 %v415
    %v1959 = vunpack.c.l.b16 %v416
    %v1960 = vunpack.c.l.b16 %v417
    %v1961 = vunpack.c.l.b16 %v418
    %v1962 = vunpack.c.l.b16 %v419
    %v1963 = vunpack.c.l.b16 %v420
    %v1964 = vunpack.c.l.b16 %v421
    %v1965 = vunpack.c.l.b16 %v422
    %v1966 = vunpack.c.l.b16 %v423
    %v1967 = vunpack.c.l.b16 %v424
    %v1968 = vunpack.c.l.b16 %v425
    %v1969 = vunpack.c.l.b16 %v426
    %v1970 = vunpack.c.l.b16 %v427
    %v1971 = vunpack.c.l.b16 %v428
    %v1972 = vunpack.c.l.b16 %v429
    %v1973 = vunpack.c.l.b16 %v430
    %v1974 = vunpack.c.l.b16 %v431
    %v1975 = vunpack.c.l.b16 %v432
    %v1976 = vunpack.c.l.b16 %v433
    %v1977 = vpack.c.b16 %v1850, %v1849
    %v1978 = vpack.c.b16 %v1852, %v1851
    %v1979 = vpack.c.b16 %v1854, %v1853
    %v1980 = vpack.c.b16 %v1856, %v1855
    %v1981 = vpack.c.b16 %v1858, %v1857
    %v1982 = vpack.c.b16 %v1860, %v1859
    %v1983 = vpack.c.b16 %v1862, %v1861
    %v1984 = vpack.c.b16 %v1864, %v1863
    %v1985 = vpack.c.b16 %v1866, %v1865
    %v1986 = vpack.c.b16 %v1868, %v1867
    %v1987 = vpack.c.b16 %v1870, %v1869
    %v1988 = vpack.c.b16 %v1872, %v1871
    %v1989 = vpack.c.b16 %v1874, %v1873
    %v1990 = vpack.c.b16 %v1876, %v1875
    %v1991 = vpack.c.b16 %v1878, %v1877
    %v1992 = vpack.c.b16 %v1880, %v1879
    %v1993 = vpack.c.b16 %v1882, %v1881
    %v1994 = vpack.c.b16 %v1884, %v1883
    %v1995 = vpack.c.b16 %v1886, %v1885
    %v1996 = vpack.c.b16 %v1888, %v1887
    %v1997 = vpack.c.b16 %v1890, %v1889
    %v1998 = vpack.c.b16 %v1892, %v1891
    %v1999 = vpack.c.b16 %v1894, %v1893
    %v2000 = vpack.c.b16 %v1896, %v1895
    %v2001 = vpack.c.b16 %v1898, %v1897
    %v2002 = vpack.c.b16 %v1900, %v1899
    %v2003 = vpack.c.b16 %v1902, %v1901
    %v2004 = vpack.c.b16 %v1904, %v1903
    %v2005 = vpack.c.b16 %v1906, %v1905
    %v2006 = vpack.c.b16 %v1908, %v1907
    %v2007 = vpack.c.b16 %v1910, %v1909
    %v2008 = vpack.c.b16 %v1912, %v1911
    %v2009 = vpack.c.b16 %v1914, %v1913
    %v2010 = vpack.c.b16 %v1916, %v1915
    %v2011 = vpack.c.b16 %v1918, %v1917
    %v2012 = vpack.c.b16 %v1920, %v1919
    %v2013 = vpack.c.b16 %v1922, %v1921
    %v2014 = vpack.c.b16 %v1924, %v1923
    %v2015 = vpack.c.b16 %v1926, %v1925
    %v2016 = vpack.c.b16 %v1928, %v1927
    %v2017 = vpack.c.b16 %v1930, %v1929
    %v2018 = vpack.c.b16 %v1932, %v1931
    %v2019 = vpack.c.b16 %v1934, %v1933
    %v2020 = vpack.c.b16 %v1936, %v1935
    %v2021 = vpack.c.b16 %v1938, %v1937
    %v2022 = vpack.c.b16 %v1940, %v1939
    %v2023 = vpack.c.b16 %v1942, %v1941
    %v2024 = vpack.c.b16 %v1944, %v1943
    %v2025 = vpack.c.b16 %v1946, %v1945
    %v2026 = vpack.c.b16 %v1948, %v1947
    %v2027 = vpack.c.b16 %v1950, %v1949
    %v2028 = vpack.c.b16 %v1952, %v1951
    %v2029 = vpack.c.b16 %v1954, %v1953
    %v2030 = vpack.c.b16 %v1956, %v1955
    %v2031 = vpack.c.b16 %v1958, %v1957
    %v2032 = vpack.c.b16 %v1960, %v1959
    %v2033 = vpack.c.b16 %v1962, %v1961
    %v2034 = vpack.c.b16 %v1964, %v1963
    %v2035 = vpack.c.b16 %v1966, %v1965
    %v2036 = vpack.c.b16 %v1968, %v1967
    %v2037 = vpack.c.b16 %v1970, %v1969
    %v2038 = vpack.c.b16 %v1972, %v1971
    %v2039 = vpack.c.b16 %v1974, %v1973
    %v2040 = vpack.c.b16 %v1976, %v1975
    %2105 = vmatprep.subr.bf16.mxu0 0
    %2106 = vmatpush1.bf16.msra.mxu0 %v1977
    %2107 = vmatprep.subr.bf16.mxu0 0
    %2108 = vmatpush1.bf16.msra.mxu0 %v1978
    %2109 = vmatprep.subr.bf16.mxu0 0
    %2110 = vmatpush1.bf16.msra.mxu0 %v1979
    %2111 = vmatprep.subr.bf16.mxu0 0
    %2112 = vmatpush1.bf16.msra.mxu0 %v1980
    %2113 = vmatprep.subr.bf16.mxu0 0
    %2114 = vmatpush1.bf16.msra.mxu0 %v1981
    %2115 = vmatprep.subr.bf16.mxu0 0
    %2116 = vmatpush1.bf16.msra.mxu0 %v1982
    %2117 = vmatprep.subr.bf16.mxu0 0
    %2118 = vmatpush1.bf16.msra.mxu0 %v1983
    %2119 = vmatprep.subr.bf16.mxu0 0
    %2120 = vmatpush1.bf16.msra.mxu0 %v1984
    %2121 = vmatprep.subr.bf16.mxu0 0
    %2122 = vmatpush1.bf16.msra.mxu0 %v1985
    %2123 = vmatprep.subr.bf16.mxu0 0
    %2124 = vmatpush1.bf16.msra.mxu0 %v1986
    %2125 = vmatprep.subr.bf16.mxu0 0
    %2126 = vmatpush1.bf16.msra.mxu0 %v1987
    %2127 = vmatprep.subr.bf16.mxu0 0
    %2128 = vmatpush1.bf16.msra.mxu0 %v1988
    %2129 = vmatprep.subr.bf16.mxu0 0
    %2130 = vmatpush1.bf16.msra.mxu0 %v1989
    %2131 = vmatprep.subr.bf16.mxu0 0
    %2132 = vmatpush1.bf16.msra.mxu0 %v1990
    %2133 = vmatprep.subr.bf16.mxu0 0
    %2134 = vmatpush1.bf16.msra.mxu0 %v1991
    %2135 = vmatprep.subr.bf16.mxu0 0
    %2136 = vmatpush1.bf16.msra.mxu0 %v1992
    %2137 = vmatprep.mubr.bf16.mxu0 %v1210
    %2138 = vmatmul.mubr.bf16.gmra.mrb[0].mxu0 %v1209
    %v2139 = vpop.f32.mrb[0].mxu0
    %v2140 = vadd.f32 %v439, %v2139
    %v2141 = vpop.f32.mrb[0].mxu0
    %v2142 = vpop.f32.mrb[0].mxu0
    %v2143 = vadd.f32 %v439, %v2142
    %v2144 = vpop.f32.mrb[0].mxu0
    %2145 = vmatprep.mubr.bf16.mxu0 %v1218
    %2146 = vmatmul.mubr.bf16.gmra.mrb[0].mxu0 %v1217
    %v2147 = vpop.f32.mrb[0].mxu0
    %v2148 = vadd.f32 %v439, %v2147
    %v2149 = vpop.f32.mrb[0].mxu0
    %v2150 = vpop.f32.mrb[0].mxu0
    %v2151 = vadd.f32 %v439, %v2150
    %v2152 = vpop.f32.mrb[0].mxu0
    %2153 = vmatprep.mubr.bf16.mxu0 %v1226
    %2154 = vmatmul.mubr.bf16.gmra.mrb[0].mxu0 %v1225
    %v2155 = vpop.f32.mrb[0].mxu0
    %v2156 = vadd.f32 %v439, %v2155
    %v2157 = vpop.f32.mrb[0].mxu0
    %v2158 = vpop.f32.mrb[0].mxu0
    %v2159 = vadd.f32 %v439, %v2158
    %v2160 = vpop.f32.mrb[0].mxu0
    %2161 = vmatprep.mubr.bf16.mxu0 %v1234
    %2162 = vmatmul.mubr.bf16.gmra.mrb[0].mxu0 %v1233
    %v2163 = vpop.f32.mrb[0].mxu0
    %v2164 = vadd.f32 %v439, %v2163
    %v2165 = vpop.f32.mrb[0].mxu0
    %v2166 = vpop.f32.mrb[0].mxu0
    %v2167 = vadd.f32 %v439, %v2166
    %v2168 = vpop.f32.mrb[0].mxu0
    %2169 = vmatprep.mubr.bf16.mxu0 %v1242
    %2170 = vmatmul.mubr.bf16.gmra.mrb[0].mxu0 %v1241
    %v2171 = vpop.f32.mrb[0].mxu0
    %v2172 = vadd.f32 %v439, %v2171
    %v2173 = vpop.f32.mrb[0].mxu0
    %v2174 = vpop.f32.mrb[0].mxu0
    %v2175 = vadd.f32 %v439, %v2174
    %v2176 = vpop.f32.mrb[0].mxu0
    %2177 = vmatprep.mubr.bf16.mxu0 %v1250
    %2178 = vmatmul.mubr.bf16.gmra.mrb[0].mxu0 %v1249
    %v2179 = vpop.f32.mrb[0].mxu0
    %v2180 = vadd.f32 %v439, %v2179
    %v2181 = vpop.f32.mrb[0].mxu0
    %v2182 = vpop.f32.mrb[0].mxu0
    %v2183 = vadd.f32 %v439, %v2182
    %v2184 = vpop.f32.mrb[0].mxu0
    %2185 = vmatprep.mubr.bf16.mxu0 %v1258
    %2186 = vmatmul.mubr.bf16.gmra.mrb[0].mxu0 %v1257
    %v2187 = vpop.f32.mrb[0].mxu0
    %v2188 = vadd.f32 %v439, %v2187
    %v2189 = vpop.f32.mrb[0].mxu0
    %v2190 = vpop.f32.mrb[0].mxu0
    %v2191 = vadd.f32 %v439, %v2190
    %v2192 = vpop.f32.mrb[0].mxu0
    %2193 = vmatprep.mubr.bf16.mxu0 %v1266
    %2194 = vmatmul.mubr.bf16.gmra.mrb[0].mxu0 %v1265
    %v2195 = vpop.f32.mrb[0].mxu0
    %v2196 = vadd.f32 %v439, %v2195
    %v2197 = vpop.f32.mrb[0].mxu0
    %v2198 = vpop.f32.mrb[0].mxu0
    %v2199 = vadd.f32 %v439, %v2198
    %v2200 = vpop.f32.mrb[0].mxu0
    %2201 = vmatprep.mubr.bf16.mxu0 %v1274
    %2202 = vmatmul.mubr.bf16.gmra.mrb[0].mxu0 %v1273
    %v2203 = vpop.f32.mrb[0].mxu0
    %v2204 = vadd.f32 %v439, %v2203
    %v2205 = vpop.f32.mrb[0].mxu0
    %v2206 = vpop.f32.mrb[0].mxu0
    %v2207 = vadd.f32 %v439, %v2206
    %v2208 = vpop.f32.mrb[0].mxu0
    %2209 = vmatprep.mubr.bf16.mxu0 %v1282
    %2210 = vmatmul.mubr.bf16.gmra.mrb[0].mxu0 %v1281
    %v2211 = vpop.f32.mrb[0].mxu0
    %v2212 = vadd.f32 %v439, %v2211
    %v2213 = vpop.f32.mrb[0].mxu0
    %v2214 = vpop.f32.mrb[0].mxu0
    %v2215 = vadd.f32 %v439, %v2214
    %v2216 = vpop.f32.mrb[0].mxu0
    %2217 = vmatprep.mubr.bf16.mxu0 %v1290
    %2218 = vmatmul.mubr.bf16.gmra.mrb[0].mxu0 %v1289
    %v2219 = vpop.f32.mrb[0].mxu0
    %v2220 = vadd.f32 %v439, %v2219
    %v2221 = vpop.f32.mrb[0].mxu0
    %v2222 = vpop.f32.mrb[0].mxu0
    %v2223 = vadd.f32 %v439, %v2222
    %v2224 = vpop.f32.mrb[0].mxu0
    %2225 = vmatprep.mubr.bf16.mxu0 %v1298
    %2226 = vmatmul.mubr.bf16.gmra.mrb[0].mxu0 %v1297
    %v2227 = vpop.f32.mrb[0].mxu0
    %v2228 = vadd.f32 %v439, %v2227
    %v2229 = vpop.f32.mrb[0].mxu0
    %v2230 = vpop.f32.mrb[0].mxu0
    %v2231 = vadd.f32 %v439, %v2230
    %v2232 = vpop.f32.mrb[0].mxu0
    %2233 = vmatprep.mubr.bf16.mxu0 %v1306
    %2234 = vmatmul.mubr.bf16.gmra.mrb[0].mxu0 %v1305
    %v2235 = vpop.f32.mrb[0].mxu0
    %v2236 = vadd.f32 %v439, %v2235
    %v2237 = vpop.f32.mrb[0].mxu0
    %v2238 = vpop.f32.mrb[0].mxu0
    %v2239 = vadd.f32 %v439, %v2238
    %v2240 = vpop.f32.mrb[0].mxu0
    %2241 = vmatprep.mubr.bf16.mxu0 %v1314
    %2242 = vmatmul.mubr.bf16.gmra.mrb[0].mxu0 %v1313
    %v2243 = vpop.f32.mrb[0].mxu0
    %v2244 = vadd.f32 %v439, %v2243
    %v2245 = vpop.f32.mrb[0].mxu0
    %v2246 = vpop.f32.mrb[0].mxu0
    %v2247 = vadd.f32 %v439, %v2246
    %v2248 = vpop.f32.mrb[0].mxu0
    %2249 = vmatprep.mubr.bf16.mxu0 %v1322
    %2250 = vmatmul.mubr.bf16.gmra.mrb[0].mxu0 %v1321
    %v2251 = vpop.f32.mrb[0].mxu0
    %v2252 = vadd.f32 %v439, %v2251
    %v2253 = vpop.f32.mrb[0].mxu0
    %v2254 = vpop.f32.mrb[0].mxu0
    %v2255 = vadd.f32 %v439, %v2254
    %v2256 = vpop.f32.mrb[0].mxu0
    %2257 = vmatprep.mubr.bf16.mxu0 %v1330
    %2258 = vmatmul.mubr.bf16.gmra.mrb[0].mxu0 %v1329
    %v2259 = vpop.f32.mrb[0].mxu0
    %v2260 = vadd.f32 %v439, %v2259
    %v2261 = vpop.f32.mrb[0].mxu0
    %v2262 = vpop.f32.mrb[0].mxu0
    %v2263 = vadd.f32 %v439, %v2262
    %v2264 = vpop.f32.mrb[0].mxu0
    %2265 = vmatprep.mubr.bf16.mxu0 %v1338
    %2266 = vmatmul.mubr.bf16.gmra.mrb[0].mxu0 %v1337
    %v2267 = vpop.f32.mrb[0].mxu0
    %v2268 = vadd.f32 %v439, %v2267
    %v2269 = vpop.f32.mrb[0].mxu0
    %v2270 = vpop.f32.mrb[0].mxu0
    %v2271 = vadd.f32 %v439, %v2270
    %v2272 = vpop.f32.mrb[0].mxu0
    %2273 = vmatprep.mubr.bf16.mxu0 %v1346
    %2274 = vmatmul.mubr.bf16.gmra.mrb[0].mxu0 %v1345
    %v2275 = vpop.f32.mrb[0].mxu0
    %v2276 = vadd.f32 %v439, %v2275
    %v2277 = vpop.f32.mrb[0].mxu0
    %v2278 = vpop.f32.mrb[0].mxu0
    %v2279 = vadd.f32 %v439, %v2278
    %v2280 = vpop.f32.mrb[0].mxu0
    %2281 = vmatprep.mubr.bf16.mxu0 %v1354
    %2282 = vmatmul.mubr.bf16.gmra.mrb[0].mxu0 %v1353
    %v2283 = vpop.f32.mrb[0].mxu0
    %v2284 = vadd.f32 %v439, %v2283
    %v2285 = vpop.f32.mrb[0].mxu0
    %v2286 = vpop.f32.mrb[0].mxu0
    %v2287 = vadd.f32 %v439, %v2286
    %v2288 = vpop.f32.mrb[0].mxu0
    %2289 = vmatprep.mubr.bf16.mxu0 %v1362
    %2290 = vmatmul.mubr.bf16.gmra.mrb[0].mxu0 %v1361
    %v2291 = vpop.f32.mrb[0].mxu0
    %v2292 = vadd.f32 %v439, %v2291
    %v2293 = vpop.f32.mrb[0].mxu0
    %v2294 = vpop.f32.mrb[0].mxu0
    %v2295 = vadd.f32 %v439, %v2294
    %v2296 = vpop.f32.mrb[0].mxu0
    %2297 = vmatprep.mubr.bf16.mxu0 %v1370
    %2298 = vmatmul.mubr.bf16.gmra.mrb[0].mxu0 %v1369
    %v2299 = vpop.f32.mrb[0].mxu0
    %v2300 = vadd.f32 %v439, %v2299
    %v2301 = vpop.f32.mrb[0].mxu0
    %v2302 = vpop.f32.mrb[0].mxu0
    %v2303 = vadd.f32 %v439, %v2302
    %v2304 = vpop.f32.mrb[0].mxu0
    %2305 = vmatprep.mubr.bf16.mxu0 %v1378
    %2306 = vmatmul.mubr.bf16.gmra.mrb[0].mxu0 %v1377
    %v2307 = vpop.f32.mrb[0].mxu0
    %v2308 = vadd.f32 %v439, %v2307
    %v2309 = vpop.f32.mrb[0].mxu0
    %v2310 = vpop.f32.mrb[0].mxu0
    %v2311 = vadd.f32 %v439, %v2310
    %v2312 = vpop.f32.mrb[0].mxu0
    %2313 = vmatprep.mubr.bf16.mxu0 %v1386
    %2314 = vmatmul.mubr.bf16.gmra.mrb[0].mxu0 %v1385
    %v2315 = vpop.f32.mrb[0].mxu0
    %v2316 = vadd.f32 %v439, %v2315
    %v2317 = vpop.f32.mrb[0].mxu0
    %v2318 = vpop.f32.mrb[0].mxu0
    %v2319 = vadd.f32 %v439, %v2318
    %v2320 = vpop.f32.mrb[0].mxu0
    %2321 = vmatprep.mubr.bf16.mxu0 %v1394
    %2322 = vmatmul.mubr.bf16.gmra.mrb[0].mxu0 %v1393
    %v2323 = vpop.f32.mrb[0].mxu0
    %v2324 = vadd.f32 %v439, %v2323
    %v2325 = vpop.f32.mrb[0].mxu0
    %v2326 = vpop.f32.mrb[0].mxu0
    %v2327 = vadd.f32 %v439, %v2326
    %v2328 = vpop.f32.mrb[0].mxu0
    %2329 = vmatprep.mubr.bf16.mxu0 %v1402
    %2330 = vmatmul.mubr.bf16.gmra.mrb[0].mxu0 %v1401
    %v2331 = vpop.f32.mrb[0].mxu0
    %v2332 = vadd.f32 %v439, %v2331
    %v2333 = vpop.f32.mrb[0].mxu0
    %v2334 = vpop.f32.mrb[0].mxu0
    %v2335 = vadd.f32 %v439, %v2334
    %v2336 = vpop.f32.mrb[0].mxu0
    %2337 = vmatprep.mubr.bf16.mxu0 %v1410
    %2338 = vmatmul.mubr.bf16.gmra.mrb[0].mxu0 %v1409
    %v2339 = vpop.f32.mrb[0].mxu0
    %v2340 = vadd.f32 %v439, %v2339
    %v2341 = vpop.f32.mrb[0].mxu0
    %v2342 = vpop.f32.mrb[0].mxu0
    %v2343 = vadd.f32 %v439, %v2342
    %v2344 = vpop.f32.mrb[0].mxu0
    %2345 = vmatprep.mubr.bf16.mxu0 %v1418
    %2346 = vmatmul.mubr.bf16.gmra.mrb[0].mxu0 %v1417
    %v2347 = vpop.f32.mrb[0].mxu0
    %v2348 = vadd.f32 %v439, %v2347
    %v2349 = vpop.f32.mrb[0].mxu0
    %v2350 = vpop.f32.mrb[0].mxu0
    %v2351 = vadd.f32 %v439, %v2350
    %v2352 = vpop.f32.mrb[0].mxu0
    %2353 = vmatprep.mubr.bf16.mxu0 %v1426
    %2354 = vmatmul.mubr.bf16.gmra.mrb[0].mxu0 %v1425
    %v2355 = vpop.f32.mrb[0].mxu0
    %v2356 = vadd.f32 %v439, %v2355
    %v2357 = vpop.f32.mrb[0].mxu0
    %v2358 = vpop.f32.mrb[0].mxu0
    %v2359 = vadd.f32 %v439, %v2358
    %v2360 = vpop.f32.mrb[0].mxu0
    %2361 = vmatprep.mubr.bf16.mxu0 %v1434
    %2362 = vmatmul.mubr.bf16.gmra.mrb[0].mxu0 %v1433
    %v2363 = vpop.f32.mrb[0].mxu0
    %v2364 = vadd.f32 %v439, %v2363
    %v2365 = vpop.f32.mrb[0].mxu0
    %v2366 = vpop.f32.mrb[0].mxu0
    %v2367 = vadd.f32 %v439, %v2366
    %v2368 = vpop.f32.mrb[0].mxu0
    %2369 = vmatprep.mubr.bf16.mxu0 %v1442
    %2370 = vmatmul.mubr.bf16.gmra.mrb[0].mxu0 %v1441
    %v2371 = vpop.f32.mrb[0].mxu0
    %v2372 = vadd.f32 %v439, %v2371
    %v2373 = vpop.f32.mrb[0].mxu0
    %v2374 = vpop.f32.mrb[0].mxu0
    %v2375 = vadd.f32 %v439, %v2374
    %v2376 = vpop.f32.mrb[0].mxu0
    %2377 = vmatprep.mubr.bf16.mxu0 %v1450
    %2378 = vmatmul.mubr.bf16.gmra.mrb[0].mxu0 %v1449
    %v2379 = vpop.f32.mrb[0].mxu0
    %v2380 = vadd.f32 %v439, %v2379
    %v2381 = vpop.f32.mrb[0].mxu0
    %v2382 = vpop.f32.mrb[0].mxu0
    %v2383 = vadd.f32 %v439, %v2382
    %v2384 = vpop.f32.mrb[0].mxu0
    %2385 = vmatprep.mubr.bf16.mxu0 %v1458
    %2386 = vmatmul.mubr.bf16.gmra.mrb[0].mxu0 %v1457
    %v2387 = vpop.f32.mrb[0].mxu0
    %v2388 = vadd.f32 %v439, %v2387
    %v2389 = vpop.f32.mrb[0].mxu0
    %v2390 = vpop.f32.mrb[0].mxu0
    %v2391 = vadd.f32 %v439, %v2390
    %v2392 = vpop.f32.mrb[0].mxu0
    %2393 = vdwg.mxu0
    %2394 = vmatprep.subr.bf16.mxu0 0
    %2395 = vmatpush1.bf16.msra.mxu0 %v1993
    %2396 = vmatprep.subr.bf16.mxu0 0
    %2397 = vmatpush1.bf16.msra.mxu0 %v1994
    %2398 = vmatprep.subr.bf16.mxu0 0
    %2399 = vmatpush1.bf16.msra.mxu0 %v1995
    %2400 = vmatprep.subr.bf16.mxu0 0
    %2401 = vmatpush1.bf16.msra.mxu0 %v1996
    %2402 = vmatprep.subr.bf16.mxu0 0
    %2403 = vmatpush1.bf16.msra.mxu0 %v1997
    %2404 = vmatprep.subr.bf16.mxu0 0
    %2405 = vmatpush1.bf16.msra.mxu0 %v1998
    %2406 = vmatprep.subr.bf16.mxu0 0
    %2407 = vmatpush1.bf16.msra.mxu0 %v1999
    %2408 = vmatprep.subr.bf16.mxu0 0
    %2409 = vmatpush1.bf16.msra.mxu0 %v2000
    %2410 = vmatprep.subr.bf16.mxu0 0
    %2411 = vmatpush1.bf16.msra.mxu0 %v2001
    %2412 = vmatprep.subr.bf16.mxu0 0
    %2413 = vmatpush1.bf16.msra.mxu0 %v2002
    %2414 = vmatprep.subr.bf16.mxu0 0
    %2415 = vmatpush1.bf16.msra.mxu0 %v2003
    %2416 = vmatprep.subr.bf16.mxu0 0
    %2417 = vmatpush1.bf16.msra.mxu0 %v2004
    %2418 = vmatprep.subr.bf16.mxu0 0
    %2419 = vmatpush1.bf16.msra.mxu0 %v2005
    %2420 = vmatprep.subr.bf16.mxu0 0
    %2421 = vmatpush1.bf16.msra.mxu0 %v2006
    %2422 = vmatprep.subr.bf16.mxu0 0
    %2423 = vmatpush1.bf16.msra.mxu0 %v2007
    %2424 = vmatprep.subr.bf16.mxu0 0
    %2425 = vmatpush1.bf16.msra.mxu0 %v2008
    %2426 = vmatprep.mubr.bf16.mxu0 %v1212
    %2427 = vmatmul.mubr.bf16.gmra.mrb[0].mxu0 %v1211
    %v2428 = vpop.f32.mrb[0].mxu0
    %v2429 = vadd.f32 %v2140, %v2428
    %v2430 = vpop.f32.mrb[0].mxu0
    %v2431 = vpop.f32.mrb[0].mxu0
    %v2432 = vadd.f32 %v2143, %v2431
    %v2433 = vpop.f32.mrb[0].mxu0
    %2434 = vmatprep.mubr.bf16.mxu0 %v1220
    %2435 = vmatmul.mubr.bf16.gmra.mrb[0].mxu0 %v1219
    %v2436 = vpop.f32.mrb[0].mxu0
    %v2437 = vadd.f32 %v2148, %v2436
    %v2438 = vpop.f32.mrb[0].mxu0
    %v2439 = vpop.f32.mrb[0].mxu0
    %v2440 = vadd.f32 %v2151, %v2439
    %v2441 = vpop.f32.mrb[0].mxu0
    %2442 = vmatprep.mubr.bf16.mxu0 %v1228
    %2443 = vmatmul.mubr.bf16.gmra.mrb[0].mxu0 %v1227
    %v2444 = vpop.f32.mrb[0].mxu0
    %v2445 = vadd.f32 %v2156, %v2444
    %v2446 = vpop.f32.mrb[0].mxu0
    %v2447 = vpop.f32.mrb[0].mxu0
    %v2448 = vadd.f32 %v2159, %v2447
    %v2449 = vpop.f32.mrb[0].mxu0
    %2450 = vmatprep.mubr.bf16.mxu0 %v1236
    %2451 = vmatmul.mubr.bf16.gmra.mrb[0].mxu0 %v1235
    %v2452 = vpop.f32.mrb[0].mxu0
    %v2453 = vadd.f32 %v2164, %v2452
    %v2454 = vpop.f32.mrb[0].mxu0
    %v2455 = vpop.f32.mrb[0].mxu0
    %v2456 = vadd.f32 %v2167, %v2455
    %v2457 = vpop.f32.mrb[0].mxu0
    %2458 = vmatprep.mubr.bf16.mxu0 %v1244
    %2459 = vmatmul.mubr.bf16.gmra.mrb[0].mxu0 %v1243
    %v2460 = vpop.f32.mrb[0].mxu0
    %v2461 = vadd.f32 %v2172, %v2460
    %v2462 = vpop.f32.mrb[0].mxu0
    %v2463 = vpop.f32.mrb[0].mxu0
    %v2464 = vadd.f32 %v2175, %v2463
    %v2465 = vpop.f32.mrb[0].mxu0
    %2466 = vmatprep.mubr.bf16.mxu0 %v1252
    %2467 = vmatmul.mubr.bf16.gmra.mrb[0].mxu0 %v1251
    %v2468 = vpop.f32.mrb[0].mxu0
    %v2469 = vadd.f32 %v2180, %v2468
    %v2470 = vpop.f32.mrb[0].mxu0
    %v2471 = vpop.f32.mrb[0].mxu0
    %v2472 = vadd.f32 %v2183, %v2471
    %v2473 = vpop.f32.mrb[0].mxu0
    %2474 = vmatprep.mubr.bf16.mxu0 %v1260
    %2475 = vmatmul.mubr.bf16.gmra.mrb[0].mxu0 %v1259
    %v2476 = vpop.f32.mrb[0].mxu0
    %v2477 = vadd.f32 %v2188, %v2476
    %v2478 = vpop.f32.mrb[0].mxu0
    %v2479 = vpop.f32.mrb[0].mxu0
    %v2480 = vadd.f32 %v2191, %v2479
    %v2481 = vpop.f32.mrb[0].mxu0
    %2482 = vmatprep.mubr.bf16.mxu0 %v1268
    %2483 = vmatmul.mubr.bf16.gmra.mrb[0].mxu0 %v1267
    %v2484 = vpop.f32.mrb[0].mxu0
    %v2485 = vadd.f32 %v2196, %v2484
    %v2486 = vpop.f32.mrb[0].mxu0
    %v2487 = vpop.f32.mrb[0].mxu0
    %v2488 = vadd.f32 %v2199, %v2487
    %v2489 = vpop.f32.mrb[0].mxu0
    %2490 = vmatprep.mubr.bf16.mxu0 %v1276
    %2491 = vmatmul.mubr.bf16.gmra.mrb[0].mxu0 %v1275
    %v2492 = vpop.f32.mrb[0].mxu0
    %v2493 = vadd.f32 %v2204, %v2492
    %v2494 = vpop.f32.mrb[0].mxu0
    %v2495 = vpop.f32.mrb[0].mxu0
    %v2496 = vadd.f32 %v2207, %v2495
    %v2497 = vpop.f32.mrb[0].mxu0
    %2498 = vmatprep.mubr.bf16.mxu0 %v1284
    %2499 = vmatmul.mubr.bf16.gmra.mrb[0].mxu0 %v1283
    %v2500 = vpop.f32.mrb[0].mxu0
    %v2501 = vadd.f32 %v2212, %v2500
    %v2502 = vpop.f32.mrb[0].mxu0
    %v2503 = vpop.f32.mrb[0].mxu0
    %v2504 = vadd.f32 %v2215, %v2503
    %v2505 = vpop.f32.mrb[0].mxu0
    %2506 = vmatprep.mubr.bf16.mxu0 %v1292
    %2507 = vmatmul.mubr.bf16.gmra.mrb[0].mxu0 %v1291
    %v2508 = vpop.f32.mrb[0].mxu0
    %v2509 = vadd.f32 %v2220, %v2508
    %v2510 = vpop.f32.mrb[0].mxu0
    %v2511 = vpop.f32.mrb[0].mxu0
    %v2512 = vadd.f32 %v2223, %v2511
    %v2513 = vpop.f32.mrb[0].mxu0
    %2514 = vmatprep.mubr.bf16.mxu0 %v1300
    %2515 = vmatmul.mubr.bf16.gmra.mrb[0].mxu0 %v1299
    %v2516 = vpop.f32.mrb[0].mxu0
    %v2517 = vadd.f32 %v2228, %v2516
    %v2518 = vpop.f32.mrb[0].mxu0
    %v2519 = vpop.f32.mrb[0].mxu0
    %v2520 = vadd.f32 %v2231, %v2519
    %v2521 = vpop.f32.mrb[0].mxu0
    %2522 = vmatprep.mubr.bf16.mxu0 %v1308
    %2523 = vmatmul.mubr.bf16.gmra.mrb[0].mxu0 %v1307
    %v2524 = vpop.f32.mrb[0].mxu0
    %v2525 = vadd.f32 %v2236, %v2524
    %v2526 = vpop.f32.mrb[0].mxu0
    %v2527 = vpop.f32.mrb[0].mxu0
    %v2528 = vadd.f32 %v2239, %v2527
    %v2529 = vpop.f32.mrb[0].mxu0
    %2530 = vmatprep.mubr.bf16.mxu0 %v1316
    %2531 = vmatmul.mubr.bf16.gmra.mrb[0].mxu0 %v1315
    %v2532 = vpop.f32.mrb[0].mxu0
    %v2533 = vadd.f32 %v2244, %v2532
    %v2534 = vpop.f32.mrb[0].mxu0
    %v2535 = vpop.f32.mrb[0].mxu0
    %v2536 = vadd.f32 %v2247, %v2535
    %v2537 = vpop.f32.mrb[0].mxu0
    %2538 = vmatprep.mubr.bf16.mxu0 %v1324
    %2539 = vmatmul.mubr.bf16.gmra.mrb[0].mxu0 %v1323
    %v2540 = vpop.f32.mrb[0].mxu0
    %v2541 = vadd.f32 %v2252, %v2540
    %v2542 = vpop.f32.mrb[0].mxu0
    %v2543 = vpop.f32.mrb[0].mxu0
    %v2544 = vadd.f32 %v2255, %v2543
    %v2545 = vpop.f32.mrb[0].mxu0
    %2546 = vmatprep.mubr.bf16.mxu0 %v1332
    %2547 = vmatmul.mubr.bf16.gmra.mrb[0].mxu0 %v1331
    %v2548 = vpop.f32.mrb[0].mxu0
    %v2549 = vadd.f32 %v2260, %v2548
    %v2550 = vpop.f32.mrb[0].mxu0
    %v2551 = vpop.f32.mrb[0].mxu0
    %v2552 = vadd.f32 %v2263, %v2551
    %v2553 = vpop.f32.mrb[0].mxu0
    %2554 = vmatprep.mubr.bf16.mxu0 %v1340
    %2555 = vmatmul.mubr.bf16.gmra.mrb[0].mxu0 %v1339
    %v2556 = vpop.f32.mrb[0].mxu0
    %v2557 = vadd.f32 %v2268, %v2556
    %v2558 = vpop.f32.mrb[0].mxu0
    %v2559 = vpop.f32.mrb[0].mxu0
    %v2560 = vadd.f32 %v2271, %v2559
    %v2561 = vpop.f32.mrb[0].mxu0
    %2562 = vmatprep.mubr.bf16.mxu0 %v1348
    %2563 = vmatmul.mubr.bf16.gmra.mrb[0].mxu0 %v1347
    %v2564 = vpop.f32.mrb[0].mxu0
    %v2565 = vadd.f32 %v2276, %v2564
    %v2566 = vpop.f32.mrb[0].mxu0
    %v2567 = vpop.f32.mrb[0].mxu0
    %v2568 = vadd.f32 %v2279, %v2567
    %v2569 = vpop.f32.mrb[0].mxu0
    %2570 = vmatprep.mubr.bf16.mxu0 %v1356
    %2571 = vmatmul.mubr.bf16.gmra.mrb[0].mxu0 %v1355
    %v2572 = vpop.f32.mrb[0].mxu0
    %v2573 = vadd.f32 %v2284, %v2572
    %v2574 = vpop.f32.mrb[0].mxu0
    %v2575 = vpop.f32.mrb[0].mxu0
    %v2576 = vadd.f32 %v2287, %v2575
    %v2577 = vpop.f32.mrb[0].mxu0
    %2578 = vmatprep.mubr.bf16.mxu0 %v1364
    %2579 = vmatmul.mubr.bf16.gmra.mrb[0].mxu0 %v1363
    %v2580 = vpop.f32.mrb[0].mxu0
    %v2581 = vadd.f32 %v2292, %v2580
    %v2582 = vpop.f32.mrb[0].mxu0
    %v2583 = vpop.f32.mrb[0].mxu0
    %v2584 = vadd.f32 %v2295, %v2583
    %v2585 = vpop.f32.mrb[0].mxu0
    %2586 = vmatprep.mubr.bf16.mxu0 %v1372
    %2587 = vmatmul.mubr.bf16.gmra.mrb[0].mxu0 %v1371
    %v2588 = vpop.f32.mrb[0].mxu0
    %v2589 = vadd.f32 %v2300, %v2588
    %v2590 = vpop.f32.mrb[0].mxu0
    %v2591 = vpop.f32.mrb[0].mxu0
    %v2592 = vadd.f32 %v2303, %v2591
    %v2593 = vpop.f32.mrb[0].mxu0
    %2594 = vmatprep.mubr.bf16.mxu0 %v1380
    %2595 = vmatmul.mubr.bf16.gmra.mrb[0].mxu0 %v1379
    %v2596 = vpop.f32.mrb[0].mxu0
    %v2597 = vadd.f32 %v2308, %v2596
    %v2598 = vpop.f32.mrb[0].mxu0
    %v2599 = vpop.f32.mrb[0].mxu0
    %v2600 = vadd.f32 %v2311, %v2599
    %v2601 = vpop.f32.mrb[0].mxu0
    %2602 = vmatprep.mubr.bf16.mxu0 %v1388
    %2603 = vmatmul.mubr.bf16.gmra.mrb[0].mxu0 %v1387
    %v2604 = vpop.f32.mrb[0].mxu0
    %v2605 = vadd.f32 %v2316, %v2604
    %v2606 = vpop.f32.mrb[0].mxu0
    %v2607 = vpop.f32.mrb[0].mxu0
    %v2608 = vadd.f32 %v2319, %v2607
    %v2609 = vpop.f32.mrb[0].mxu0
    %2610 = vmatprep.mubr.bf16.mxu0 %v1396
    %2611 = vmatmul.mubr.bf16.gmra.mrb[0].mxu0 %v1395
    %v2612 = vpop.f32.mrb[0].mxu0
    %v2613 = vadd.f32 %v2324, %v2612
    %v2614 = vpop.f32.mrb[0].mxu0
    %v2615 = vpop.f32.mrb[0].mxu0
    %v2616 = vadd.f32 %v2327, %v2615
    %v2617 = vpop.f32.mrb[0].mxu0
    %2618 = vmatprep.mubr.bf16.mxu0 %v1404
    %2619 = vmatmul.mubr.bf16.gmra.mrb[0].mxu0 %v1403
    %v2620 = vpop.f32.mrb[0].mxu0
    %v2621 = vadd.f32 %v2332, %v2620
    %v2622 = vpop.f32.mrb[0].mxu0
    %v2623 = vpop.f32.mrb[0].mxu0
    %v2624 = vadd.f32 %v2335, %v2623
    %v2625 = vpop.f32.mrb[0].mxu0
    %2626 = vmatprep.mubr.bf16.mxu0 %v1412
    %2627 = vmatmul.mubr.bf16.gmra.mrb[0].mxu0 %v1411
    %v2628 = vpop.f32.mrb[0].mxu0
    %v2629 = vadd.f32 %v2340, %v2628
    %v2630 = vpop.f32.mrb[0].mxu0
    %v2631 = vpop.f32.mrb[0].mxu0
    %v2632 = vadd.f32 %v2343, %v2631
    %v2633 = vpop.f32.mrb[0].mxu0
    %2634 = vmatprep.mubr.bf16.mxu0 %v1420
    %2635 = vmatmul.mubr.bf16.gmra.mrb[0].mxu0 %v1419
    %v2636 = vpop.f32.mrb[0].mxu0
    %v2637 = vadd.f32 %v2348, %v2636
    %v2638 = vpop.f32.mrb[0].mxu0
    %v2639 = vpop.f32.mrb[0].mxu0
    %v2640 = vadd.f32 %v2351, %v2639
    %v2641 = vpop.f32.mrb[0].mxu0
    %2642 = vmatprep.mubr.bf16.mxu0 %v1428
    %2643 = vmatmul.mubr.bf16.gmra.mrb[0].mxu0 %v1427
    %v2644 = vpop.f32.mrb[0].mxu0
    %v2645 = vadd.f32 %v2356, %v2644
    %v2646 = vpop.f32.mrb[0].mxu0
    %v2647 = vpop.f32.mrb[0].mxu0
    %v2648 = vadd.f32 %v2359, %v2647
    %v2649 = vpop.f32.mrb[0].mxu0
    %2650 = vmatprep.mubr.bf16.mxu0 %v1436
    %2651 = vmatmul.mubr.bf16.gmra.mrb[0].mxu0 %v1435
    %v2652 = vpop.f32.mrb[0].mxu0
    %v2653 = vadd.f32 %v2364, %v2652
    %v2654 = vpop.f32.mrb[0].mxu0
    %v2655 = vpop.f32.mrb[0].mxu0
    %v2656 = vadd.f32 %v2367, %v2655
    %v2657 = vpop.f32.mrb[0].mxu0
    %2658 = vmatprep.mubr.bf16.mxu0 %v1444
    %2659 = vmatmul.mubr.bf16.gmra.mrb[0].mxu0 %v1443
    %v2660 = vpop.f32.mrb[0].mxu0
    %v2661 = vadd.f32 %v2372, %v2660
    %v2662 = vpop.f32.mrb[0].mxu0
    %v2663 = vpop.f32.mrb[0].mxu0
    %v2664 = vadd.f32 %v2375, %v2663
    %v2665 = vpop.f32.mrb[0].mxu0
    %2666 = vmatprep.mubr.bf16.mxu0 %v1452
    %2667 = vmatmul.mubr.bf16.gmra.mrb[0].mxu0 %v1451
    %v2668 = vpop.f32.mrb[0].mxu0
    %v2669 = vadd.f32 %v2380, %v2668
    %v2670 = vpop.f32.mrb[0].mxu0
    %v2671 = vpop.f32.mrb[0].mxu0
    %v2672 = vadd.f32 %v2383, %v2671
    %v2673 = vpop.f32.mrb[0].mxu0
    %2674 = vmatprep.mubr.bf16.mxu0 %v1460
    %2675 = vmatmul.mubr.bf16.gmra.mrb[0].mxu0 %v1459
    %v2676 = vpop.f32.mrb[0].mxu0
    %v2677 = vadd.f32 %v2388, %v2676
    %v2678 = vpop.f32.mrb[0].mxu0
    %v2679 = vpop.f32.mrb[0].mxu0
    %v2680 = vadd.f32 %v2391, %v2679
    %v2681 = vpop.f32.mrb[0].mxu0
    %2682 = vdwg.mxu0
    %2683 = vmatprep.subr.bf16.mxu0 0
    %2684 = vmatpush1.bf16.msra.mxu0 %v2009
    %2685 = vmatprep.subr.bf16.mxu0 0
    %2686 = vmatpush1.bf16.msra.mxu0 %v2010
    %2687 = vmatprep.subr.bf16.mxu0 0
    %2688 = vmatpush1.bf16.msra.mxu0 %v2011
    %2689 = vmatprep.subr.bf16.mxu0 0
    %2690 = vmatpush1.bf16.msra.mxu0 %v2012
    %2691 = vmatprep.subr.bf16.mxu0 0
    %2692 = vmatpush1.bf16.msra.mxu0 %v2013
    %2693 = vmatprep.subr.bf16.mxu0 0
    %2694 = vmatpush1.bf16.msra.mxu0 %v2014
    %2695 = vmatprep.subr.bf16.mxu0 0
    %2696 = vmatpush1.bf16.msra.mxu0 %v2015
    %2697 = vmatprep.subr.bf16.mxu0 0
    %2698 = vmatpush1.bf16.msra.mxu0 %v2016
    %2699 = vmatprep.subr.bf16.mxu0 0
    %2700 = vmatpush1.bf16.msra.mxu0 %v2017
    %2701 = vmatprep.subr.bf16.mxu0 0
    %2702 = vmatpush1.bf16.msra.mxu0 %v2018
    %2703 = vmatprep.subr.bf16.mxu0 0
    %2704 = vmatpush1.bf16.msra.mxu0 %v2019
    %2705 = vmatprep.subr.bf16.mxu0 0
    %2706 = vmatpush1.bf16.msra.mxu0 %v2020
    %2707 = vmatprep.subr.bf16.mxu0 0
    %2708 = vmatpush1.bf16.msra.mxu0 %v2021
    %2709 = vmatprep.subr.bf16.mxu0 0
    %2710 = vmatpush1.bf16.msra.mxu0 %v2022
    %2711 = vmatprep.subr.bf16.mxu0 0
    %2712 = vmatpush1.bf16.msra.mxu0 %v2023
    %2713 = vmatprep.subr.bf16.mxu0 0
    %2714 = vmatpush1.bf16.msra.mxu0 %v2024
    %2715 = vmatprep.mubr.bf16.mxu0 %v1214
    %2716 = vmatmul.mubr.bf16.gmra.mrb[0].mxu0 %v1213
    %v2717 = vpop.f32.mrb[0].mxu0
    %v2718 = vadd.f32 %v2429, %v2717
    %v2719 = vpop.f32.mrb[0].mxu0
    %v2720 = vpop.f32.mrb[0].mxu0
    %v2721 = vadd.f32 %v2432, %v2720
    %v2722 = vpop.f32.mrb[0].mxu0
    %2723 = vmatprep.mubr.bf16.mxu0 %v1222
    %2724 = vmatmul.mubr.bf16.gmra.mrb[0].mxu0 %v1221
    %v2725 = vpop.f32.mrb[0].mxu0
    %v2726 = vadd.f32 %v2437, %v2725
    %v2727 = vpop.f32.mrb[0].mxu0
    %v2728 = vpop.f32.mrb[0].mxu0
    %v2729 = vadd.f32 %v2440, %v2728
    %v2730 = vpop.f32.mrb[0].mxu0
    %2731 = vmatprep.mubr.bf16.mxu0 %v1230
    %2732 = vmatmul.mubr.bf16.gmra.mrb[0].mxu0 %v1229
    %v2733 = vpop.f32.mrb[0].mxu0
    %v2734 = vadd.f32 %v2445, %v2733
    %v2735 = vpop.f32.mrb[0].mxu0
    %v2736 = vpop.f32.mrb[0].mxu0
    %v2737 = vadd.f32 %v2448, %v2736
    %v2738 = vpop.f32.mrb[0].mxu0
    %2739 = vmatprep.mubr.bf16.mxu0 %v1238
    %2740 = vmatmul.mubr.bf16.gmra.mrb[0].mxu0 %v1237
    %v2741 = vpop.f32.mrb[0].mxu0
    %v2742 = vadd.f32 %v2453, %v2741
    %v2743 = vpop.f32.mrb[0].mxu0
    %v2744 = vpop.f32.mrb[0].mxu0
    %v2745 = vadd.f32 %v2456, %v2744
    %v2746 = vpop.f32.mrb[0].mxu0
    %2747 = vmatprep.mubr.bf16.mxu0 %v1246
    %2748 = vmatmul.mubr.bf16.gmra.mrb[0].mxu0 %v1245
    %v2749 = vpop.f32.mrb[0].mxu0
    %v2750 = vadd.f32 %v2461, %v2749
    %v2751 = vpop.f32.mrb[0].mxu0
    %v2752 = vpop.f32.mrb[0].mxu0
    %v2753 = vadd.f32 %v2464, %v2752
    %v2754 = vpop.f32.mrb[0].mxu0
    %2755 = vmatprep.mubr.bf16.mxu0 %v1254
    %2756 = vmatmul.mubr.bf16.gmra.mrb[0].mxu0 %v1253
    %v2757 = vpop.f32.mrb[0].mxu0
    %v2758 = vadd.f32 %v2469, %v2757
    %v2759 = vpop.f32.mrb[0].mxu0
    %v2760 = vpop.f32.mrb[0].mxu0
    %v2761 = vadd.f32 %v2472, %v2760
    %v2762 = vpop.f32.mrb[0].mxu0
    %2763 = vmatprep.mubr.bf16.mxu0 %v1262
    %2764 = vmatmul.mubr.bf16.gmra.mrb[0].mxu0 %v1261
    %v2765 = vpop.f32.mrb[0].mxu0
    %v2766 = vadd.f32 %v2477, %v2765
    %v2767 = vpop.f32.mrb[0].mxu0
    %v2768 = vpop.f32.mrb[0].mxu0
    %v2769 = vadd.f32 %v2480, %v2768
    %v2770 = vpop.f32.mrb[0].mxu0
    %2771 = vmatprep.mubr.bf16.mxu0 %v1270
    %2772 = vmatmul.mubr.bf16.gmra.mrb[0].mxu0 %v1269
    %v2773 = vpop.f32.mrb[0].mxu0
    %v2774 = vadd.f32 %v2485, %v2773
    %v2775 = vpop.f32.mrb[0].mxu0
    %v2776 = vpop.f32.mrb[0].mxu0
    %v2777 = vadd.f32 %v2488, %v2776
    %v2778 = vpop.f32.mrb[0].mxu0
    %2779 = vmatprep.mubr.bf16.mxu0 %v1278
    %2780 = vmatmul.mubr.bf16.gmra.mrb[0].mxu0 %v1277
    %v2781 = vpop.f32.mrb[0].mxu0
    %v2782 = vadd.f32 %v2493, %v2781
    %v2783 = vpop.f32.mrb[0].mxu0
    %v2784 = vpop.f32.mrb[0].mxu0
    %v2785 = vadd.f32 %v2496, %v2784
    %v2786 = vpop.f32.mrb[0].mxu0
    %2787 = vmatprep.mubr.bf16.mxu0 %v1286
    %2788 = vmatmul.mubr.bf16.gmra.mrb[0].mxu0 %v1285
    %v2789 = vpop.f32.mrb[0].mxu0
    %v2790 = vadd.f32 %v2501, %v2789
    %v2791 = vpop.f32.mrb[0].mxu0
    %v2792 = vpop.f32.mrb[0].mxu0
    %v2793 = vadd.f32 %v2504, %v2792
    %v2794 = vpop.f32.mrb[0].mxu0
    %2795 = vmatprep.mubr.bf16.mxu0 %v1294
    %2796 = vmatmul.mubr.bf16.gmra.mrb[0].mxu0 %v1293
    %v2797 = vpop.f32.mrb[0].mxu0
    %v2798 = vadd.f32 %v2509, %v2797
    %v2799 = vpop.f32.mrb[0].mxu0
    %v2800 = vpop.f32.mrb[0].mxu0
    %v2801 = vadd.f32 %v2512, %v2800
    %v2802 = vpop.f32.mrb[0].mxu0
    %2803 = vmatprep.mubr.bf16.mxu0 %v1302
    %2804 = vmatmul.mubr.bf16.gmra.mrb[0].mxu0 %v1301
    %v2805 = vpop.f32.mrb[0].mxu0
    %v2806 = vadd.f32 %v2517, %v2805
    %v2807 = vpop.f32.mrb[0].mxu0
    %v2808 = vpop.f32.mrb[0].mxu0
    %v2809 = vadd.f32 %v2520, %v2808
    %v2810 = vpop.f32.mrb[0].mxu0
    %2811 = vmatprep.mubr.bf16.mxu0 %v1310
    %2812 = vmatmul.mubr.bf16.gmra.mrb[0].mxu0 %v1309
    %v2813 = vpop.f32.mrb[0].mxu0
    %v2814 = vadd.f32 %v2525, %v2813
    %v2815 = vpop.f32.mrb[0].mxu0
    %v2816 = vpop.f32.mrb[0].mxu0
    %v2817 = vadd.f32 %v2528, %v2816
    %v2818 = vpop.f32.mrb[0].mxu0
    %2819 = vmatprep.mubr.bf16.mxu0 %v1318
    %2820 = vmatmul.mubr.bf16.gmra.mrb[0].mxu0 %v1317
    %v2821 = vpop.f32.mrb[0].mxu0
    %v2822 = vadd.f32 %v2533, %v2821
    %v2823 = vpop.f32.mrb[0].mxu0
    %v2824 = vpop.f32.mrb[0].mxu0
    %v2825 = vadd.f32 %v2536, %v2824
    %v2826 = vpop.f32.mrb[0].mxu0
    %2827 = vmatprep.mubr.bf16.mxu0 %v1326
    %2828 = vmatmul.mubr.bf16.gmra.mrb[0].mxu0 %v1325
    %v2829 = vpop.f32.mrb[0].mxu0
    %v2830 = vadd.f32 %v2541, %v2829
    %v2831 = vpop.f32.mrb[0].mxu0
    %v2832 = vpop.f32.mrb[0].mxu0
    %v2833 = vadd.f32 %v2544, %v2832
    %v2834 = vpop.f32.mrb[0].mxu0
    %2835 = vmatprep.mubr.bf16.mxu0 %v1334
    %2836 = vmatmul.mubr.bf16.gmra.mrb[0].mxu0 %v1333
    %v2837 = vpop.f32.mrb[0].mxu0
    %v2838 = vadd.f32 %v2549, %v2837
    %v2839 = vpop.f32.mrb[0].mxu0
    %v2840 = vpop.f32.mrb[0].mxu0
    %v2841 = vadd.f32 %v2552, %v2840
    %v2842 = vpop.f32.mrb[0].mxu0
    %2843 = vmatprep.mubr.bf16.mxu0 %v1342
    %2844 = vmatmul.mubr.bf16.gmra.mrb[0].mxu0 %v1341
    %v2845 = vpop.f32.mrb[0].mxu0
    %v2846 = vadd.f32 %v2557, %v2845
    %v2847 = vpop.f32.mrb[0].mxu0
    %v2848 = vpop.f32.mrb[0].mxu0
    %v2849 = vadd.f32 %v2560, %v2848
    %v2850 = vpop.f32.mrb[0].mxu0
    %2851 = vmatprep.mubr.bf16.mxu0 %v1350
    %2852 = vmatmul.mubr.bf16.gmra.mrb[0].mxu0 %v1349
    %v2853 = vpop.f32.mrb[0].mxu0
    %v2854 = vadd.f32 %v2565, %v2853
    %v2855 = vpop.f32.mrb[0].mxu0
    %v2856 = vpop.f32.mrb[0].mxu0
    %v2857 = vadd.f32 %v2568, %v2856
    %v2858 = vpop.f32.mrb[0].mxu0
    %2859 = vmatprep.mubr.bf16.mxu0 %v1358
    %2860 = vmatmul.mubr.bf16.gmra.mrb[0].mxu0 %v1357
    %v2861 = vpop.f32.mrb[0].mxu0
    %v2862 = vadd.f32 %v2573, %v2861
    %v2863 = vpop.f32.mrb[0].mxu0
    %v2864 = vpop.f32.mrb[0].mxu0
    %v2865 = vadd.f32 %v2576, %v2864
    %v2866 = vpop.f32.mrb[0].mxu0
    %2867 = vmatprep.mubr.bf16.mxu0 %v1366
    %2868 = vmatmul.mubr.bf16.gmra.mrb[0].mxu0 %v1365
    %v2869 = vpop.f32.mrb[0].mxu0
    %v2870 = vadd.f32 %v2581, %v2869
    %v2871 = vpop.f32.mrb[0].mxu0
    %v2872 = vpop.f32.mrb[0].mxu0
    %v2873 = vadd.f32 %v2584, %v2872
    %v2874 = vpop.f32.mrb[0].mxu0
    %2875 = vmatprep.mubr.bf16.mxu0 %v1374
    %2876 = vmatmul.mubr.bf16.gmra.mrb[0].mxu0 %v1373
    %v2877 = vpop.f32.mrb[0].mxu0
    %v2878 = vadd.f32 %v2589, %v2877
    %v2879 = vpop.f32.mrb[0].mxu0
    %v2880 = vpop.f32.mrb[0].mxu0
    %v2881 = vadd.f32 %v2592, %v2880
    %v2882 = vpop.f32.mrb[0].mxu0
    %2883 = vmatprep.mubr.bf16.mxu0 %v1382
    %2884 = vmatmul.mubr.bf16.gmra.mrb[0].mxu0 %v1381
    %v2885 = vpop.f32.mrb[0].mxu0
    %v2886 = vadd.f32 %v2597, %v2885
    %v2887 = vpop.f32.mrb[0].mxu0
    %v2888 = vpop.f32.mrb[0].mxu0
    %v2889 = vadd.f32 %v2600, %v2888
    %v2890 = vpop.f32.mrb[0].mxu0
    %2891 = vmatprep.mubr.bf16.mxu0 %v1390
    %2892 = vmatmul.mubr.bf16.gmra.mrb[0].mxu0 %v1389
    %v2893 = vpop.f32.mrb[0].mxu0
    %v2894 = vadd.f32 %v2605, %v2893
    %v2895 = vpop.f32.mrb[0].mxu0
    %v2896 = vpop.f32.mrb[0].mxu0
    %v2897 = vadd.f32 %v2608, %v2896
    %v2898 = vpop.f32.mrb[0].mxu0
    %2899 = vmatprep.mubr.bf16.mxu0 %v1398
    %2900 = vmatmul.mubr.bf16.gmra.mrb[0].mxu0 %v1397
    %v2901 = vpop.f32.mrb[0].mxu0
    %v2902 = vadd.f32 %v2613, %v2901
    %v2903 = vpop.f32.mrb[0].mxu0
    %v2904 = vpop.f32.mrb[0].mxu0
    %v2905 = vadd.f32 %v2616, %v2904
    %v2906 = vpop.f32.mrb[0].mxu0
    %2907 = vmatprep.mubr.bf16.mxu0 %v1406
    %2908 = vmatmul.mubr.bf16.gmra.mrb[0].mxu0 %v1405
    %v2909 = vpop.f32.mrb[0].mxu0
    %v2910 = vadd.f32 %v2621, %v2909
    %v2911 = vpop.f32.mrb[0].mxu0
    %v2912 = vpop.f32.mrb[0].mxu0
    %v2913 = vadd.f32 %v2624, %v2912
    %v2914 = vpop.f32.mrb[0].mxu0
    %2915 = vmatprep.mubr.bf16.mxu0 %v1414
    %2916 = vmatmul.mubr.bf16.gmra.mrb[0].mxu0 %v1413
    %v2917 = vpop.f32.mrb[0].mxu0
    %v2918 = vadd.f32 %v2629, %v2917
    %v2919 = vpop.f32.mrb[0].mxu0
    %v2920 = vpop.f32.mrb[0].mxu0
    %v2921 = vadd.f32 %v2632, %v2920
    %v2922 = vpop.f32.mrb[0].mxu0
    %2923 = vmatprep.mubr.bf16.mxu0 %v1422
    %2924 = vmatmul.mubr.bf16.gmra.mrb[0].mxu0 %v1421
    %v2925 = vpop.f32.mrb[0].mxu0
    %v2926 = vadd.f32 %v2637, %v2925
    %v2927 = vpop.f32.mrb[0].mxu0
    %v2928 = vpop.f32.mrb[0].mxu0
    %v2929 = vadd.f32 %v2640, %v2928
    %v2930 = vpop.f32.mrb[0].mxu0
    %2931 = vmatprep.mubr.bf16.mxu0 %v1430
    %2932 = vmatmul.mubr.bf16.gmra.mrb[0].mxu0 %v1429
    %v2933 = vpop.f32.mrb[0].mxu0
    %v2934 = vadd.f32 %v2645, %v2933
    %v2935 = vpop.f32.mrb[0].mxu0
    %v2936 = vpop.f32.mrb[0].mxu0
    %v2937 = vadd.f32 %v2648, %v2936
    %v2938 = vpop.f32.mrb[0].mxu0
    %2939 = vmatprep.mubr.bf16.mxu0 %v1438
    %2940 = vmatmul.mubr.bf16.gmra.mrb[0].mxu0 %v1437
    %v2941 = vpop.f32.mrb[0].mxu0
    %v2942 = vadd.f32 %v2653, %v2941
    %v2943 = vpop.f32.mrb[0].mxu0
    %v2944 = vpop.f32.mrb[0].mxu0
    %v2945 = vadd.f32 %v2656, %v2944
    %v2946 = vpop.f32.mrb[0].mxu0
    %2947 = vmatprep.mubr.bf16.mxu0 %v1446
    %2948 = vmatmul.mubr.bf16.gmra.mrb[0].mxu0 %v1445
    %v2949 = vpop.f32.mrb[0].mxu0
    %v2950 = vadd.f32 %v2661, %v2949
    %v2951 = vpop.f32.mrb[0].mxu0
    %v2952 = vpop.f32.mrb[0].mxu0
    %v2953 = vadd.f32 %v2664, %v2952
    %v2954 = vpop.f32.mrb[0].mxu0
    %2955 = vmatprep.mubr.bf16.mxu0 %v1454
    %2956 = vmatmul.mubr.bf16.gmra.mrb[0].mxu0 %v1453
    %v2957 = vpop.f32.mrb[0].mxu0
    %v2958 = vadd.f32 %v2669, %v2957
    %v2959 = vpop.f32.mrb[0].mxu0
    %v2960 = vpop.f32.mrb[0].mxu0
    %v2961 = vadd.f32 %v2672, %v2960
    %v2962 = vpop.f32.mrb[0].mxu0
    %2963 = vmatprep.mubr.bf16.mxu0 %v1462
    %2964 = vmatmul.mubr.bf16.gmra.mrb[0].mxu0 %v1461
    %v2965 = vpop.f32.mrb[0].mxu0
    %v2966 = vadd.f32 %v2677, %v2965
    %v2967 = vpop.f32.mrb[0].mxu0
    %v2968 = vpop.f32.mrb[0].mxu0
    %v2969 = vadd.f32 %v2680, %v2968
    %v2970 = vpop.f32.mrb[0].mxu0
    %2971 = vdwg.mxu0
    %2972 = vmatprep.subr.bf16.mxu0 0
    %2973 = vmatpush1.bf16.msra.mxu0 %v2025
    %2974 = vmatprep.subr.bf16.mxu0 0
    %2975 = vmatpush1.bf16.msra.mxu0 %v2026
    %2976 = vmatprep.subr.bf16.mxu0 0
    %2977 = vmatpush1.bf16.msra.mxu0 %v2027
    %2978 = vmatprep.subr.bf16.mxu0 0
    %2979 = vmatpush1.bf16.msra.mxu0 %v2028
    %2980 = vmatprep.subr.bf16.mxu0 0
    %2981 = vmatpush1.bf16.msra.mxu0 %v2029
    %2982 = vmatprep.subr.bf16.mxu0 0
    %2983 = vmatpush1.bf16.msra.mxu0 %v2030
    %2984 = vmatprep.subr.bf16.mxu0 0
    %2985 = vmatpush1.bf16.msra.mxu0 %v2031
    %2986 = vmatprep.subr.bf16.mxu0 0
    %2987 = vmatpush1.bf16.msra.mxu0 %v2032
    %2988 = vmatprep.subr.bf16.mxu0 0
    %2989 = vmatpush1.bf16.msra.mxu0 %v2033
    %2990 = vmatprep.subr.bf16.mxu0 0
    %2991 = vmatpush1.bf16.msra.mxu0 %v2034
    %2992 = vmatprep.subr.bf16.mxu0 0
    %2993 = vmatpush1.bf16.msra.mxu0 %v2035
    %2994 = vmatprep.subr.bf16.mxu0 0
    %2995 = vmatpush1.bf16.msra.mxu0 %v2036
    %2996 = vmatprep.subr.bf16.mxu0 0
    %2997 = vmatpush1.bf16.msra.mxu0 %v2037
    %2998 = vmatprep.subr.bf16.mxu0 0
    %2999 = vmatpush1.bf16.msra.mxu0 %v2038
    %3000 = vmatprep.subr.bf16.mxu0 0
    %3001 = vmatpush1.bf16.msra.mxu0 %v2039
    %3002 = vmatprep.subr.bf16.mxu0 0
    %3003 = vmatpush1.bf16.msra.mxu0 %v2040
    %3004 = vmatprep.mubr.bf16.mxu0 %v1216
    %3005 = vmatmul.mubr.bf16.gmra.mrb[0].mxu0 %v1215
    %v3006 = vpop.f32.mrb[0].mxu0
    %v3007 = vadd.f32 %v2718, %v3006
    %v3008 = vpop.f32.mrb[0].mxu0
    %v3009 = vpop.f32.mrb[0].mxu0
    %v3010 = vadd.f32 %v2721, %v3009
    %v3011 = vpop.f32.mrb[0].mxu0
    %3012 = vmatprep.mubr.bf16.mxu0 %v1224
    %3013 = vmatmul.mubr.bf16.gmra.mrb[0].mxu0 %v1223
    %v3014 = vpop.f32.mrb[0].mxu0
    %v3015 = vadd.f32 %v2726, %v3014
    %v3016 = vpop.f32.mrb[0].mxu0
    %v3017 = vpop.f32.mrb[0].mxu0
    %v3018 = vadd.f32 %v2729, %v3017
    %v3019 = vpop.f32.mrb[0].mxu0
    %3020 = vmatprep.mubr.bf16.mxu0 %v1232
    %3021 = vmatmul.mubr.bf16.gmra.mrb[0].mxu0 %v1231
    %v3022 = vpop.f32.mrb[0].mxu0
    %v3023 = vadd.f32 %v2734, %v3022
    %v3024 = vpop.f32.mrb[0].mxu0
    %v3025 = vpop.f32.mrb[0].mxu0
    %v3026 = vadd.f32 %v2737, %v3025
    %v3027 = vpop.f32.mrb[0].mxu0
    %3028 = vmatprep.mubr.bf16.mxu0 %v1240
    %3029 = vmatmul.mubr.bf16.gmra.mrb[0].mxu0 %v1239
    %v3030 = vpop.f32.mrb[0].mxu0
    %v3031 = vadd.f32 %v2742, %v3030
    %v3032 = vpop.f32.mrb[0].mxu0
    %v3033 = vpop.f32.mrb[0].mxu0
    %v3034 = vadd.f32 %v2745, %v3033
    %v3035 = vpop.f32.mrb[0].mxu0
    %3036 = vmatprep.mubr.bf16.mxu0 %v1248
    %3037 = vmatmul.mubr.bf16.gmra.mrb[0].mxu0 %v1247
    %v3038 = vpop.f32.mrb[0].mxu0
    %v3039 = vadd.f32 %v2750, %v3038
    %v3040 = vpop.f32.mrb[0].mxu0
    %v3041 = vpop.f32.mrb[0].mxu0
    %v3042 = vadd.f32 %v2753, %v3041
    %v3043 = vpop.f32.mrb[0].mxu0
    %3044 = vmatprep.mubr.bf16.mxu0 %v1256
    %3045 = vmatmul.mubr.bf16.gmra.mrb[0].mxu0 %v1255
    %v3046 = vpop.f32.mrb[0].mxu0
    %v3047 = vadd.f32 %v2758, %v3046
    %v3048 = vpop.f32.mrb[0].mxu0
    %v3049 = vpop.f32.mrb[0].mxu0
    %v3050 = vadd.f32 %v2761, %v3049
    %v3051 = vpop.f32.mrb[0].mxu0
    %3052 = vmatprep.mubr.bf16.mxu0 %v1264
    %3053 = vmatmul.mubr.bf16.gmra.mrb[0].mxu0 %v1263
    %v3054 = vpop.f32.mrb[0].mxu0
    %v3055 = vadd.f32 %v2766, %v3054
    %v3056 = vpop.f32.mrb[0].mxu0
    %v3057 = vpop.f32.mrb[0].mxu0
    %v3058 = vadd.f32 %v2769, %v3057
    %v3059 = vpop.f32.mrb[0].mxu0
    %3060 = vmatprep.mubr.bf16.mxu0 %v1272
    %3061 = vmatmul.mubr.bf16.gmra.mrb[0].mxu0 %v1271
    %v3062 = vpop.f32.mrb[0].mxu0
    %v3063 = vadd.f32 %v2774, %v3062
    %v3064 = vpop.f32.mrb[0].mxu0
    %v3065 = vpop.f32.mrb[0].mxu0
    %v3066 = vadd.f32 %v2777, %v3065
    %v3067 = vpop.f32.mrb[0].mxu0
    %3068 = vmatprep.mubr.bf16.mxu0 %v1280
    %3069 = vmatmul.mubr.bf16.gmra.mrb[0].mxu0 %v1279
    %v3070 = vpop.f32.mrb[0].mxu0
    %v3071 = vadd.f32 %v2782, %v3070
    %v3072 = vpop.f32.mrb[0].mxu0
    %v3073 = vpop.f32.mrb[0].mxu0
    %v3074 = vadd.f32 %v2785, %v3073
    %v3075 = vpop.f32.mrb[0].mxu0
    %3076 = vmatprep.mubr.bf16.mxu0 %v1288
    %3077 = vmatmul.mubr.bf16.gmra.mrb[0].mxu0 %v1287
    %v3078 = vpop.f32.mrb[0].mxu0
    %v3079 = vadd.f32 %v2790, %v3078
    %v3080 = vpop.f32.mrb[0].mxu0
    %v3081 = vpop.f32.mrb[0].mxu0
    %v3082 = vadd.f32 %v2793, %v3081
    %v3083 = vpop.f32.mrb[0].mxu0
    %3084 = vmatprep.mubr.bf16.mxu0 %v1296
    %3085 = vmatmul.mubr.bf16.gmra.mrb[0].mxu0 %v1295
    %v3086 = vpop.f32.mrb[0].mxu0
    %v3087 = vadd.f32 %v2798, %v3086
    %v3088 = vpop.f32.mrb[0].mxu0
    %v3089 = vpop.f32.mrb[0].mxu0
    %v3090 = vadd.f32 %v2801, %v3089
    %v3091 = vpop.f32.mrb[0].mxu0
    %3092 = vmatprep.mubr.bf16.mxu0 %v1304
    %3093 = vmatmul.mubr.bf16.gmra.mrb[0].mxu0 %v1303
    %v3094 = vpop.f32.mrb[0].mxu0
    %v3095 = vadd.f32 %v2806, %v3094
    %v3096 = vpop.f32.mrb[0].mxu0
    %v3097 = vpop.f32.mrb[0].mxu0
    %v3098 = vadd.f32 %v2809, %v3097
    %v3099 = vpop.f32.mrb[0].mxu0
    %3100 = vmatprep.mubr.bf16.mxu0 %v1312
    %3101 = vmatmul.mubr.bf16.gmra.mrb[0].mxu0 %v1311
    %v3102 = vpop.f32.mrb[0].mxu0
    %v3103 = vadd.f32 %v2814, %v3102
    %v3104 = vpop.f32.mrb[0].mxu0
    %v3105 = vpop.f32.mrb[0].mxu0
    %v3106 = vadd.f32 %v2817, %v3105
    %v3107 = vpop.f32.mrb[0].mxu0
    %3108 = vmatprep.mubr.bf16.mxu0 %v1320
    %3109 = vmatmul.mubr.bf16.gmra.mrb[0].mxu0 %v1319
    %v3110 = vpop.f32.mrb[0].mxu0
    %v3111 = vadd.f32 %v2822, %v3110
    %v3112 = vpop.f32.mrb[0].mxu0
    %v3113 = vpop.f32.mrb[0].mxu0
    %v3114 = vadd.f32 %v2825, %v3113
    %v3115 = vpop.f32.mrb[0].mxu0
    %3116 = vmatprep.mubr.bf16.mxu0 %v1328
    %3117 = vmatmul.mubr.bf16.gmra.mrb[0].mxu0 %v1327
    %v3118 = vpop.f32.mrb[0].mxu0
    %v3119 = vadd.f32 %v2830, %v3118
    %v3120 = vpop.f32.mrb[0].mxu0
    %v3121 = vpop.f32.mrb[0].mxu0
    %v3122 = vadd.f32 %v2833, %v3121
    %v3123 = vpop.f32.mrb[0].mxu0
    %3124 = vmatprep.mubr.bf16.mxu0 %v1336
    %3125 = vmatmul.mubr.bf16.gmra.mrb[0].mxu0 %v1335
    %v3126 = vpop.f32.mrb[0].mxu0
    %v3127 = vadd.f32 %v2838, %v3126
    %v3128 = vpop.f32.mrb[0].mxu0
    %v3129 = vpop.f32.mrb[0].mxu0
    %v3130 = vadd.f32 %v2841, %v3129
    %v3131 = vpop.f32.mrb[0].mxu0
    %3132 = vmatprep.mubr.bf16.mxu0 %v1344
    %3133 = vmatmul.mubr.bf16.gmra.mrb[0].mxu0 %v1343
    %v3134 = vpop.f32.mrb[0].mxu0
    %v3135 = vadd.f32 %v2846, %v3134
    %v3136 = vpop.f32.mrb[0].mxu0
    %v3137 = vpop.f32.mrb[0].mxu0
    %v3138 = vadd.f32 %v2849, %v3137
    %v3139 = vpop.f32.mrb[0].mxu0
    %3140 = vmatprep.mubr.bf16.mxu0 %v1352
    %3141 = vmatmul.mubr.bf16.gmra.mrb[0].mxu0 %v1351
    %v3142 = vpop.f32.mrb[0].mxu0
    %v3143 = vadd.f32 %v2854, %v3142
    %v3144 = vpop.f32.mrb[0].mxu0
    %v3145 = vpop.f32.mrb[0].mxu0
    %v3146 = vadd.f32 %v2857, %v3145
    %v3147 = vpop.f32.mrb[0].mxu0
    %3148 = vmatprep.mubr.bf16.mxu0 %v1360
    %3149 = vmatmul.mubr.bf16.gmra.mrb[0].mxu0 %v1359
    %v3150 = vpop.f32.mrb[0].mxu0
    %v3151 = vadd.f32 %v2862, %v3150
    %v3152 = vpop.f32.mrb[0].mxu0
    %v3153 = vpop.f32.mrb[0].mxu0
    %v3154 = vadd.f32 %v2865, %v3153
    %v3155 = vpop.f32.mrb[0].mxu0
    %3156 = vmatprep.mubr.bf16.mxu0 %v1368
    %3157 = vmatmul.mubr.bf16.gmra.mrb[0].mxu0 %v1367
    %v3158 = vpop.f32.mrb[0].mxu0
    %v3159 = vadd.f32 %v2870, %v3158
    %v3160 = vpop.f32.mrb[0].mxu0
    %v3161 = vpop.f32.mrb[0].mxu0
    %v3162 = vadd.f32 %v2873, %v3161
    %v3163 = vpop.f32.mrb[0].mxu0
    %3164 = vmatprep.mubr.bf16.mxu0 %v1376
    %3165 = vmatmul.mubr.bf16.gmra.mrb[0].mxu0 %v1375
    %v3166 = vpop.f32.mrb[0].mxu0
    %v3167 = vadd.f32 %v2878, %v3166
    %v3168 = vpop.f32.mrb[0].mxu0
    %v3169 = vpop.f32.mrb[0].mxu0
    %v3170 = vadd.f32 %v2881, %v3169
    %v3171 = vpop.f32.mrb[0].mxu0
    %3172 = vmatprep.mubr.bf16.mxu0 %v1384
    %3173 = vmatmul.mubr.bf16.gmra.mrb[0].mxu0 %v1383
    %v3174 = vpop.f32.mrb[0].mxu0
    %v3175 = vadd.f32 %v2886, %v3174
    %v3176 = vpop.f32.mrb[0].mxu0
    %v3177 = vpop.f32.mrb[0].mxu0
    %v3178 = vadd.f32 %v2889, %v3177
    %v3179 = vpop.f32.mrb[0].mxu0
    %3180 = vmatprep.mubr.bf16.mxu0 %v1392
    %3181 = vmatmul.mubr.bf16.gmra.mrb[0].mxu0 %v1391
    %v3182 = vpop.f32.mrb[0].mxu0
    %v3183 = vadd.f32 %v2894, %v3182
    %v3184 = vpop.f32.mrb[0].mxu0
    %v3185 = vpop.f32.mrb[0].mxu0
    %v3186 = vadd.f32 %v2897, %v3185
    %v3187 = vpop.f32.mrb[0].mxu0
    %3188 = vmatprep.mubr.bf16.mxu0 %v1400
    %3189 = vmatmul.mubr.bf16.gmra.mrb[0].mxu0 %v1399
    %v3190 = vpop.f32.mrb[0].mxu0
    %v3191 = vadd.f32 %v2902, %v3190
    %v3192 = vpop.f32.mrb[0].mxu0
    %v3193 = vpop.f32.mrb[0].mxu0
    %v3194 = vadd.f32 %v2905, %v3193
    %v3195 = vpop.f32.mrb[0].mxu0
    %3196 = vmatprep.mubr.bf16.mxu0 %v1408
    %3197 = vmatmul.mubr.bf16.gmra.mrb[0].mxu0 %v1407
    %v3198 = vpop.f32.mrb[0].mxu0
    %v3199 = vadd.f32 %v2910, %v3198
    %v3200 = vpop.f32.mrb[0].mxu0
    %v3201 = vpop.f32.mrb[0].mxu0
    %v3202 = vadd.f32 %v2913, %v3201
    %v3203 = vpop.f32.mrb[0].mxu0
    %3204 = vmatprep.mubr.bf16.mxu0 %v1416
    %3205 = vmatmul.mubr.bf16.gmra.mrb[0].mxu0 %v1415
    %v3206 = vpop.f32.mrb[0].mxu0
    %v3207 = vadd.f32 %v2918, %v3206
    %v3208 = vpop.f32.mrb[0].mxu0
    %v3209 = vpop.f32.mrb[0].mxu0
    %v3210 = vadd.f32 %v2921, %v3209
    %v3211 = vpop.f32.mrb[0].mxu0
    %3212 = vmatprep.mubr.bf16.mxu0 %v1424
    %3213 = vmatmul.mubr.bf16.gmra.mrb[0].mxu0 %v1423
    %v3214 = vpop.f32.mrb[0].mxu0
    %v3215 = vadd.f32 %v2926, %v3214
    %v3216 = vpop.f32.mrb[0].mxu0
    %v3217 = vpop.f32.mrb[0].mxu0
    %v3218 = vadd.f32 %v2929, %v3217
    %v3219 = vpop.f32.mrb[0].mxu0
    %3220 = vmatprep.mubr.bf16.mxu0 %v1432
    %3221 = vmatmul.mubr.bf16.gmra.mrb[0].mxu0 %v1431
    %v3222 = vpop.f32.mrb[0].mxu0
    %v3223 = vadd.f32 %v2934, %v3222
    %v3224 = vpop.f32.mrb[0].mxu0
    %v3225 = vpop.f32.mrb[0].mxu0
    %v3226 = vadd.f32 %v2937, %v3225
    %v3227 = vpop.f32.mrb[0].mxu0
    %3228 = vmatprep.mubr.bf16.mxu0 %v1440
    %3229 = vmatmul.mubr.bf16.gmra.mrb[0].mxu0 %v1439
    %v3230 = vpop.f32.mrb[0].mxu0
    %v3231 = vadd.f32 %v2942, %v3230
    %v3232 = vpop.f32.mrb[0].mxu0
    %v3233 = vpop.f32.mrb[0].mxu0
    %v3234 = vadd.f32 %v2945, %v3233
    %v3235 = vpop.f32.mrb[0].mxu0
    %3236 = vmatprep.mubr.bf16.mxu0 %v1448
    %3237 = vmatmul.mubr.bf16.gmra.mrb[0].mxu0 %v1447
    %v3238 = vpop.f32.mrb[0].mxu0
    %v3239 = vadd.f32 %v2950, %v3238
    %v3240 = vpop.f32.mrb[0].mxu0
    %v3241 = vpop.f32.mrb[0].mxu0
    %v3242 = vadd.f32 %v2953, %v3241
    %v3243 = vpop.f32.mrb[0].mxu0
    %3244 = vmatprep.mubr.bf16.mxu0 %v1456
    %3245 = vmatmul.mubr.bf16.gmra.mrb[0].mxu0 %v1455
    %v3246 = vpop.f32.mrb[0].mxu0
    %v3247 = vadd.f32 %v2958, %v3246
    %v3248 = vpop.f32.mrb[0].mxu0
    %v3249 = vpop.f32.mrb[0].mxu0
    %v3250 = vadd.f32 %v2961, %v3249
    %v3251 = vpop.f32.mrb[0].mxu0
    %3252 = vmatprep.mubr.bf16.mxu0 %v1464
    %3253 = vmatmul.mubr.bf16.gmra.mrb[0].mxu0 %v1463
    %v3254 = vpop.f32.mrb[0].mxu0
    %v3255 = vadd.f32 %v2966, %v3254
    %v3256 = vpop.f32.mrb[0].mxu0
    %v3257 = vpop.f32.mrb[0].mxu0
    %v3258 = vadd.f32 %v2969, %v3257
    %v3259 = vpop.f32.mrb[0].mxu0
    %3260 = vdwg.mxu0
    %v3261 = vmax.f32 %v3007, 0.0
    %v3262 = vmax.f32 %v3010, 0.0
    %v3263 = vmax.f32 %v3015, 0.0
    %v3264 = vmax.f32 %v3018, 0.0
    %v3265 = vmax.f32 %v3023, 0.0
    %v3266 = vmax.f32 %v3026, 0.0
    %v3267 = vmax.f32 %v3031, 0.0
    %v3268 = vmax.f32 %v3034, 0.0
    %v3269 = vmax.f32 %v3039, 0.0
    %v3270 = vmax.f32 %v3042, 0.0
    %v3271 = vmax.f32 %v3047, 0.0
    %v3272 = vmax.f32 %v3050, 0.0
    %v3273 = vmax.f32 %v3055, 0.0
    %v3274 = vmax.f32 %v3058, 0.0
    %v3275 = vmax.f32 %v3063, 0.0
    %v3276 = vmax.f32 %v3066, 0.0
    %v3277 = vmax.f32 %v3071, 0.0
    %v3278 = vmax.f32 %v3074, 0.0
    %v3279 = vmax.f32 %v3079, 0.0
    %v3280 = vmax.f32 %v3082, 0.0
    %v3281 = vmax.f32 %v3087, 0.0
    %v3282 = vmax.f32 %v3090, 0.0
    %v3283 = vmax.f32 %v3095, 0.0
    %v3284 = vmax.f32 %v3098, 0.0
    %v3285 = vmax.f32 %v3103, 0.0
    %v3286 = vmax.f32 %v3106, 0.0
    %v3287 = vmax.f32 %v3111, 0.0
    %v3288 = vmax.f32 %v3114, 0.0
    %v3289 = vmax.f32 %v3119, 0.0
    %v3290 = vmax.f32 %v3122, 0.0
    %v3291 = vmax.f32 %v3127, 0.0
    %v3292 = vmax.f32 %v3130, 0.0
    %v3293 = vmax.f32 %v3135, 0.0
    %v3294 = vmax.f32 %v3138, 0.0
    %v3295 = vmax.f32 %v3143, 0.0
    %v3296 = vmax.f32 %v3146, 0.0
    %v3297 = vmax.f32 %v3151, 0.0
    %v3298 = vmax.f32 %v3154, 0.0
    %v3299 = vmax.f32 %v3159, 0.0
    %v3300 = vmax.f32 %v3162, 0.0
    %v3301 = vmax.f32 %v3167, 0.0
    %v3302 = vmax.f32 %v3170, 0.0
    %v3303 = vmax.f32 %v3175, 0.0
    %v3304 = vmax.f32 %v3178, 0.0
    %v3305 = vmax.f32 %v3183, 0.0
    %v3306 = vmax.f32 %v3186, 0.0
    %v3307 = vmax.f32 %v3191, 0.0
    %v3308 = vmax.f32 %v3194, 0.0
    %v3309 = vmax.f32 %v3199, 0.0
    %v3310 = vmax.f32 %v3202, 0.0
    %v3311 = vmax.f32 %v3207, 0.0
    %v3312 = vmax.f32 %v3210, 0.0
    %v3313 = vmax.f32 %v3215, 0.0
    %v3314 = vmax.f32 %v3218, 0.0
    %v3315 = vmax.f32 %v3223, 0.0
    %v3316 = vmax.f32 %v3226, 0.0
    %v3317 = vmax.f32 %v3231, 0.0
    %v3318 = vmax.f32 %v3234, 0.0
    %v3319 = vmax.f32 %v3239, 0.0
    %v3320 = vmax.f32 %v3242, 0.0
    %v3321 = vmax.f32 %v3247, 0.0
    %v3322 = vmax.f32 %v3250, 0.0
    %v3323 = vmax.f32 %v3255, 0.0
    %v3324 = vmax.f32 %v3258, 0.0
    %v3325 = vpack.c.bf16 %v3262, %v3261
    %v3326 = vpack.c.bf16 %v3264, %v3263
    %v3327 = vpack.c.bf16 %v3266, %v3265
    %v3328 = vpack.c.bf16 %v3268, %v3267
    %v3329 = vpack.c.bf16 %v3270, %v3269
    %v3330 = vpack.c.bf16 %v3272, %v3271
    %v3331 = vpack.c.bf16 %v3274, %v3273
    %v3332 = vpack.c.bf16 %v3276, %v3275
    %v3333 = vpack.c.bf16 %v3278, %v3277
    %v3334 = vpack.c.bf16 %v3280, %v3279
    %v3335 = vpack.c.bf16 %v3282, %v3281
    %v3336 = vpack.c.bf16 %v3284, %v3283
    %v3337 = vpack.c.bf16 %v3286, %v3285
    %v3338 = vpack.c.bf16 %v3288, %v3287
    %v3339 = vpack.c.bf16 %v3290, %v3289
    %v3340 = vpack.c.bf16 %v3292, %v3291
    %v3341 = vpack.c.bf16 %v3294, %v3293
    %v3342 = vpack.c.bf16 %v3296, %v3295
    %v3343 = vpack.c.bf16 %v3298, %v3297
    %v3344 = vpack.c.bf16 %v3300, %v3299
    %v3345 = vpack.c.bf16 %v3302, %v3301
    %v3346 = vpack.c.bf16 %v3304, %v3303
    %v3347 = vpack.c.bf16 %v3306, %v3305
    %v3348 = vpack.c.bf16 %v3308, %v3307
    %v3349 = vpack.c.bf16 %v3310, %v3309
    %v3350 = vpack.c.bf16 %v3312, %v3311
    %v3351 = vpack.c.bf16 %v3314, %v3313
    %v3352 = vpack.c.bf16 %v3316, %v3315
    %v3353 = vpack.c.bf16 %v3318, %v3317
    %v3354 = vpack.c.bf16 %v3320, %v3319
    %v3355 = vpack.c.bf16 %v3322, %v3321
    %v3356 = vpack.c.bf16 %v3324, %v3323
    %v3357 = vld [vmem:[%s3] sm:$0xf]
    %v3358 = vld [vmem:[%s3 + $0x4] sm:$0xf]
    %v3359 = vld [vmem:[%s3 + $0x8] sm:$0xf]
    %v3360 = vld [vmem:[%s3 + $0xc] sm:$0xf]
    %v3361 = vld [vmem:[%s3 + $0x10] sm:$0xf]
    %v3362 = vld [vmem:[%s3 + $0x14] sm:$0xf]
    %v3363 = vld [vmem:[%s3 + $0x18] sm:$0xf]
    %v3364 = vld [vmem:[%s3 + $0x1c] sm:$0xf]
    %v3365 = vld [vmem:[%s4] sm:$0x1]
    %v3367 = vlaneseq
    %v3368 = vshrl.u32 %v3367, 7
    %v3369 = vsub.s32 0, %v3368
    %v3370 = vrot.slane %v3365, %v3369
    %v3380 = vunpack.c.l.b16 %v3357
    %v3381 = vunpack.c.l.b16 %v3358
    %v3382 = vunpack.c.l.b16 %v3359
    %v3383 = vunpack.c.l.b16 %v3360
    %v3384 = vunpack.c.l.b16 %v3361
    %v3385 = vunpack.c.l.b16 %v3362
    %v3386 = vunpack.c.l.b16 %v3363
    %v3387 = vunpack.c.l.b16 %v3364
    %v3388 = vpack.c.b16 %v3381, %v3380
    %v3389 = vpack.c.b16 %v3383, %v3382
    %v3390 = vpack.c.b16 %v3385, %v3384
    %v3391 = vpack.c.b16 %v3387, %v3386
    %vm3396 = vcmask 523264
    %v3398 = vsel %vm3396, %v3325, 0
    %v3401 = vsel %vm3396, %v3326, 0
    %v3404 = vsel %vm3396, %v3327, 0
    %v3407 = vsel %vm3396, %v3328, 0
    %v3410 = vsel %vm3396, %v3329, 0
    %v3413 = vsel %vm3396, %v3330, 0
    %v3416 = vsel %vm3396, %v3331, 0
    %v3419 = vsel %vm3396, %v3332, 0
    %v3422 = vsel %vm3396, %v3333, 0
    %v3425 = vsel %vm3396, %v3334, 0
    %v3428 = vsel %vm3396, %v3335, 0
    %v3431 = vsel %vm3396, %v3336, 0
    %v3434 = vsel %vm3396, %v3337, 0
    %v3437 = vsel %vm3396, %v3338, 0
    %v3440 = vsel %vm3396, %v3339, 0
    %v3443 = vsel %vm3396, %v3340, 0
    %v3446 = vsel %vm3396, %v3341, 0
    %v3449 = vsel %vm3396, %v3342, 0
    %v3452 = vsel %vm3396, %v3343, 0
    %v3455 = vsel %vm3396, %v3344, 0
    %v3458 = vsel %vm3396, %v3345, 0
    %v3461 = vsel %vm3396, %v3346, 0
    %v3464 = vsel %vm3396, %v3347, 0
    %v3467 = vsel %vm3396, %v3348, 0
    %v3470 = vsel %vm3396, %v3349, 0
    %v3473 = vsel %vm3396, %v3350, 0
    %v3476 = vsel %vm3396, %v3351, 0
    %v3479 = vsel %vm3396, %v3352, 0
    %v3482 = vsel %vm3396, %v3353, 0
    %v3485 = vsel %vm3396, %v3354, 0
    %v3488 = vsel %vm3396, %v3355, 0
    %v3491 = vsel %vm3396, %v3356, 0
    %3493 = vmatprep.subr.bf16.mxu0 0
    %3494 = vmatpush1.bf16.msra.mxu0 %v3388
    %3495 = vmatprep.subr.bf16.mxu0 0
    %3496 = vmatpush1.bf16.msra.mxu0 %v3389
    %3497 = vmatprep.subr.bf16.mxu0 0
    %3498 = vmatpush1.bf16.msra.mxu0 %v3390
    %3499 = vmatprep.subr.bf16.mxu0 0
    %3500 = vmatpush1.bf16.msra.mxu0 %v3391
    %3501 = vmatprep.subr.bf16.mxu0 0
    %3502 = vmatpush1.bf16.msra.mxu0 0
    %3503 = vmatprep.subr.bf16.mxu0 0
    %3504 = vmatpush1.bf16.msra.mxu0 0
    %3505 = vmatprep.subr.bf16.mxu0 0
    %3506 = vmatpush1.bf16.msra.mxu0 0
    %3507 = vmatprep.subr.bf16.mxu0 0
    %3508 = vmatpush1.bf16.msra.mxu0 0
    %3509 = vmatprep.subr.bf16.mxu0 0
    %3510 = vmatpush1.bf16.msra.mxu0 0
    %3511 = vmatprep.subr.bf16.mxu0 0
    %3512 = vmatpush1.bf16.msra.mxu0 0
    %3513 = vmatprep.subr.bf16.mxu0 0
    %3514 = vmatpush1.bf16.msra.mxu0 0
    %3515 = vmatprep.subr.bf16.mxu0 0
    %3516 = vmatpush1.bf16.msra.mxu0 0
    %3517 = vmatprep.subr.bf16.mxu0 0
    %3518 = vmatpush1.bf16.msra.mxu0 0
    %3519 = vmatprep.subr.bf16.mxu0 0
    %3520 = vmatpush1.bf16.msra.mxu0 0
    %3521 = vmatprep.subr.bf16.mxu0 0
    %3522 = vmatpush1.bf16.msra.mxu0 0
    %3523 = vmatprep.subr.bf16.mxu0 0
    %3524 = vmatpush1.bf16.msra.mxu0 0
    %3525 = vmatprep.mubr.bf16.mxu0 0
    %3526 = vmatmul.mubr.bf16.gmra.mrb[0].mxu0 %v3398
    %v3527 = vpop.f32.mrb[0].mxu0
    %v3528 = vadd.f32 %v3370, %v3527
    %v3529 = vpop.f32.mrb[0].mxu0
    %v3530 = vpop.f32.mrb[0].mxu0
    %v3531 = vadd.f32 %v3370, %v3530
    %v3532 = vpop.f32.mrb[0].mxu0
    %3533 = vmatprep.mubr.bf16.mxu0 0
    %3534 = vmatmul.mubr.bf16.gmra.mrb[0].mxu0 %v3401
    %v3535 = vpop.f32.mrb[0].mxu0
    %v3536 = vadd.f32 %v3370, %v3535
    %v3537 = vpop.f32.mrb[0].mxu0
    %v3538 = vpop.f32.mrb[0].mxu0
    %v3539 = vadd.f32 %v3370, %v3538
    %v3540 = vpop.f32.mrb[0].mxu0
    %3541 = vmatprep.mubr.bf16.mxu0 0
    %3542 = vmatmul.mubr.bf16.gmra.mrb[0].mxu0 %v3404
    %v3543 = vpop.f32.mrb[0].mxu0
    %v3544 = vadd.f32 %v3370, %v3543
    %v3545 = vpop.f32.mrb[0].mxu0
    %v3546 = vpop.f32.mrb[0].mxu0
    %v3547 = vadd.f32 %v3370, %v3546
    %v3548 = vpop.f32.mrb[0].mxu0
    %3549 = vmatprep.mubr.bf16.mxu0 0
    %3550 = vmatmul.mubr.bf16.gmra.mrb[0].mxu0 %v3407
    %v3551 = vpop.f32.mrb[0].mxu0
    %v3552 = vadd.f32 %v3370, %v3551
    %v3553 = vpop.f32.mrb[0].mxu0
    %v3554 = vpop.f32.mrb[0].mxu0
    %v3555 = vadd.f32 %v3370, %v3554
    %v3556 = vpop.f32.mrb[0].mxu0
    %3557 = vmatprep.mubr.bf16.mxu0 0
    %3558 = vmatmul.mubr.bf16.gmra.mrb[0].mxu0 %v3410
    %v3559 = vpop.f32.mrb[0].mxu0
    %v3560 = vadd.f32 %v3370, %v3559
    %v3561 = vpop.f32.mrb[0].mxu0
    %v3562 = vpop.f32.mrb[0].mxu0
    %v3563 = vadd.f32 %v3370, %v3562
    %v3564 = vpop.f32.mrb[0].mxu0
    %3565 = vmatprep.mubr.bf16.mxu0 0
    %3566 = vmatmul.mubr.bf16.gmra.mrb[0].mxu0 %v3413
    %v3567 = vpop.f32.mrb[0].mxu0
    %v3568 = vadd.f32 %v3370, %v3567
    %v3569 = vpop.f32.mrb[0].mxu0
    %v3570 = vpop.f32.mrb[0].mxu0
    %v3571 = vadd.f32 %v3370, %v3570
    %v3572 = vpop.f32.mrb[0].mxu0
    %3573 = vmatprep.mubr.bf16.mxu0 0
    %3574 = vmatmul.mubr.bf16.gmra.mrb[0].mxu0 %v3416
    %v3575 = vpop.f32.mrb[0].mxu0
    %v3576 = vadd.f32 %v3370, %v3575
    %v3577 = vpop.f32.mrb[0].mxu0
    %v3578 = vpop.f32.mrb[0].mxu0
    %v3579 = vadd.f32 %v3370, %v3578
    %v3580 = vpop.f32.mrb[0].mxu0
    %3581 = vmatprep.mubr.bf16.mxu0 0
    %3582 = vmatmul.mubr.bf16.gmra.mrb[0].mxu0 %v3419
    %v3583 = vpop.f32.mrb[0].mxu0
    %v3584 = vadd.f32 %v3370, %v3583
    %v3585 = vpop.f32.mrb[0].mxu0
    %v3586 = vpop.f32.mrb[0].mxu0
    %v3587 = vadd.f32 %v3370, %v3586
    %v3588 = vpop.f32.mrb[0].mxu0
    %3589 = vmatprep.mubr.bf16.mxu0 0
    %3590 = vmatmul.mubr.bf16.gmra.mrb[0].mxu0 %v3422
    %v3591 = vpop.f32.mrb[0].mxu0
    %v3592 = vadd.f32 %v3370, %v3591
    %v3593 = vpop.f32.mrb[0].mxu0
    %v3594 = vpop.f32.mrb[0].mxu0
    %v3595 = vadd.f32 %v3370, %v3594
    %v3596 = vpop.f32.mrb[0].mxu0
    %3597 = vmatprep.mubr.bf16.mxu0 0
    %3598 = vmatmul.mubr.bf16.gmra.mrb[0].mxu0 %v3425
    %v3599 = vpop.f32.mrb[0].mxu0
    %v3600 = vadd.f32 %v3370, %v3599
    %v3601 = vpop.f32.mrb[0].mxu0
    %v3602 = vpop.f32.mrb[0].mxu0
    %v3603 = vadd.f32 %v3370, %v3602
    %v3604 = vpop.f32.mrb[0].mxu0
    %3605 = vmatprep.mubr.bf16.mxu0 0
    %3606 = vmatmul.mubr.bf16.gmra.mrb[0].mxu0 %v3428
    %v3607 = vpop.f32.mrb[0].mxu0
    %v3608 = vadd.f32 %v3370, %v3607
    %v3609 = vpop.f32.mrb[0].mxu0
    %v3610 = vpop.f32.mrb[0].mxu0
    %v3611 = vadd.f32 %v3370, %v3610
    %v3612 = vpop.f32.mrb[0].mxu0
    %3613 = vmatprep.mubr.bf16.mxu0 0
    %3614 = vmatmul.mubr.bf16.gmra.mrb[0].mxu0 %v3431
    %v3615 = vpop.f32.mrb[0].mxu0
    %v3616 = vadd.f32 %v3370, %v3615
    %v3617 = vpop.f32.mrb[0].mxu0
    %v3618 = vpop.f32.mrb[0].mxu0
    %v3619 = vadd.f32 %v3370, %v3618
    %v3620 = vpop.f32.mrb[0].mxu0
    %3621 = vmatprep.mubr.bf16.mxu0 0
    %3622 = vmatmul.mubr.bf16.gmra.mrb[0].mxu0 %v3434
    %v3623 = vpop.f32.mrb[0].mxu0
    %v3624 = vadd.f32 %v3370, %v3623
    %v3625 = vpop.f32.mrb[0].mxu0
    %v3626 = vpop.f32.mrb[0].mxu0
    %v3627 = vadd.f32 %v3370, %v3626
    %v3628 = vpop.f32.mrb[0].mxu0
    %3629 = vmatprep.mubr.bf16.mxu0 0
    %3630 = vmatmul.mubr.bf16.gmra.mrb[0].mxu0 %v3437
    %v3631 = vpop.f32.mrb[0].mxu0
    %v3632 = vadd.f32 %v3370, %v3631
    %v3633 = vpop.f32.mrb[0].mxu0
    %v3634 = vpop.f32.mrb[0].mxu0
    %v3635 = vadd.f32 %v3370, %v3634
    %v3636 = vpop.f32.mrb[0].mxu0
    %3637 = vmatprep.mubr.bf16.mxu0 0
    %3638 = vmatmul.mubr.bf16.gmra.mrb[0].mxu0 %v3440
    %v3639 = vpop.f32.mrb[0].mxu0
    %v3640 = vadd.f32 %v3370, %v3639
    %v3641 = vpop.f32.mrb[0].mxu0
    %v3642 = vpop.f32.mrb[0].mxu0
    %v3643 = vadd.f32 %v3370, %v3642
    %v3644 = vpop.f32.mrb[0].mxu0
    %3645 = vmatprep.mubr.bf16.mxu0 0
    %3646 = vmatmul.mubr.bf16.gmra.mrb[0].mxu0 %v3443
    %v3647 = vpop.f32.mrb[0].mxu0
    %v3648 = vadd.f32 %v3370, %v3647
    %v3649 = vpop.f32.mrb[0].mxu0
    %v3650 = vpop.f32.mrb[0].mxu0
    %v3651 = vadd.f32 %v3370, %v3650
    %v3652 = vpop.f32.mrb[0].mxu0
    %3653 = vmatprep.mubr.bf16.mxu0 0
    %3654 = vmatmul.mubr.bf16.gmra.mrb[0].mxu0 %v3446
    %v3655 = vpop.f32.mrb[0].mxu0
    %v3656 = vadd.f32 %v3370, %v3655
    %v3657 = vpop.f32.mrb[0].mxu0
    %v3658 = vpop.f32.mrb[0].mxu0
    %v3659 = vadd.f32 %v3370, %v3658
    %v3660 = vpop.f32.mrb[0].mxu0
    %3661 = vmatprep.mubr.bf16.mxu0 0
    %3662 = vmatmul.mubr.bf16.gmra.mrb[0].mxu0 %v3449
    %v3663 = vpop.f32.mrb[0].mxu0
    %v3664 = vadd.f32 %v3370, %v3663
    %v3665 = vpop.f32.mrb[0].mxu0
    %v3666 = vpop.f32.mrb[0].mxu0
    %v3667 = vadd.f32 %v3370, %v3666
    %v3668 = vpop.f32.mrb[0].mxu0
    %3669 = vmatprep.mubr.bf16.mxu0 0
    %3670 = vmatmul.mubr.bf16.gmra.mrb[0].mxu0 %v3452
    %v3671 = vpop.f32.mrb[0].mxu0
    %v3672 = vadd.f32 %v3370, %v3671
    %v3673 = vpop.f32.mrb[0].mxu0
    %v3674 = vpop.f32.mrb[0].mxu0
    %v3675 = vadd.f32 %v3370, %v3674
    %v3676 = vpop.f32.mrb[0].mxu0
    %3677 = vmatprep.mubr.bf16.mxu0 0
    %3678 = vmatmul.mubr.bf16.gmra.mrb[0].mxu0 %v3455
    %v3679 = vpop.f32.mrb[0].mxu0
    %v3680 = vadd.f32 %v3370, %v3679
    %v3681 = vpop.f32.mrb[0].mxu0
    %v3682 = vpop.f32.mrb[0].mxu0
    %v3683 = vadd.f32 %v3370, %v3682
    %v3684 = vpop.f32.mrb[0].mxu0
    %3685 = vmatprep.mubr.bf16.mxu0 0
    %3686 = vmatmul.mubr.bf16.gmra.mrb[0].mxu0 %v3458
    %v3687 = vpop.f32.mrb[0].mxu0
    %v3688 = vadd.f32 %v3370, %v3687
    %v3689 = vpop.f32.mrb[0].mxu0
    %v3690 = vpop.f32.mrb[0].mxu0
    %v3691 = vadd.f32 %v3370, %v3690
    %v3692 = vpop.f32.mrb[0].mxu0
    %3693 = vmatprep.mubr.bf16.mxu0 0
    %3694 = vmatmul.mubr.bf16.gmra.mrb[0].mxu0 %v3461
    %v3695 = vpop.f32.mrb[0].mxu0
    %v3696 = vadd.f32 %v3370, %v3695
    %v3697 = vpop.f32.mrb[0].mxu0
    %v3698 = vpop.f32.mrb[0].mxu0
    %v3699 = vadd.f32 %v3370, %v3698
    %v3700 = vpop.f32.mrb[0].mxu0
    %3701 = vmatprep.mubr.bf16.mxu0 0
    %3702 = vmatmul.mubr.bf16.gmra.mrb[0].mxu0 %v3464
    %v3703 = vpop.f32.mrb[0].mxu0
    %v3704 = vadd.f32 %v3370, %v3703
    %v3705 = vpop.f32.mrb[0].mxu0
    %v3706 = vpop.f32.mrb[0].mxu0
    %v3707 = vadd.f32 %v3370, %v3706
    %v3708 = vpop.f32.mrb[0].mxu0
    %3709 = vmatprep.mubr.bf16.mxu0 0
    %3710 = vmatmul.mubr.bf16.gmra.mrb[0].mxu0 %v3467
    %v3711 = vpop.f32.mrb[0].mxu0
    %v3712 = vadd.f32 %v3370, %v3711
    %v3713 = vpop.f32.mrb[0].mxu0
    %v3714 = vpop.f32.mrb[0].mxu0
    %v3715 = vadd.f32 %v3370, %v3714
    %v3716 = vpop.f32.mrb[0].mxu0
    %3717 = vmatprep.mubr.bf16.mxu0 0
    %3718 = vmatmul.mubr.bf16.gmra.mrb[0].mxu0 %v3470
    %v3719 = vpop.f32.mrb[0].mxu0
    %v3720 = vadd.f32 %v3370, %v3719
    %v3721 = vpop.f32.mrb[0].mxu0
    %v3722 = vpop.f32.mrb[0].mxu0
    %v3723 = vadd.f32 %v3370, %v3722
    %v3724 = vpop.f32.mrb[0].mxu0
    %3725 = vmatprep.mubr.bf16.mxu0 0
    %3726 = vmatmul.mubr.bf16.gmra.mrb[0].mxu0 %v3473
    %v3727 = vpop.f32.mrb[0].mxu0
    %v3728 = vadd.f32 %v3370, %v3727
    %v3729 = vpop.f32.mrb[0].mxu0
    %v3730 = vpop.f32.mrb[0].mxu0
    %v3731 = vadd.f32 %v3370, %v3730
    %v3732 = vpop.f32.mrb[0].mxu0
    %3733 = vmatprep.mubr.bf16.mxu0 0
    %3734 = vmatmul.mubr.bf16.gmra.mrb[0].mxu0 %v3476
    %v3735 = vpop.f32.mrb[0].mxu0
    %v3736 = vadd.f32 %v3370, %v3735
    %v3737 = vpop.f32.mrb[0].mxu0
    %v3738 = vpop.f32.mrb[0].mxu0
    %v3739 = vadd.f32 %v3370, %v3738
    %v3740 = vpop.f32.mrb[0].mxu0
    %3741 = vmatprep.mubr.bf16.mxu0 0
    %3742 = vmatmul.mubr.bf16.gmra.mrb[0].mxu0 %v3479
    %v3743 = vpop.f32.mrb[0].mxu0
    %v3744 = vadd.f32 %v3370, %v3743
    %v3745 = vpop.f32.mrb[0].mxu0
    %v3746 = vpop.f32.mrb[0].mxu0
    %v3747 = vadd.f32 %v3370, %v3746
    %v3748 = vpop.f32.mrb[0].mxu0
    %3749 = vmatprep.mubr.bf16.mxu0 0
    %3750 = vmatmul.mubr.bf16.gmra.mrb[0].mxu0 %v3482
    %v3751 = vpop.f32.mrb[0].mxu0
    %v3752 = vadd.f32 %v3370, %v3751
    %v3753 = vpop.f32.mrb[0].mxu0
    %v3754 = vpop.f32.mrb[0].mxu0
    %v3755 = vadd.f32 %v3370, %v3754
    %v3756 = vpop.f32.mrb[0].mxu0
    %3757 = vmatprep.mubr.bf16.mxu0 0
    %3758 = vmatmul.mubr.bf16.gmra.mrb[0].mxu0 %v3485
    %v3759 = vpop.f32.mrb[0].mxu0
    %v3760 = vadd.f32 %v3370, %v3759
    %v3761 = vpop.f32.mrb[0].mxu0
    %v3762 = vpop.f32.mrb[0].mxu0
    %v3763 = vadd.f32 %v3370, %v3762
    %v3764 = vpop.f32.mrb[0].mxu0
    %3765 = vmatprep.mubr.bf16.mxu0 0
    %3766 = vmatmul.mubr.bf16.gmra.mrb[0].mxu0 %v3488
    %v3767 = vpop.f32.mrb[0].mxu0
    %v3768 = vadd.f32 %v3370, %v3767
    %v3769 = vpop.f32.mrb[0].mxu0
    %v3770 = vpop.f32.mrb[0].mxu0
    %v3771 = vadd.f32 %v3370, %v3770
    %v3772 = vpop.f32.mrb[0].mxu0
    %3773 = vmatprep.mubr.bf16.mxu0 0
    %3774 = vmatmul.mubr.bf16.gmra.mrb[0].mxu0 %v3491
    %v3775 = vpop.f32.mrb[0].mxu0
    %v3776 = vadd.f32 %v3370, %v3775
    %v3777 = vpop.f32.mrb[0].mxu0
    %v3778 = vpop.f32.mrb[0].mxu0
    %v3779 = vadd.f32 %v3370, %v3778
    %v3780 = vpop.f32.mrb[0].mxu0
    %3781 = vdwg.mxu0
    %v3782 = vmax.f32 %v3528, 0.0
    %v3783 = vmax.f32 %v3531, 0.0
    %v3784 = vmax.f32 %v3536, 0.0
    %v3785 = vmax.f32 %v3539, 0.0
    %v3786 = vmax.f32 %v3544, 0.0
    %v3787 = vmax.f32 %v3547, 0.0
    %v3788 = vmax.f32 %v3552, 0.0
    %v3789 = vmax.f32 %v3555, 0.0
    %v3790 = vmax.f32 %v3560, 0.0
    %v3791 = vmax.f32 %v3563, 0.0
    %v3792 = vmax.f32 %v3568, 0.0
    %v3793 = vmax.f32 %v3571, 0.0
    %v3794 = vmax.f32 %v3576, 0.0
    %v3795 = vmax.f32 %v3579, 0.0
    %v3796 = vmax.f32 %v3584, 0.0
    %v3797 = vmax.f32 %v3587, 0.0
    %v3798 = vmax.f32 %v3592, 0.0
    %v3799 = vmax.f32 %v3595, 0.0
    %v3800 = vmax.f32 %v3600, 0.0
    %v3801 = vmax.f32 %v3603, 0.0
    %v3802 = vmax.f32 %v3608, 0.0
    %v3803 = vmax.f32 %v3611, 0.0
    %v3804 = vmax.f32 %v3616, 0.0
    %v3805 = vmax.f32 %v3619, 0.0
    %v3806 = vmax.f32 %v3624, 0.0
    %v3807 = vmax.f32 %v3627, 0.0
    %v3808 = vmax.f32 %v3632, 0.0
    %v3809 = vmax.f32 %v3635, 0.0
    %v3810 = vmax.f32 %v3640, 0.0
    %v3811 = vmax.f32 %v3643, 0.0
    %v3812 = vmax.f32 %v3648, 0.0
    %v3813 = vmax.f32 %v3651, 0.0
    %v3814 = vmax.f32 %v3656, 0.0
    %v3815 = vmax.f32 %v3659, 0.0
    %v3816 = vmax.f32 %v3664, 0.0
    %v3817 = vmax.f32 %v3667, 0.0
    %v3818 = vmax.f32 %v3672, 0.0
    %v3819 = vmax.f32 %v3675, 0.0
    %v3820 = vmax.f32 %v3680, 0.0
    %v3821 = vmax.f32 %v3683, 0.0
    %v3822 = vmax.f32 %v3688, 0.0
    %v3823 = vmax.f32 %v3691, 0.0
    %v3824 = vmax.f32 %v3696, 0.0
    %v3825 = vmax.f32 %v3699, 0.0
    %v3826 = vmax.f32 %v3704, 0.0
    %v3827 = vmax.f32 %v3707, 0.0
    %v3828 = vmax.f32 %v3712, 0.0
    %v3829 = vmax.f32 %v3715, 0.0
    %v3830 = vmax.f32 %v3720, 0.0
    %v3831 = vmax.f32 %v3723, 0.0
    %v3832 = vmax.f32 %v3728, 0.0
    %v3833 = vmax.f32 %v3731, 0.0
    %v3834 = vmax.f32 %v3736, 0.0
    %v3835 = vmax.f32 %v3739, 0.0
    %v3836 = vmax.f32 %v3744, 0.0
    %v3837 = vmax.f32 %v3747, 0.0
    %v3838 = vmax.f32 %v3752, 0.0
    %v3839 = vmax.f32 %v3755, 0.0
    %v3840 = vmax.f32 %v3760, 0.0
    %v3841 = vmax.f32 %v3763, 0.0
    %v3842 = vmax.f32 %v3768, 0.0
    %v3843 = vmax.f32 %v3771, 0.0
    %v3844 = vmax.f32 %v3776, 0.0
    %v3845 = vmax.f32 %v3779, 0.0
    %v3846 = vpack.c.bf16 %v3783, %v3782
    %v3847 = vpack.c.bf16 %v3785, %v3784
    %v3848 = vpack.c.bf16 %v3787, %v3786
    %v3849 = vpack.c.bf16 %v3789, %v3788
    %v3850 = vpack.c.bf16 %v3791, %v3790
    %v3851 = vpack.c.bf16 %v3793, %v3792
    %v3852 = vpack.c.bf16 %v3795, %v3794
    %v3853 = vpack.c.bf16 %v3797, %v3796
    %v3854 = vpack.c.bf16 %v3799, %v3798
    %v3855 = vpack.c.bf16 %v3801, %v3800
    %v3856 = vpack.c.bf16 %v3803, %v3802
    %v3857 = vpack.c.bf16 %v3805, %v3804
    %v3858 = vpack.c.bf16 %v3807, %v3806
    %v3859 = vpack.c.bf16 %v3809, %v3808
    %v3860 = vpack.c.bf16 %v3811, %v3810
    %v3861 = vpack.c.bf16 %v3813, %v3812
    %v3862 = vpack.c.bf16 %v3815, %v3814
    %v3863 = vpack.c.bf16 %v3817, %v3816
    %v3864 = vpack.c.bf16 %v3819, %v3818
    %v3865 = vpack.c.bf16 %v3821, %v3820
    %v3866 = vpack.c.bf16 %v3823, %v3822
    %v3867 = vpack.c.bf16 %v3825, %v3824
    %v3868 = vpack.c.bf16 %v3827, %v3826
    %v3869 = vpack.c.bf16 %v3829, %v3828
    %v3870 = vpack.c.bf16 %v3831, %v3830
    %v3871 = vpack.c.bf16 %v3833, %v3832
    %v3872 = vpack.c.bf16 %v3835, %v3834
    %v3873 = vpack.c.bf16 %v3837, %v3836
    %v3874 = vpack.c.bf16 %v3839, %v3838
    %v3875 = vpack.c.bf16 %v3841, %v3840
    %v3876 = vpack.c.bf16 %v3843, %v3842
    %v3877 = vpack.c.bf16 %v3845, %v3844
    %v3878 = vld [vmem:[%s5] sm:$0xf]
    %v3879 = vld [vmem:[%s5 + $0x4] sm:$0xf]
    %v3880 = vld [vmem:[%s5 + $0x8] sm:$0xf]
    %v3881 = vld [vmem:[%s5 + $0xc] sm:$0xf]
    %v3882 = vld [vmem:[%s6] sm:$0x1]
    %v3884 = vlaneseq
    %v3885 = vshrl.u32 %v3884, 7
    %v3886 = vsub.s32 0, %v3885
    %v3887 = vrot.slane %v3882, %v3886
    %v3893 = vunpack.c.l.b16 %v3878
    %v3894 = vunpack.c.l.b16 %v3879
    %v3895 = vunpack.c.l.b16 %v3880
    %v3896 = vunpack.c.l.b16 %v3881
    %v3897 = vpack.c.b16 %v3894, %v3893
    %v3898 = vpack.c.b16 %v3896, %v3895
    %vm3901 = vcmask 261120
    %v3903 = vsel %vm3901, %v3846, 0
    %v3906 = vsel %vm3901, %v3847, 0
    %v3909 = vsel %vm3901, %v3848, 0
    %v3912 = vsel %vm3901, %v3849, 0
    %v3915 = vsel %vm3901, %v3850, 0
    %v3918 = vsel %vm3901, %v3851, 0
    %v3921 = vsel %vm3901, %v3852, 0
    %v3924 = vsel %vm3901, %v3853, 0
    %v3927 = vsel %vm3901, %v3854, 0
    %v3930 = vsel %vm3901, %v3855, 0
    %v3933 = vsel %vm3901, %v3856, 0
    %v3936 = vsel %vm3901, %v3857, 0
    %v3939 = vsel %vm3901, %v3858, 0
    %v3942 = vsel %vm3901, %v3859, 0
    %v3945 = vsel %vm3901, %v3860, 0
    %v3948 = vsel %vm3901, %v3861, 0
    %v3951 = vsel %vm3901, %v3862, 0
    %v3954 = vsel %vm3901, %v3863, 0
    %v3957 = vsel %vm3901, %v3864, 0
    %v3960 = vsel %vm3901, %v3865, 0
    %v3963 = vsel %vm3901, %v3866, 0
    %v3966 = vsel %vm3901, %v3867, 0
    %v3969 = vsel %vm3901, %v3868, 0
    %v3972 = vsel %vm3901, %v3869, 0
    %v3975 = vsel %vm3901, %v3870, 0
    %v3978 = vsel %vm3901, %v3871, 0
    %v3981 = vsel %vm3901, %v3872, 0
    %v3984 = vsel %vm3901, %v3873, 0
    %v3987 = vsel %vm3901, %v3874, 0
    %v3990 = vsel %vm3901, %v3875, 0
    %v3993 = vsel %vm3901, %v3876, 0
    %v3996 = vsel %vm3901, %v3877, 0
    %3998 = vmatprep.subr.bf16.mxu0 0
    %3999 = vmatpush1.bf16.msra.mxu0 %v3897
    %4000 = vmatprep.subr.bf16.mxu0 0
    %4001 = vmatpush1.bf16.msra.mxu0 %v3898
    %4002 = vmatprep.subr.bf16.mxu0 0
    %4003 = vmatpush1.bf16.msra.mxu0 0
    %4004 = vmatprep.subr.bf16.mxu0 0
    %4005 = vmatpush1.bf16.msra.mxu0 0
    %4006 = vmatprep.subr.bf16.mxu0 0
    %4007 = vmatpush1.bf16.msra.mxu0 0
    %4008 = vmatprep.subr.bf16.mxu0 0
    %4009 = vmatpush1.bf16.msra.mxu0 0
    %4010 = vmatprep.subr.bf16.mxu0 0
    %4011 = vmatpush1.bf16.msra.mxu0 0
    %4012 = vmatprep.subr.bf16.mxu0 0
    %4013 = vmatpush1.bf16.msra.mxu0 0
    %4014 = vmatprep.subr.bf16.mxu0 0
    %4015 = vmatpush1.bf16.msra.mxu0 0
    %4016 = vmatprep.subr.bf16.mxu0 0
    %4017 = vmatpush1.bf16.msra.mxu0 0
    %4018 = vmatprep.subr.bf16.mxu0 0
    %4019 = vmatpush1.bf16.msra.mxu0 0
    %4020 = vmatprep.subr.bf16.mxu0 0
    %4021 = vmatpush1.bf16.msra.mxu0 0
    %4022 = vmatprep.subr.bf16.mxu0 0
    %4023 = vmatpush1.bf16.msra.mxu0 0
    %4024 = vmatprep.subr.bf16.mxu0 0
    %4025 = vmatpush1.bf16.msra.mxu0 0
    %4026 = vmatprep.subr.bf16.mxu0 0
    %4027 = vmatpush1.bf16.msra.mxu0 0
    %4028 = vmatprep.subr.bf16.mxu0 0
    %4029 = vmatpush1.bf16.msra.mxu0 0
    %4030 = vmatprep.mubr.bf16.mxu0 0
    %4031 = vmatmul.mubr.bf16.gmra.mrb[0].mxu0 %v3903
    %v4032 = vpop.f32.mrb[0].mxu0
    %v4033 = vadd.f32 %v3887, %v4032
    %v4034 = vpop.f32.mrb[0].mxu0
    %v4035 = vpop.f32.mrb[0].mxu0
    %v4036 = vadd.f32 %v3887, %v4035
    %v4037 = vpop.f32.mrb[0].mxu0
    %4038 = vmatprep.mubr.bf16.mxu0 0
    %4039 = vmatmul.mubr.bf16.gmra.mrb[0].mxu0 %v3906
    %v4040 = vpop.f32.mrb[0].mxu0
    %v4041 = vadd.f32 %v3887, %v4040
    %v4042 = vpop.f32.mrb[0].mxu0
    %v4043 = vpop.f32.mrb[0].mxu0
    %v4044 = vadd.f32 %v3887, %v4043
    %v4045 = vpop.f32.mrb[0].mxu0
    %4046 = vmatprep.mubr.bf16.mxu0 0
    %4047 = vmatmul.mubr.bf16.gmra.mrb[0].mxu0 %v3909
    %v4048 = vpop.f32.mrb[0].mxu0
    %v4049 = vadd.f32 %v3887, %v4048
    %v4050 = vpop.f32.mrb[0].mxu0
    %v4051 = vpop.f32.mrb[0].mxu0
    %v4052 = vadd.f32 %v3887, %v4051
    %v4053 = vpop.f32.mrb[0].mxu0
    %4054 = vmatprep.mubr.bf16.mxu0 0
    %4055 = vmatmul.mubr.bf16.gmra.mrb[0].mxu0 %v3912
    %v4056 = vpop.f32.mrb[0].mxu0
    %v4057 = vadd.f32 %v3887, %v4056
    %v4058 = vpop.f32.mrb[0].mxu0
    %v4059 = vpop.f32.mrb[0].mxu0
    %v4060 = vadd.f32 %v3887, %v4059
    %v4061 = vpop.f32.mrb[0].mxu0
    %4062 = vmatprep.mubr.bf16.mxu0 0
    %4063 = vmatmul.mubr.bf16.gmra.mrb[0].mxu0 %v3915
    %v4064 = vpop.f32.mrb[0].mxu0
    %v4065 = vadd.f32 %v3887, %v4064
    %v4066 = vpop.f32.mrb[0].mxu0
    %v4067 = vpop.f32.mrb[0].mxu0
    %v4068 = vadd.f32 %v3887, %v4067
    %v4069 = vpop.f32.mrb[0].mxu0
    %4070 = vmatprep.mubr.bf16.mxu0 0
    %4071 = vmatmul.mubr.bf16.gmra.mrb[0].mxu0 %v3918
    %v4072 = vpop.f32.mrb[0].mxu0
    %v4073 = vadd.f32 %v3887, %v4072
    %v4074 = vpop.f32.mrb[0].mxu0
    %v4075 = vpop.f32.mrb[0].mxu0
    %v4076 = vadd.f32 %v3887, %v4075
    %v4077 = vpop.f32.mrb[0].mxu0
    %4078 = vmatprep.mubr.bf16.mxu0 0
    %4079 = vmatmul.mubr.bf16.gmra.mrb[0].mxu0 %v3921
    %v4080 = vpop.f32.mrb[0].mxu0
    %v4081 = vadd.f32 %v3887, %v4080
    %v4082 = vpop.f32.mrb[0].mxu0
    %v4083 = vpop.f32.mrb[0].mxu0
    %v4084 = vadd.f32 %v3887, %v4083
    %v4085 = vpop.f32.mrb[0].mxu0
    %4086 = vmatprep.mubr.bf16.mxu0 0
    %4087 = vmatmul.mubr.bf16.gmra.mrb[0].mxu0 %v3924
    %v4088 = vpop.f32.mrb[0].mxu0
    %v4089 = vadd.f32 %v3887, %v4088
    %v4090 = vpop.f32.mrb[0].mxu0
    %v4091 = vpop.f32.mrb[0].mxu0
    %v4092 = vadd.f32 %v3887, %v4091
    %v4093 = vpop.f32.mrb[0].mxu0
    %4094 = vmatprep.mubr.bf16.mxu0 0
    %4095 = vmatmul.mubr.bf16.gmra.mrb[0].mxu0 %v3927
    %v4096 = vpop.f32.mrb[0].mxu0
    %v4097 = vadd.f32 %v3887, %v4096
    %v4098 = vpop.f32.mrb[0].mxu0
    %v4099 = vpop.f32.mrb[0].mxu0
    %v4100 = vadd.f32 %v3887, %v4099
    %v4101 = vpop.f32.mrb[0].mxu0
    %4102 = vmatprep.mubr.bf16.mxu0 0
    %4103 = vmatmul.mubr.bf16.gmra.mrb[0].mxu0 %v3930
    %v4104 = vpop.f32.mrb[0].mxu0
    %v4105 = vadd.f32 %v3887, %v4104
    %v4106 = vpop.f32.mrb[0].mxu0
    %v4107 = vpop.f32.mrb[0].mxu0
    %v4108 = vadd.f32 %v3887, %v4107
    %v4109 = vpop.f32.mrb[0].mxu0
    %4110 = vmatprep.mubr.bf16.mxu0 0
    %4111 = vmatmul.mubr.bf16.gmra.mrb[0].mxu0 %v3933
    %v4112 = vpop.f32.mrb[0].mxu0
    %v4113 = vadd.f32 %v3887, %v4112
    %v4114 = vpop.f32.mrb[0].mxu0
    %v4115 = vpop.f32.mrb[0].mxu0
    %v4116 = vadd.f32 %v3887, %v4115
    %v4117 = vpop.f32.mrb[0].mxu0
    %4118 = vmatprep.mubr.bf16.mxu0 0
    %4119 = vmatmul.mubr.bf16.gmra.mrb[0].mxu0 %v3936
    %v4120 = vpop.f32.mrb[0].mxu0
    %v4121 = vadd.f32 %v3887, %v4120
    %v4122 = vpop.f32.mrb[0].mxu0
    %v4123 = vpop.f32.mrb[0].mxu0
    %v4124 = vadd.f32 %v3887, %v4123
    %v4125 = vpop.f32.mrb[0].mxu0
    %4126 = vmatprep.mubr.bf16.mxu0 0
    %4127 = vmatmul.mubr.bf16.gmra.mrb[0].mxu0 %v3939
    %v4128 = vpop.f32.mrb[0].mxu0
    %v4129 = vadd.f32 %v3887, %v4128
    %v4130 = vpop.f32.mrb[0].mxu0
    %v4131 = vpop.f32.mrb[0].mxu0
    %v4132 = vadd.f32 %v3887, %v4131
    %v4133 = vpop.f32.mrb[0].mxu0
    %4134 = vmatprep.mubr.bf16.mxu0 0
    %4135 = vmatmul.mubr.bf16.gmra.mrb[0].mxu0 %v3942
    %v4136 = vpop.f32.mrb[0].mxu0
    %v4137 = vadd.f32 %v3887, %v4136
    %v4138 = vpop.f32.mrb[0].mxu0
    %v4139 = vpop.f32.mrb[0].mxu0
    %v4140 = vadd.f32 %v3887, %v4139
    %v4141 = vpop.f32.mrb[0].mxu0
    %4142 = vmatprep.mubr.bf16.mxu0 0
    %4143 = vmatmul.mubr.bf16.gmra.mrb[0].mxu0 %v3945
    %v4144 = vpop.f32.mrb[0].mxu0
    %v4145 = vadd.f32 %v3887, %v4144
    %v4146 = vpop.f32.mrb[0].mxu0
    %v4147 = vpop.f32.mrb[0].mxu0
    %v4148 = vadd.f32 %v3887, %v4147
    %v4149 = vpop.f32.mrb[0].mxu0
    %4150 = vmatprep.mubr.bf16.mxu0 0
    %4151 = vmatmul.mubr.bf16.gmra.mrb[0].mxu0 %v3948
    %v4152 = vpop.f32.mrb[0].mxu0
    %v4153 = vadd.f32 %v3887, %v4152
    %v4154 = vpop.f32.mrb[0].mxu0
    %v4155 = vpop.f32.mrb[0].mxu0
    %v4156 = vadd.f32 %v3887, %v4155
    %v4157 = vpop.f32.mrb[0].mxu0
    %4158 = vmatprep.mubr.bf16.mxu0 0
    %4159 = vmatmul.mubr.bf16.gmra.mrb[0].mxu0 %v3951
    %v4160 = vpop.f32.mrb[0].mxu0
    %v4161 = vadd.f32 %v3887, %v4160
    %v4162 = vpop.f32.mrb[0].mxu0
    %v4163 = vpop.f32.mrb[0].mxu0
    %v4164 = vadd.f32 %v3887, %v4163
    %v4165 = vpop.f32.mrb[0].mxu0
    %4166 = vmatprep.mubr.bf16.mxu0 0
    %4167 = vmatmul.mubr.bf16.gmra.mrb[0].mxu0 %v3954
    %v4168 = vpop.f32.mrb[0].mxu0
    %v4169 = vadd.f32 %v3887, %v4168
    %v4170 = vpop.f32.mrb[0].mxu0
    %v4171 = vpop.f32.mrb[0].mxu0
    %v4172 = vadd.f32 %v3887, %v4171
    %v4173 = vpop.f32.mrb[0].mxu0
    %4174 = vmatprep.mubr.bf16.mxu0 0
    %4175 = vmatmul.mubr.bf16.gmra.mrb[0].mxu0 %v3957
    %v4176 = vpop.f32.mrb[0].mxu0
    %v4177 = vadd.f32 %v3887, %v4176
    %v4178 = vpop.f32.mrb[0].mxu0
    %v4179 = vpop.f32.mrb[0].mxu0
    %v4180 = vadd.f32 %v3887, %v4179
    %v4181 = vpop.f32.mrb[0].mxu0
    %4182 = vmatprep.mubr.bf16.mxu0 0
    %4183 = vmatmul.mubr.bf16.gmra.mrb[0].mxu0 %v3960
    %v4184 = vpop.f32.mrb[0].mxu0
    %v4185 = vadd.f32 %v3887, %v4184
    %v4186 = vpop.f32.mrb[0].mxu0
    %v4187 = vpop.f32.mrb[0].mxu0
    %v4188 = vadd.f32 %v3887, %v4187
    %v4189 = vpop.f32.mrb[0].mxu0
    %4190 = vmatprep.mubr.bf16.mxu0 0
    %4191 = vmatmul.mubr.bf16.gmra.mrb[0].mxu0 %v3963
    %v4192 = vpop.f32.mrb[0].mxu0
    %v4193 = vadd.f32 %v3887, %v4192
    %v4194 = vpop.f32.mrb[0].mxu0
    %v4195 = vpop.f32.mrb[0].mxu0
    %v4196 = vadd.f32 %v3887, %v4195
    %v4197 = vpop.f32.mrb[0].mxu0
    %4198 = vmatprep.mubr.bf16.mxu0 0
    %4199 = vmatmul.mubr.bf16.gmra.mrb[0].mxu0 %v3966
    %v4200 = vpop.f32.mrb[0].mxu0
    %v4201 = vadd.f32 %v3887, %v4200
    %v4202 = vpop.f32.mrb[0].mxu0
    %v4203 = vpop.f32.mrb[0].mxu0
    %v4204 = vadd.f32 %v3887, %v4203
    %v4205 = vpop.f32.mrb[0].mxu0
    %4206 = vmatprep.mubr.bf16.mxu0 0
    %4207 = vmatmul.mubr.bf16.gmra.mrb[0].mxu0 %v3969
    %v4208 = vpop.f32.mrb[0].mxu0
    %v4209 = vadd.f32 %v3887, %v4208
    %v4210 = vpop.f32.mrb[0].mxu0
    %v4211 = vpop.f32.mrb[0].mxu0
    %v4212 = vadd.f32 %v3887, %v4211
    %v4213 = vpop.f32.mrb[0].mxu0
    %4214 = vmatprep.mubr.bf16.mxu0 0
    %4215 = vmatmul.mubr.bf16.gmra.mrb[0].mxu0 %v3972
    %v4216 = vpop.f32.mrb[0].mxu0
    %v4217 = vadd.f32 %v3887, %v4216
    %v4218 = vpop.f32.mrb[0].mxu0
    %v4219 = vpop.f32.mrb[0].mxu0
    %v4220 = vadd.f32 %v3887, %v4219
    %v4221 = vpop.f32.mrb[0].mxu0
    %4222 = vmatprep.mubr.bf16.mxu0 0
    %4223 = vmatmul.mubr.bf16.gmra.mrb[0].mxu0 %v3975
    %v4224 = vpop.f32.mrb[0].mxu0
    %v4225 = vadd.f32 %v3887, %v4224
    %v4226 = vpop.f32.mrb[0].mxu0
    %v4227 = vpop.f32.mrb[0].mxu0
    %v4228 = vadd.f32 %v3887, %v4227
    %v4229 = vpop.f32.mrb[0].mxu0
    %4230 = vmatprep.mubr.bf16.mxu0 0
    %4231 = vmatmul.mubr.bf16.gmra.mrb[0].mxu0 %v3978
    %v4232 = vpop.f32.mrb[0].mxu0
    %v4233 = vadd.f32 %v3887, %v4232
    %v4234 = vpop.f32.mrb[0].mxu0
    %v4235 = vpop.f32.mrb[0].mxu0
    %v4236 = vadd.f32 %v3887, %v4235
    %v4237 = vpop.f32.mrb[0].mxu0
    %4238 = vmatprep.mubr.bf16.mxu0 0
    %4239 = vmatmul.mubr.bf16.gmra.mrb[0].mxu0 %v3981
    %v4240 = vpop.f32.mrb[0].mxu0
    %v4241 = vadd.f32 %v3887, %v4240
    %v4242 = vpop.f32.mrb[0].mxu0
    %v4243 = vpop.f32.mrb[0].mxu0
    %v4244 = vadd.f32 %v3887, %v4243
    %v4245 = vpop.f32.mrb[0].mxu0
    %4246 = vmatprep.mubr.bf16.mxu0 0
    %4247 = vmatmul.mubr.bf16.gmra.mrb[0].mxu0 %v3984
    %v4248 = vpop.f32.mrb[0].mxu0
    %v4249 = vadd.f32 %v3887, %v4248
    %v4250 = vpop.f32.mrb[0].mxu0
    %v4251 = vpop.f32.mrb[0].mxu0
    %v4252 = vadd.f32 %v3887, %v4251
    %v4253 = vpop.f32.mrb[0].mxu0
    %4254 = vmatprep.mubr.bf16.mxu0 0
    %4255 = vmatmul.mubr.bf16.gmra.mrb[0].mxu0 %v3987
    %v4256 = vpop.f32.mrb[0].mxu0
    %v4257 = vadd.f32 %v3887, %v4256
    %v4258 = vpop.f32.mrb[0].mxu0
    %v4259 = vpop.f32.mrb[0].mxu0
    %v4260 = vadd.f32 %v3887, %v4259
    %v4261 = vpop.f32.mrb[0].mxu0
    %4262 = vmatprep.mubr.bf16.mxu0 0
    %4263 = vmatmul.mubr.bf16.gmra.mrb[0].mxu0 %v3990
    %v4264 = vpop.f32.mrb[0].mxu0
    %v4265 = vadd.f32 %v3887, %v4264
    %v4266 = vpop.f32.mrb[0].mxu0
    %v4267 = vpop.f32.mrb[0].mxu0
    %v4268 = vadd.f32 %v3887, %v4267
    %v4269 = vpop.f32.mrb[0].mxu0
    %4270 = vmatprep.mubr.bf16.mxu0 0
    %4271 = vmatmul.mubr.bf16.gmra.mrb[0].mxu0 %v3993
    %v4272 = vpop.f32.mrb[0].mxu0
    %v4273 = vadd.f32 %v3887, %v4272
    %v4274 = vpop.f32.mrb[0].mxu0
    %v4275 = vpop.f32.mrb[0].mxu0
    %v4276 = vadd.f32 %v3887, %v4275
    %v4277 = vpop.f32.mrb[0].mxu0
    %4278 = vmatprep.mubr.bf16.mxu0 0
    %4279 = vmatmul.mubr.bf16.gmra.mrb[0].mxu0 %v3996
    %v4280 = vpop.f32.mrb[0].mxu0
    %v4281 = vadd.f32 %v3887, %v4280
    %v4282 = vpop.f32.mrb[0].mxu0
    %v4283 = vpop.f32.mrb[0].mxu0
    %v4284 = vadd.f32 %v3887, %v4283
    %v4285 = vpop.f32.mrb[0].mxu0
    %4286 = vdwg.mxu0
    %v4287 = vmax.f32 %v4033, 0.0
    %v4288 = vmax.f32 %v4036, 0.0
    %v4289 = vmax.f32 %v4041, 0.0
    %v4290 = vmax.f32 %v4044, 0.0
    %v4291 = vmax.f32 %v4049, 0.0
    %v4292 = vmax.f32 %v4052, 0.0
    %v4293 = vmax.f32 %v4057, 0.0
    %v4294 = vmax.f32 %v4060, 0.0
    %v4295 = vmax.f32 %v4065, 0.0
    %v4296 = vmax.f32 %v4068, 0.0
    %v4297 = vmax.f32 %v4073, 0.0
    %v4298 = vmax.f32 %v4076, 0.0
    %v4299 = vmax.f32 %v4081, 0.0
    %v4300 = vmax.f32 %v4084, 0.0
    %v4301 = vmax.f32 %v4089, 0.0
    %v4302 = vmax.f32 %v4092, 0.0
    %v4303 = vmax.f32 %v4097, 0.0
    %v4304 = vmax.f32 %v4100, 0.0
    %v4305 = vmax.f32 %v4105, 0.0
    %v4306 = vmax.f32 %v4108, 0.0
    %v4307 = vmax.f32 %v4113, 0.0
    %v4308 = vmax.f32 %v4116, 0.0
    %v4309 = vmax.f32 %v4121, 0.0
    %v4310 = vmax.f32 %v4124, 0.0
    %v4311 = vmax.f32 %v4129, 0.0
    %v4312 = vmax.f32 %v4132, 0.0
    %v4313 = vmax.f32 %v4137, 0.0
    %v4314 = vmax.f32 %v4140, 0.0
    %v4315 = vmax.f32 %v4145, 0.0
    %v4316 = vmax.f32 %v4148, 0.0
    %v4317 = vmax.f32 %v4153, 0.0
    %v4318 = vmax.f32 %v4156, 0.0
    %v4319 = vmax.f32 %v4161, 0.0
    %v4320 = vmax.f32 %v4164, 0.0
    %v4321 = vmax.f32 %v4169, 0.0
    %v4322 = vmax.f32 %v4172, 0.0
    %v4323 = vmax.f32 %v4177, 0.0
    %v4324 = vmax.f32 %v4180, 0.0
    %v4325 = vmax.f32 %v4185, 0.0
    %v4326 = vmax.f32 %v4188, 0.0
    %v4327 = vmax.f32 %v4193, 0.0
    %v4328 = vmax.f32 %v4196, 0.0
    %v4329 = vmax.f32 %v4201, 0.0
    %v4330 = vmax.f32 %v4204, 0.0
    %v4331 = vmax.f32 %v4209, 0.0
    %v4332 = vmax.f32 %v4212, 0.0
    %v4333 = vmax.f32 %v4217, 0.0
    %v4334 = vmax.f32 %v4220, 0.0
    %v4335 = vmax.f32 %v4225, 0.0
    %v4336 = vmax.f32 %v4228, 0.0
    %v4337 = vmax.f32 %v4233, 0.0
    %v4338 = vmax.f32 %v4236, 0.0
    %v4339 = vmax.f32 %v4241, 0.0
    %v4340 = vmax.f32 %v4244, 0.0
    %v4341 = vmax.f32 %v4249, 0.0
    %v4342 = vmax.f32 %v4252, 0.0
    %v4343 = vmax.f32 %v4257, 0.0
    %v4344 = vmax.f32 %v4260, 0.0
    %v4345 = vmax.f32 %v4265, 0.0
    %v4346 = vmax.f32 %v4268, 0.0
    %v4347 = vmax.f32 %v4273, 0.0
    %v4348 = vmax.f32 %v4276, 0.0
    %v4349 = vmax.f32 %v4281, 0.0
    %v4350 = vmax.f32 %v4284, 0.0
    %v4351 = vld [vmem:[%s7] sm:$0x1]
    %v4352 = vunpack.c.l.bf16 %v4351
    %v4353 = vlaneseq
    %v4354 = vshrl.u32 %v4353, 7
    %v4355 = vsub.s32 0, %v4354
    %v4356 = vrot.slane %v4352, %v4355
    %4358 = vrot.lane.b32.xlu0 %v4356, 8
    %v4359 = vpop.permute.xlu0 %4358
    %v4361 = vmul.f32 %v4287, %v4359
    %v4362 = vmul.f32 %v4288, %v4359
    %v4363 = vmul.f32 %v4289, %v4359
    %v4364 = vmul.f32 %v4290, %v4359
    %v4365 = vmul.f32 %v4291, %v4359
    %v4366 = vmul.f32 %v4292, %v4359
    %v4367 = vmul.f32 %v4293, %v4359
    %v4368 = vmul.f32 %v4294, %v4359
    %v4369 = vmul.f32 %v4295, %v4359
    %v4370 = vmul.f32 %v4296, %v4359
    %v4371 = vmul.f32 %v4297, %v4359
    %v4372 = vmul.f32 %v4298, %v4359
    %v4373 = vmul.f32 %v4299, %v4359
    %v4374 = vmul.f32 %v4300, %v4359
    %v4375 = vmul.f32 %v4301, %v4359
    %v4376 = vmul.f32 %v4302, %v4359
    %v4377 = vmul.f32 %v4303, %v4359
    %v4378 = vmul.f32 %v4304, %v4359
    %v4379 = vmul.f32 %v4305, %v4359
    %v4380 = vmul.f32 %v4306, %v4359
    %v4381 = vmul.f32 %v4307, %v4359
    %v4382 = vmul.f32 %v4308, %v4359
    %v4383 = vmul.f32 %v4309, %v4359
    %v4384 = vmul.f32 %v4310, %v4359
    %v4385 = vmul.f32 %v4311, %v4359
    %v4386 = vmul.f32 %v4312, %v4359
    %v4387 = vmul.f32 %v4313, %v4359
    %v4388 = vmul.f32 %v4314, %v4359
    %v4389 = vmul.f32 %v4315, %v4359
    %v4390 = vmul.f32 %v4316, %v4359
    %v4391 = vmul.f32 %v4317, %v4359
    %v4392 = vmul.f32 %v4318, %v4359
    %v4393 = vmul.f32 %v4319, %v4359
    %v4394 = vmul.f32 %v4320, %v4359
    %v4395 = vmul.f32 %v4321, %v4359
    %v4396 = vmul.f32 %v4322, %v4359
    %v4397 = vmul.f32 %v4323, %v4359
    %v4398 = vmul.f32 %v4324, %v4359
    %v4399 = vmul.f32 %v4325, %v4359
    %v4400 = vmul.f32 %v4326, %v4359
    %v4401 = vmul.f32 %v4327, %v4359
    %v4402 = vmul.f32 %v4328, %v4359
    %v4403 = vmul.f32 %v4329, %v4359
    %v4404 = vmul.f32 %v4330, %v4359
    %v4405 = vmul.f32 %v4331, %v4359
    %v4406 = vmul.f32 %v4332, %v4359
    %v4407 = vmul.f32 %v4333, %v4359
    %v4408 = vmul.f32 %v4334, %v4359
    %v4409 = vmul.f32 %v4335, %v4359
    %v4410 = vmul.f32 %v4336, %v4359
    %v4411 = vmul.f32 %v4337, %v4359
    %v4412 = vmul.f32 %v4338, %v4359
    %v4413 = vmul.f32 %v4339, %v4359
    %v4414 = vmul.f32 %v4340, %v4359
    %v4415 = vmul.f32 %v4341, %v4359
    %v4416 = vmul.f32 %v4342, %v4359
    %v4417 = vmul.f32 %v4343, %v4359
    %v4418 = vmul.f32 %v4344, %v4359
    %v4419 = vmul.f32 %v4345, %v4359
    %v4420 = vmul.f32 %v4346, %v4359
    %v4421 = vmul.f32 %v4347, %v4359
    %v4422 = vmul.f32 %v4348, %v4359
    %v4423 = vmul.f32 %v4349, %v4359
    %v4424 = vmul.f32 %v4350, %v4359
    %4489 = vrot.lane.b32.xlu0 %v4361, 120
    %v4490 = vpop.permute.xlu0 %4489
    %4491 = vrot.lane.b32.xlu0 %v4362, 120
    %v4492 = vpop.permute.xlu0 %4491
    %4493 = vrot.lane.b32.xlu0 %v4363, 120
    %v4494 = vpop.permute.xlu0 %4493
    %4495 = vrot.lane.b32.xlu0 %v4364, 120
    %v4496 = vpop.permute.xlu0 %4495
    %4497 = vrot.lane.b32.xlu0 %v4365, 120
    %v4498 = vpop.permute.xlu0 %4497
    %4499 = vrot.lane.b32.xlu0 %v4366, 120
    %v4500 = vpop.permute.xlu0 %4499
    %4501 = vrot.lane.b32.xlu0 %v4367, 120
    %v4502 = vpop.permute.xlu0 %4501
    %4503 = vrot.lane.b32.xlu0 %v4368, 120
    %v4504 = vpop.permute.xlu0 %4503
    %4505 = vrot.lane.b32.xlu0 %v4369, 120
    %v4506 = vpop.permute.xlu0 %4505
    %4507 = vrot.lane.b32.xlu0 %v4370, 120
    %v4508 = vpop.permute.xlu0 %4507
    %4509 = vrot.lane.b32.xlu0 %v4371, 120
    %v4510 = vpop.permute.xlu0 %4509
    %4511 = vrot.lane.b32.xlu0 %v4372, 120
    %v4512 = vpop.permute.xlu0 %4511
    %4513 = vrot.lane.b32.xlu0 %v4373, 120
    %v4514 = vpop.permute.xlu0 %4513
    %4515 = vrot.lane.b32.xlu0 %v4374, 120
    %v4516 = vpop.permute.xlu0 %4515
    %4517 = vrot.lane.b32.xlu0 %v4375, 120
    %v4518 = vpop.permute.xlu0 %4517
    %4519 = vrot.lane.b32.xlu0 %v4376, 120
    %v4520 = vpop.permute.xlu0 %4519
    %4521 = vrot.lane.b32.xlu0 %v4377, 120
    %v4522 = vpop.permute.xlu0 %4521
    %4523 = vrot.lane.b32.xlu0 %v4378, 120
    %v4524 = vpop.permute.xlu0 %4523
    %4525 = vrot.lane.b32.xlu0 %v4379, 120
    %v4526 = vpop.permute.xlu0 %4525
    %4527 = vrot.lane.b32.xlu0 %v4380, 120
    %v4528 = vpop.permute.xlu0 %4527
    %4529 = vrot.lane.b32.xlu0 %v4381, 120
    %v4530 = vpop.permute.xlu0 %4529
    %4531 = vrot.lane.b32.xlu0 %v4382, 120
    %v4532 = vpop.permute.xlu0 %4531
    %4533 = vrot.lane.b32.xlu0 %v4383, 120
    %v4534 = vpop.permute.xlu0 %4533
    %4535 = vrot.lane.b32.xlu0 %v4384, 120
    %v4536 = vpop.permute.xlu0 %4535
    %4537 = vrot.lane.b32.xlu0 %v4385, 120
    %v4538 = vpop.permute.xlu0 %4537
    %4539 = vrot.lane.b32.xlu0 %v4386, 120
    %v4540 = vpop.permute.xlu0 %4539
    %4541 = vrot.lane.b32.xlu0 %v4387, 120
    %v4542 = vpop.permute.xlu0 %4541
    %4543 = vrot.lane.b32.xlu0 %v4388, 120
    %v4544 = vpop.permute.xlu0 %4543
    %4545 = vrot.lane.b32.xlu0 %v4389, 120
    %v4546 = vpop.permute.xlu0 %4545
    %4547 = vrot.lane.b32.xlu0 %v4390, 120
    %v4548 = vpop.permute.xlu0 %4547
    %4549 = vrot.lane.b32.xlu0 %v4391, 120
    %v4550 = vpop.permute.xlu0 %4549
    %4551 = vrot.lane.b32.xlu0 %v4392, 120
    %v4552 = vpop.permute.xlu0 %4551
    %4553 = vrot.lane.b32.xlu0 %v4393, 120
    %v4554 = vpop.permute.xlu0 %4553
    %4555 = vrot.lane.b32.xlu0 %v4394, 120
    %v4556 = vpop.permute.xlu0 %4555
    %4557 = vrot.lane.b32.xlu0 %v4395, 120
    %v4558 = vpop.permute.xlu0 %4557
    %4559 = vrot.lane.b32.xlu0 %v4396, 120
    %v4560 = vpop.permute.xlu0 %4559
    %4561 = vrot.lane.b32.xlu0 %v4397, 120
    %v4562 = vpop.permute.xlu0 %4561
    %4563 = vrot.lane.b32.xlu0 %v4398, 120
    %v4564 = vpop.permute.xlu0 %4563
    %4565 = vrot.lane.b32.xlu0 %v4399, 120
    %v4566 = vpop.permute.xlu0 %4565
    %4567 = vrot.lane.b32.xlu0 %v4400, 120
    %v4568 = vpop.permute.xlu0 %4567
    %4569 = vrot.lane.b32.xlu0 %v4401, 120
    %v4570 = vpop.permute.xlu0 %4569
    %4571 = vrot.lane.b32.xlu0 %v4402, 120
    %v4572 = vpop.permute.xlu0 %4571
    %4573 = vrot.lane.b32.xlu0 %v4403, 120
    %v4574 = vpop.permute.xlu0 %4573
    %4575 = vrot.lane.b32.xlu0 %v4404, 120
    %v4576 = vpop.permute.xlu0 %4575
    %4577 = vrot.lane.b32.xlu0 %v4405, 120
    %v4578 = vpop.permute.xlu0 %4577
    %4579 = vrot.lane.b32.xlu0 %v4406, 120
    %v4580 = vpop.permute.xlu0 %4579
    %4581 = vrot.lane.b32.xlu0 %v4407, 120
    %v4582 = vpop.permute.xlu0 %4581
    %4583 = vrot.lane.b32.xlu0 %v4408, 120
    %v4584 = vpop.permute.xlu0 %4583
    %4585 = vrot.lane.b32.xlu0 %v4409, 120
    %v4586 = vpop.permute.xlu0 %4585
    %4587 = vrot.lane.b32.xlu0 %v4410, 120
    %v4588 = vpop.permute.xlu0 %4587
    %4589 = vrot.lane.b32.xlu0 %v4411, 120
    %v4590 = vpop.permute.xlu0 %4589
    %4591 = vrot.lane.b32.xlu0 %v4412, 120
    %v4592 = vpop.permute.xlu0 %4591
    %4593 = vrot.lane.b32.xlu0 %v4413, 120
    %v4594 = vpop.permute.xlu0 %4593
    %4595 = vrot.lane.b32.xlu0 %v4414, 120
    %v4596 = vpop.permute.xlu0 %4595
    %4597 = vrot.lane.b32.xlu0 %v4415, 120
    %v4598 = vpop.permute.xlu0 %4597
    %4599 = vrot.lane.b32.xlu0 %v4416, 120
    %v4600 = vpop.permute.xlu0 %4599
    %4601 = vrot.lane.b32.xlu0 %v4417, 120
    %v4602 = vpop.permute.xlu0 %4601
    %4603 = vrot.lane.b32.xlu0 %v4418, 120
    %v4604 = vpop.permute.xlu0 %4603
    %4605 = vrot.lane.b32.xlu0 %v4419, 120
    %v4606 = vpop.permute.xlu0 %4605
    %4607 = vrot.lane.b32.xlu0 %v4420, 120
    %v4608 = vpop.permute.xlu0 %4607
    %4609 = vrot.lane.b32.xlu0 %v4421, 120
    %v4610 = vpop.permute.xlu0 %4609
    %4611 = vrot.lane.b32.xlu0 %v4422, 120
    %v4612 = vpop.permute.xlu0 %4611
    %4613 = vrot.lane.b32.xlu0 %v4423, 120
    %v4614 = vpop.permute.xlu0 %4613
    %4615 = vrot.lane.b32.xlu0 %v4424, 120
    %v4616 = vpop.permute.xlu0 %4615
    %v4681 = vsel %vm3901, %v4490, 0.0
    %4682 = vadd.xlane.f32.xlu0 %v4681
    %v4683 = vpop.xlane.xlu0 %4682
    %v4684 = vsel %vm3901, %v4492, 0.0
    %4685 = vadd.xlane.f32.xlu0 %v4684
    %v4686 = vpop.xlane.xlu0 %4685
    %v4687 = vsel %vm3901, %v4494, 0.0
    %4688 = vadd.xlane.f32.xlu0 %v4687
    %v4689 = vpop.xlane.xlu0 %4688
    %v4690 = vsel %vm3901, %v4496, 0.0
    %4691 = vadd.xlane.f32.xlu0 %v4690
    %v4692 = vpop.xlane.xlu0 %4691
    %v4693 = vsel %vm3901, %v4498, 0.0
    %4694 = vadd.xlane.f32.xlu0 %v4693
    %v4695 = vpop.xlane.xlu0 %4694
    %v4696 = vsel %vm3901, %v4500, 0.0
    %4697 = vadd.xlane.f32.xlu0 %v4696
    %v4698 = vpop.xlane.xlu0 %4697
    %v4699 = vsel %vm3901, %v4502, 0.0
    %4700 = vadd.xlane.f32.xlu0 %v4699
    %v4701 = vpop.xlane.xlu0 %4700
    %v4702 = vsel %vm3901, %v4504, 0.0
    %4703 = vadd.xlane.f32.xlu0 %v4702
    %v4704 = vpop.xlane.xlu0 %4703
    %v4705 = vsel %vm3901, %v4506, 0.0
    %4706 = vadd.xlane.f32.xlu0 %v4705
    %v4707 = vpop.xlane.xlu0 %4706
    %v4708 = vsel %vm3901, %v4508, 0.0
    %4709 = vadd.xlane.f32.xlu0 %v4708
    %v4710 = vpop.xlane.xlu0 %4709
    %v4711 = vsel %vm3901, %v4510, 0.0
    %4712 = vadd.xlane.f32.xlu0 %v4711
    %v4713 = vpop.xlane.xlu0 %4712
    %v4714 = vsel %vm3901, %v4512, 0.0
    %4715 = vadd.xlane.f32.xlu0 %v4714
    %v4716 = vpop.xlane.xlu0 %4715
    %v4717 = vsel %vm3901, %v4514, 0.0
    %4718 = vadd.xlane.f32.xlu0 %v4717
    %v4719 = vpop.xlane.xlu0 %4718
    %v4720 = vsel %vm3901, %v4516, 0.0
    %4721 = vadd.xlane.f32.xlu0 %v4720
    %v4722 = vpop.xlane.xlu0 %4721
    %v4723 = vsel %vm3901, %v4518, 0.0
    %4724 = vadd.xlane.f32.xlu0 %v4723
    %v4725 = vpop.xlane.xlu0 %4724
    %v4726 = vsel %vm3901, %v4520, 0.0
    %4727 = vadd.xlane.f32.xlu0 %v4726
    %v4728 = vpop.xlane.xlu0 %4727
    %v4729 = vsel %vm3901, %v4522, 0.0
    %4730 = vadd.xlane.f32.xlu0 %v4729
    %v4731 = vpop.xlane.xlu0 %4730
    %v4732 = vsel %vm3901, %v4524, 0.0
    %4733 = vadd.xlane.f32.xlu0 %v4732
    %v4734 = vpop.xlane.xlu0 %4733
    %v4735 = vsel %vm3901, %v4526, 0.0
    %4736 = vadd.xlane.f32.xlu0 %v4735
    %v4737 = vpop.xlane.xlu0 %4736
    %v4738 = vsel %vm3901, %v4528, 0.0
    %4739 = vadd.xlane.f32.xlu0 %v4738
    %v4740 = vpop.xlane.xlu0 %4739
    %v4741 = vsel %vm3901, %v4530, 0.0
    %4742 = vadd.xlane.f32.xlu0 %v4741
    %v4743 = vpop.xlane.xlu0 %4742
    %v4744 = vsel %vm3901, %v4532, 0.0
    %4745 = vadd.xlane.f32.xlu0 %v4744
    %v4746 = vpop.xlane.xlu0 %4745
    %v4747 = vsel %vm3901, %v4534, 0.0
    %4748 = vadd.xlane.f32.xlu0 %v4747
    %v4749 = vpop.xlane.xlu0 %4748
    %v4750 = vsel %vm3901, %v4536, 0.0
    %4751 = vadd.xlane.f32.xlu0 %v4750
    %v4752 = vpop.xlane.xlu0 %4751
    %v4753 = vsel %vm3901, %v4538, 0.0
    %4754 = vadd.xlane.f32.xlu0 %v4753
    %v4755 = vpop.xlane.xlu0 %4754
    %v4756 = vsel %vm3901, %v4540, 0.0
    %4757 = vadd.xlane.f32.xlu0 %v4756
    %v4758 = vpop.xlane.xlu0 %4757
    %v4759 = vsel %vm3901, %v4542, 0.0
    %4760 = vadd.xlane.f32.xlu0 %v4759
    %v4761 = vpop.xlane.xlu0 %4760
    %v4762 = vsel %vm3901, %v4544, 0.0
    %4763 = vadd.xlane.f32.xlu0 %v4762
    %v4764 = vpop.xlane.xlu0 %4763
    %v4765 = vsel %vm3901, %v4546, 0.0
    %4766 = vadd.xlane.f32.xlu0 %v4765
    %v4767 = vpop.xlane.xlu0 %4766
    %v4768 = vsel %vm3901, %v4548, 0.0
    %4769 = vadd.xlane.f32.xlu0 %v4768
    %v4770 = vpop.xlane.xlu0 %4769
    %v4771 = vsel %vm3901, %v4550, 0.0
    %4772 = vadd.xlane.f32.xlu0 %v4771
    %v4773 = vpop.xlane.xlu0 %4772
    %v4774 = vsel %vm3901, %v4552, 0.0
    %4775 = vadd.xlane.f32.xlu0 %v4774
    %v4776 = vpop.xlane.xlu0 %4775
    %v4777 = vsel %vm3901, %v4554, 0.0
    %4778 = vadd.xlane.f32.xlu0 %v4777
    %v4779 = vpop.xlane.xlu0 %4778
    %v4780 = vsel %vm3901, %v4556, 0.0
    %4781 = vadd.xlane.f32.xlu0 %v4780
    %v4782 = vpop.xlane.xlu0 %4781
    %v4783 = vsel %vm3901, %v4558, 0.0
    %4784 = vadd.xlane.f32.xlu0 %v4783
    %v4785 = vpop.xlane.xlu0 %4784
    %v4786 = vsel %vm3901, %v4560, 0.0
    %4787 = vadd.xlane.f32.xlu0 %v4786
    %v4788 = vpop.xlane.xlu0 %4787
    %v4789 = vsel %vm3901, %v4562, 0.0
    %4790 = vadd.xlane.f32.xlu0 %v4789
    %v4791 = vpop.xlane.xlu0 %4790
    %v4792 = vsel %vm3901, %v4564, 0.0
    %4793 = vadd.xlane.f32.xlu0 %v4792
    %v4794 = vpop.xlane.xlu0 %4793
    %v4795 = vsel %vm3901, %v4566, 0.0
    %4796 = vadd.xlane.f32.xlu0 %v4795
    %v4797 = vpop.xlane.xlu0 %4796
    %v4798 = vsel %vm3901, %v4568, 0.0
    %4799 = vadd.xlane.f32.xlu0 %v4798
    %v4800 = vpop.xlane.xlu0 %4799
    %v4801 = vsel %vm3901, %v4570, 0.0
    %4802 = vadd.xlane.f32.xlu0 %v4801
    %v4803 = vpop.xlane.xlu0 %4802
    %v4804 = vsel %vm3901, %v4572, 0.0
    %4805 = vadd.xlane.f32.xlu0 %v4804
    %v4806 = vpop.xlane.xlu0 %4805
    %v4807 = vsel %vm3901, %v4574, 0.0
    %4808 = vadd.xlane.f32.xlu0 %v4807
    %v4809 = vpop.xlane.xlu0 %4808
    %v4810 = vsel %vm3901, %v4576, 0.0
    %4811 = vadd.xlane.f32.xlu0 %v4810
    %v4812 = vpop.xlane.xlu0 %4811
    %v4813 = vsel %vm3901, %v4578, 0.0
    %4814 = vadd.xlane.f32.xlu0 %v4813
    %v4815 = vpop.xlane.xlu0 %4814
    %v4816 = vsel %vm3901, %v4580, 0.0
    %4817 = vadd.xlane.f32.xlu0 %v4816
    %v4818 = vpop.xlane.xlu0 %4817
    %v4819 = vsel %vm3901, %v4582, 0.0
    %4820 = vadd.xlane.f32.xlu0 %v4819
    %v4821 = vpop.xlane.xlu0 %4820
    %v4822 = vsel %vm3901, %v4584, 0.0
    %4823 = vadd.xlane.f32.xlu0 %v4822
    %v4824 = vpop.xlane.xlu0 %4823
    %v4825 = vsel %vm3901, %v4586, 0.0
    %4826 = vadd.xlane.f32.xlu0 %v4825
    %v4827 = vpop.xlane.xlu0 %4826
    %v4828 = vsel %vm3901, %v4588, 0.0
    %4829 = vadd.xlane.f32.xlu0 %v4828
    %v4830 = vpop.xlane.xlu0 %4829
    %v4831 = vsel %vm3901, %v4590, 0.0
    %4832 = vadd.xlane.f32.xlu0 %v4831
    %v4833 = vpop.xlane.xlu0 %4832
    %v4834 = vsel %vm3901, %v4592, 0.0
    %4835 = vadd.xlane.f32.xlu0 %v4834
    %v4836 = vpop.xlane.xlu0 %4835
    %v4837 = vsel %vm3901, %v4594, 0.0
    %4838 = vadd.xlane.f32.xlu0 %v4837
    %v4839 = vpop.xlane.xlu0 %4838
    %v4840 = vsel %vm3901, %v4596, 0.0
    %4841 = vadd.xlane.f32.xlu0 %v4840
    %v4842 = vpop.xlane.xlu0 %4841
    %v4843 = vsel %vm3901, %v4598, 0.0
    %4844 = vadd.xlane.f32.xlu0 %v4843
    %v4845 = vpop.xlane.xlu0 %4844
    %v4846 = vsel %vm3901, %v4600, 0.0
    %4847 = vadd.xlane.f32.xlu0 %v4846
    %v4848 = vpop.xlane.xlu0 %4847
    %v4849 = vsel %vm3901, %v4602, 0.0
    %4850 = vadd.xlane.f32.xlu0 %v4849
    %v4851 = vpop.xlane.xlu0 %4850
    %v4852 = vsel %vm3901, %v4604, 0.0
    %4853 = vadd.xlane.f32.xlu0 %v4852
    %v4854 = vpop.xlane.xlu0 %4853
    %v4855 = vsel %vm3901, %v4606, 0.0
    %4856 = vadd.xlane.f32.xlu0 %v4855
    %v4857 = vpop.xlane.xlu0 %4856
    %v4858 = vsel %vm3901, %v4608, 0.0
    %4859 = vadd.xlane.f32.xlu0 %v4858
    %v4860 = vpop.xlane.xlu0 %4859
    %v4861 = vsel %vm3901, %v4610, 0.0
    %4862 = vadd.xlane.f32.xlu0 %v4861
    %v4863 = vpop.xlane.xlu0 %4862
    %v4864 = vsel %vm3901, %v4612, 0.0
    %4865 = vadd.xlane.f32.xlu0 %v4864
    %v4866 = vpop.xlane.xlu0 %4865
    %v4867 = vsel %vm3901, %v4614, 0.0
    %4868 = vadd.xlane.f32.xlu0 %v4867
    %v4869 = vpop.xlane.xlu0 %4868
    %v4870 = vsel %vm3901, %v4616, 0.0
    %4871 = vadd.xlane.f32.xlu0 %v4870
    %v4872 = vpop.xlane.xlu0 %4871
    %v4873 = vld [vmem:[#allocation2] sm:$0x1]
    %v4875 = vlaneseq
    %v4876 = vshrl.u32 %v4875, 7
    %v4877 = vsub.s32 0, %v4876
    %v4878 = vrot.slane %v4873, %v4877
    %v4880 = vadd.f32 %v4683, %v4878
    %v4881 = vadd.f32 %v4686, %v4878
    %v4882 = vadd.f32 %v4689, %v4878
    %v4883 = vadd.f32 %v4692, %v4878
    %v4884 = vadd.f32 %v4695, %v4878
    %v4885 = vadd.f32 %v4698, %v4878
    %v4886 = vadd.f32 %v4701, %v4878
    %v4887 = vadd.f32 %v4704, %v4878
    %v4888 = vadd.f32 %v4707, %v4878
    %v4889 = vadd.f32 %v4710, %v4878
    %v4890 = vadd.f32 %v4713, %v4878
    %v4891 = vadd.f32 %v4716, %v4878
    %v4892 = vadd.f32 %v4719, %v4878
    %v4893 = vadd.f32 %v4722, %v4878
    %v4894 = vadd.f32 %v4725, %v4878
    %v4895 = vadd.f32 %v4728, %v4878
    %v4896 = vadd.f32 %v4731, %v4878
    %v4897 = vadd.f32 %v4734, %v4878
    %v4898 = vadd.f32 %v4737, %v4878
    %v4899 = vadd.f32 %v4740, %v4878
    %v4900 = vadd.f32 %v4743, %v4878
    %v4901 = vadd.f32 %v4746, %v4878
    %v4902 = vadd.f32 %v4749, %v4878
    %v4903 = vadd.f32 %v4752, %v4878
    %v4904 = vadd.f32 %v4755, %v4878
    %v4905 = vadd.f32 %v4758, %v4878
    %v4906 = vadd.f32 %v4761, %v4878
    %v4907 = vadd.f32 %v4764, %v4878
    %v4908 = vadd.f32 %v4767, %v4878
    %v4909 = vadd.f32 %v4770, %v4878
    %v4910 = vadd.f32 %v4773, %v4878
    %v4911 = vadd.f32 %v4776, %v4878
    %v4912 = vadd.f32 %v4779, %v4878
    %v4913 = vadd.f32 %v4782, %v4878
    %v4914 = vadd.f32 %v4785, %v4878
    %v4915 = vadd.f32 %v4788, %v4878
    %v4916 = vadd.f32 %v4791, %v4878
    %v4917 = vadd.f32 %v4794, %v4878
    %v4918 = vadd.f32 %v4797, %v4878
    %v4919 = vadd.f32 %v4800, %v4878
    %v4920 = vadd.f32 %v4803, %v4878
    %v4921 = vadd.f32 %v4806, %v4878
    %v4922 = vadd.f32 %v4809, %v4878
    %v4923 = vadd.f32 %v4812, %v4878
    %v4924 = vadd.f32 %v4815, %v4878
    %v4925 = vadd.f32 %v4818, %v4878
    %v4926 = vadd.f32 %v4821, %v4878
    %v4927 = vadd.f32 %v4824, %v4878
    %v4928 = vadd.f32 %v4827, %v4878
    %v4929 = vadd.f32 %v4830, %v4878
    %v4930 = vadd.f32 %v4833, %v4878
    %v4931 = vadd.f32 %v4836, %v4878
    %v4932 = vadd.f32 %v4839, %v4878
    %v4933 = vadd.f32 %v4842, %v4878
    %v4934 = vadd.f32 %v4845, %v4878
    %v4935 = vadd.f32 %v4848, %v4878
    %v4936 = vadd.f32 %v4851, %v4878
    %v4937 = vadd.f32 %v4854, %v4878
    %v4938 = vadd.f32 %v4857, %v4878
    %v4939 = vadd.f32 %v4860, %v4878
    %v4940 = vadd.f32 %v4863, %v4878
    %v4941 = vadd.f32 %v4866, %v4878
    %v4942 = vadd.f32 %v4869, %v4878
    %v4943 = vadd.f32 %v4872, %v4878
    %v4944 = vxor.u32 %v4880, 2147483648
    %v4945 = vxor.u32 %v4881, 2147483648
    %v4946 = vxor.u32 %v4882, 2147483648
    %v4947 = vxor.u32 %v4883, 2147483648
    %v4948 = vxor.u32 %v4884, 2147483648
    %v4949 = vxor.u32 %v4885, 2147483648
    %v4950 = vxor.u32 %v4886, 2147483648
    %v4951 = vxor.u32 %v4887, 2147483648
    %v4952 = vxor.u32 %v4888, 2147483648
    %v4953 = vxor.u32 %v4889, 2147483648
    %v4954 = vxor.u32 %v4890, 2147483648
    %v4955 = vxor.u32 %v4891, 2147483648
    %v4956 = vxor.u32 %v4892, 2147483648
    %v4957 = vxor.u32 %v4893, 2147483648
    %v4958 = vxor.u32 %v4894, 2147483648
    %v4959 = vxor.u32 %v4895, 2147483648
    %v4960 = vxor.u32 %v4896, 2147483648
    %v4961 = vxor.u32 %v4897, 2147483648
    %v4962 = vxor.u32 %v4898, 2147483648
    %v4963 = vxor.u32 %v4899, 2147483648
    %v4964 = vxor.u32 %v4900, 2147483648
    %v4965 = vxor.u32 %v4901, 2147483648
    %v4966 = vxor.u32 %v4902, 2147483648
    %v4967 = vxor.u32 %v4903, 2147483648
    %v4968 = vxor.u32 %v4904, 2147483648
    %v4969 = vxor.u32 %v4905, 2147483648
    %v4970 = vxor.u32 %v4906, 2147483648
    %v4971 = vxor.u32 %v4907, 2147483648
    %v4972 = vxor.u32 %v4908, 2147483648
    %v4973 = vxor.u32 %v4909, 2147483648
    %v4974 = vxor.u32 %v4910, 2147483648
    %v4975 = vxor.u32 %v4911, 2147483648
    %v4976 = vxor.u32 %v4912, 2147483648
    %v4977 = vxor.u32 %v4913, 2147483648
    %v4978 = vxor.u32 %v4914, 2147483648
    %v4979 = vxor.u32 %v4915, 2147483648
    %v4980 = vxor.u32 %v4916, 2147483648
    %v4981 = vxor.u32 %v4917, 2147483648
    %v4982 = vxor.u32 %v4918, 2147483648
    %v4983 = vxor.u32 %v4919, 2147483648
    %v4984 = vxor.u32 %v4920, 2147483648
    %v4985 = vxor.u32 %v4921, 2147483648
    %v4986 = vxor.u32 %v4922, 2147483648
    %v4987 = vxor.u32 %v4923, 2147483648
    %v4988 = vxor.u32 %v4924, 2147483648
    %v4989 = vxor.u32 %v4925, 2147483648
    %v4990 = vxor.u32 %v4926, 2147483648
    %v4991 = vxor.u32 %v4927, 2147483648
    %v4992 = vxor.u32 %v4928, 2147483648
    %v4993 = vxor.u32 %v4929, 2147483648
    %v4994 = vxor.u32 %v4930, 2147483648
    %v4995 = vxor.u32 %v4931, 2147483648
    %v4996 = vxor.u32 %v4932, 2147483648
    %v4997 = vxor.u32 %v4933, 2147483648
    %v4998 = vxor.u32 %v4934, 2147483648
    %v4999 = vxor.u32 %v4935, 2147483648
    %v5000 = vxor.u32 %v4936, 2147483648
    %v5001 = vxor.u32 %v4937, 2147483648
    %v5002 = vxor.u32 %v4938, 2147483648
    %v5003 = vxor.u32 %v4939, 2147483648
    %v5004 = vxor.u32 %v4940, 2147483648
    %v5005 = vxor.u32 %v4941, 2147483648
    %v5006 = vxor.u32 %v4942, 2147483648
    %v5007 = vxor.u32 %v4943, 2147483648
    %v5008 = vmul.f32 %v4944, 1.442695
    %v5009 = vpow.pop %v5008
    %v5010 = vmul.f32 %v4945, 1.442695
    %v5011 = vpow.pop %v5010
    %v5012 = vmul.f32 %v4946, 1.442695
    %v5013 = vpow.pop %v5012
    %v5014 = vmul.f32 %v4947, 1.442695
    %v5015 = vpow.pop %v5014
    %v5016 = vmul.f32 %v4948, 1.442695
    %v5017 = vpow.pop %v5016
    %v5018 = vmul.f32 %v4949, 1.442695
    %v5019 = vpow.pop %v5018
    %v5020 = vmul.f32 %v4950, 1.442695
    %v5021 = vpow.pop %v5020
    %v5022 = vmul.f32 %v4951, 1.442695
    %v5023 = vpow.pop %v5022
    %v5024 = vmul.f32 %v4952, 1.442695
    %v5025 = vpow.pop %v5024
    %v5026 = vmul.f32 %v4953, 1.442695
    %v5027 = vpow.pop %v5026
    %v5028 = vmul.f32 %v4954, 1.442695
    %v5029 = vpow.pop %v5028
    %v5030 = vmul.f32 %v4955, 1.442695
    %v5031 = vpow.pop %v5030
    %v5032 = vmul.f32 %v4956, 1.442695
    %v5033 = vpow.pop %v5032
    %v5034 = vmul.f32 %v4957, 1.442695
    %v5035 = vpow.pop %v5034
    %v5036 = vmul.f32 %v4958, 1.442695
    %v5037 = vpow.pop %v5036
    %v5038 = vmul.f32 %v4959, 1.442695
    %v5039 = vpow.pop %v5038
    %v5040 = vmul.f32 %v4960, 1.442695
    %v5041 = vpow.pop %v5040
    %v5042 = vmul.f32 %v4961, 1.442695
    %v5043 = vpow.pop %v5042
    %v5044 = vmul.f32 %v4962, 1.442695
    %v5045 = vpow.pop %v5044
    %v5046 = vmul.f32 %v4963, 1.442695
    %v5047 = vpow.pop %v5046
    %v5048 = vmul.f32 %v4964, 1.442695
    %v5049 = vpow.pop %v5048
    %v5050 = vmul.f32 %v4965, 1.442695
    %v5051 = vpow.pop %v5050
    %v5052 = vmul.f32 %v4966, 1.442695
    %v5053 = vpow.pop %v5052
    %v5054 = vmul.f32 %v4967, 1.442695
    %v5055 = vpow.pop %v5054
    %v5056 = vmul.f32 %v4968, 1.442695
    %v5057 = vpow.pop %v5056
    %v5058 = vmul.f32 %v4969, 1.442695
    %v5059 = vpow.pop %v5058
    %v5060 = vmul.f32 %v4970, 1.442695
    %v5061 = vpow.pop %v5060
    %v5062 = vmul.f32 %v4971, 1.442695
    %v5063 = vpow.pop %v5062
    %v5064 = vmul.f32 %v4972, 1.442695
    %v5065 = vpow.pop %v5064
    %v5066 = vmul.f32 %v4973, 1.442695
    %v5067 = vpow.pop %v5066
    %v5068 = vmul.f32 %v4974, 1.442695
    %v5069 = vpow.pop %v5068
    %v5070 = vmul.f32 %v4975, 1.442695
    %v5071 = vpow.pop %v5070
    %v5072 = vmul.f32 %v4976, 1.442695
    %v5073 = vpow.pop %v5072
    %v5074 = vmul.f32 %v4977, 1.442695
    %v5075 = vpow.pop %v5074
    %v5076 = vmul.f32 %v4978, 1.442695
    %v5077 = vpow.pop %v5076
    %v5078 = vmul.f32 %v4979, 1.442695
    %v5079 = vpow.pop %v5078
    %v5080 = vmul.f32 %v4980, 1.442695
    %v5081 = vpow.pop %v5080
    %v5082 = vmul.f32 %v4981, 1.442695
    %v5083 = vpow.pop %v5082
    %v5084 = vmul.f32 %v4982, 1.442695
    %v5085 = vpow.pop %v5084
    %v5086 = vmul.f32 %v4983, 1.442695
    %v5087 = vpow.pop %v5086
    %v5088 = vmul.f32 %v4984, 1.442695
    %v5089 = vpow.pop %v5088
    %v5090 = vmul.f32 %v4985, 1.442695
    %v5091 = vpow.pop %v5090
    %v5092 = vmul.f32 %v4986, 1.442695
    %v5093 = vpow.pop %v5092
    %v5094 = vmul.f32 %v4987, 1.442695
    %v5095 = vpow.pop %v5094
    %v5096 = vmul.f32 %v4988, 1.442695
    %v5097 = vpow.pop %v5096
    %v5098 = vmul.f32 %v4989, 1.442695
    %v5099 = vpow.pop %v5098
    %v5100 = vmul.f32 %v4990, 1.442695
    %v5101 = vpow.pop %v5100
    %v5102 = vmul.f32 %v4991, 1.442695
    %v5103 = vpow.pop %v5102
    %v5104 = vmul.f32 %v4992, 1.442695
    %v5105 = vpow.pop %v5104
    %v5106 = vmul.f32 %v4993, 1.442695
    %v5107 = vpow.pop %v5106
    %v5108 = vmul.f32 %v4994, 1.442695
    %v5109 = vpow.pop %v5108
    %v5110 = vmul.f32 %v4995, 1.442695
    %v5111 = vpow.pop %v5110
    %v5112 = vmul.f32 %v4996, 1.442695
    %v5113 = vpow.pop %v5112
    %v5114 = vmul.f32 %v4997, 1.442695
    %v5115 = vpow.pop %v5114
    %v5116 = vmul.f32 %v4998, 1.442695
    %v5117 = vpow.pop %v5116
    %v5118 = vmul.f32 %v4999, 1.442695
    %v5119 = vpow.pop %v5118
    %v5120 = vmul.f32 %v5000, 1.442695
    %v5121 = vpow.pop %v5120
    %v5122 = vmul.f32 %v5001, 1.442695
    %v5123 = vpow.pop %v5122
    %v5124 = vmul.f32 %v5002, 1.442695
    %v5125 = vpow.pop %v5124
    %v5126 = vmul.f32 %v5003, 1.442695
    %v5127 = vpow.pop %v5126
    %v5128 = vmul.f32 %v5004, 1.442695
    %v5129 = vpow.pop %v5128
    %v5130 = vmul.f32 %v5005, 1.442695
    %v5131 = vpow.pop %v5130
    %v5132 = vmul.f32 %v5006, 1.442695
    %v5133 = vpow.pop %v5132
    %v5134 = vmul.f32 %v5007, 1.442695
    %v5135 = vpow.pop %v5134
    %v5136 = vadd.f32 %v5009, 1.0
    %v5137 = vadd.f32 %v5011, 1.0
    %v5138 = vadd.f32 %v5013, 1.0
    %v5139 = vadd.f32 %v5015, 1.0
    %v5140 = vadd.f32 %v5017, 1.0
    %v5141 = vadd.f32 %v5019, 1.0
    %v5142 = vadd.f32 %v5021, 1.0
    %v5143 = vadd.f32 %v5023, 1.0
    %v5144 = vadd.f32 %v5025, 1.0
    %v5145 = vadd.f32 %v5027, 1.0
    %v5146 = vadd.f32 %v5029, 1.0
    %v5147 = vadd.f32 %v5031, 1.0
    %v5148 = vadd.f32 %v5033, 1.0
    %v5149 = vadd.f32 %v5035, 1.0
    %v5150 = vadd.f32 %v5037, 1.0
    %v5151 = vadd.f32 %v5039, 1.0
    %v5152 = vadd.f32 %v5041, 1.0
    %v5153 = vadd.f32 %v5043, 1.0
    %v5154 = vadd.f32 %v5045, 1.0
    %v5155 = vadd.f32 %v5047, 1.0
    %v5156 = vadd.f32 %v5049, 1.0
    %v5157 = vadd.f32 %v5051, 1.0
    %v5158 = vadd.f32 %v5053, 1.0
    %v5159 = vadd.f32 %v5055, 1.0
    %v5160 = vadd.f32 %v5057, 1.0
    %v5161 = vadd.f32 %v5059, 1.0
    %v5162 = vadd.f32 %v5061, 1.0
    %v5163 = vadd.f32 %v5063, 1.0
    %v5164 = vadd.f32 %v5065, 1.0
    %v5165 = vadd.f32 %v5067, 1.0
    %v5166 = vadd.f32 %v5069, 1.0
    %v5167 = vadd.f32 %v5071, 1.0
    %v5168 = vadd.f32 %v5073, 1.0
    %v5169 = vadd.f32 %v5075, 1.0
    %v5170 = vadd.f32 %v5077, 1.0
    %v5171 = vadd.f32 %v5079, 1.0
    %v5172 = vadd.f32 %v5081, 1.0
    %v5173 = vadd.f32 %v5083, 1.0
    %v5174 = vadd.f32 %v5085, 1.0
    %v5175 = vadd.f32 %v5087, 1.0
    %v5176 = vadd.f32 %v5089, 1.0
    %v5177 = vadd.f32 %v5091, 1.0
    %v5178 = vadd.f32 %v5093, 1.0
    %v5179 = vadd.f32 %v5095, 1.0
    %v5180 = vadd.f32 %v5097, 1.0
    %v5181 = vadd.f32 %v5099, 1.0
    %v5182 = vadd.f32 %v5101, 1.0
    %v5183 = vadd.f32 %v5103, 1.0
    %v5184 = vadd.f32 %v5105, 1.0
    %v5185 = vadd.f32 %v5107, 1.0
    %v5186 = vadd.f32 %v5109, 1.0
    %v5187 = vadd.f32 %v5111, 1.0
    %v5188 = vadd.f32 %v5113, 1.0
    %v5189 = vadd.f32 %v5115, 1.0
    %v5190 = vadd.f32 %v5117, 1.0
    %v5191 = vadd.f32 %v5119, 1.0
    %v5192 = vadd.f32 %v5121, 1.0
    %v5193 = vadd.f32 %v5123, 1.0
    %v5194 = vadd.f32 %v5125, 1.0
    %v5195 = vadd.f32 %v5127, 1.0
    %v5196 = vadd.f32 %v5129, 1.0
    %v5197 = vadd.f32 %v5131, 1.0
    %v5198 = vadd.f32 %v5133, 1.0
    %v5199 = vadd.f32 %v5135, 1.0
    %v5200 = vrcp.pop %v5136
    %v5201 = vmul.f32 1.0, %v5200
    %v5202 = vrcp.pop %v5137
    %v5203 = vmul.f32 1.0, %v5202
    %v5204 = vrcp.pop %v5138
    %v5205 = vmul.f32 1.0, %v5204
    %v5206 = vrcp.pop %v5139
    %v5207 = vmul.f32 1.0, %v5206
    %v5208 = vrcp.pop %v5140
    %v5209 = vmul.f32 1.0, %v5208
    %v5210 = vrcp.pop %v5141
    %v5211 = vmul.f32 1.0, %v5210
    %v5212 = vrcp.pop %v5142
    %v5213 = vmul.f32 1.0, %v5212
    %v5214 = vrcp.pop %v5143
    %v5215 = vmul.f32 1.0, %v5214
    %v5216 = vrcp.pop %v5144
    %v5217 = vmul.f32 1.0, %v5216
    %v5218 = vrcp.pop %v5145
    %v5219 = vmul.f32 1.0, %v5218
    %v5220 = vrcp.pop %v5146
    %v5221 = vmul.f32 1.0, %v5220
    %v5222 = vrcp.pop %v5147
    %v5223 = vmul.f32 1.0, %v5222
    %v5224 = vrcp.pop %v5148
    %v5225 = vmul.f32 1.0, %v5224
    %v5226 = vrcp.pop %v5149
    %v5227 = vmul.f32 1.0, %v5226
    %v5228 = vrcp.pop %v5150
    %v5229 = vmul.f32 1.0, %v5228
    %v5230 = vrcp.pop %v5151
    %v5231 = vmul.f32 1.0, %v5230
    %v5232 = vrcp.pop %v5152
    %v5233 = vmul.f32 1.0, %v5232
    %v5234 = vrcp.pop %v5153
    %v5235 = vmul.f32 1.0, %v5234
    %v5236 = vrcp.pop %v5154
    %v5237 = vmul.f32 1.0, %v5236
    %v5238 = vrcp.pop %v5155
    %v5239 = vmul.f32 1.0, %v5238
    %v5240 = vrcp.pop %v5156
    %v5241 = vmul.f32 1.0, %v5240
    %v5242 = vrcp.pop %v5157
    %v5243 = vmul.f32 1.0, %v5242
    %v5244 = vrcp.pop %v5158
    %v5245 = vmul.f32 1.0, %v5244
    %v5246 = vrcp.pop %v5159
    %v5247 = vmul.f32 1.0, %v5246
    %v5248 = vrcp.pop %v5160
    %v5249 = vmul.f32 1.0, %v5248
    %v5250 = vrcp.pop %v5161
    %v5251 = vmul.f32 1.0, %v5250
    %v5252 = vrcp.pop %v5162
    %v5253 = vmul.f32 1.0, %v5252
    %v5254 = vrcp.pop %v5163
    %v5255 = vmul.f32 1.0, %v5254
    %v5256 = vrcp.pop %v5164
    %v5257 = vmul.f32 1.0, %v5256
    %v5258 = vrcp.pop %v5165
    %v5259 = vmul.f32 1.0, %v5258
    %v5260 = vrcp.pop %v5166
    %v5261 = vmul.f32 1.0, %v5260
    %v5262 = vrcp.pop %v5167
    %v5263 = vmul.f32 1.0, %v5262
    %v5264 = vrcp.pop %v5168
    %v5265 = vmul.f32 1.0, %v5264
    %v5266 = vrcp.pop %v5169
    %v5267 = vmul.f32 1.0, %v5266
    %v5268 = vrcp.pop %v5170
    %v5269 = vmul.f32 1.0, %v5268
    %v5270 = vrcp.pop %v5171
    %v5271 = vmul.f32 1.0, %v5270
    %v5272 = vrcp.pop %v5172
    %v5273 = vmul.f32 1.0, %v5272
    %v5274 = vrcp.pop %v5173
    %v5275 = vmul.f32 1.0, %v5274
    %v5276 = vrcp.pop %v5174
    %v5277 = vmul.f32 1.0, %v5276
    %v5278 = vrcp.pop %v5175
    %v5279 = vmul.f32 1.0, %v5278
    %v5280 = vrcp.pop %v5176
    %v5281 = vmul.f32 1.0, %v5280
    %v5282 = vrcp.pop %v5177
    %v5283 = vmul.f32 1.0, %v5282
    %v5284 = vrcp.pop %v5178
    %v5285 = vmul.f32 1.0, %v5284
    %v5286 = vrcp.pop %v5179
    %v5287 = vmul.f32 1.0, %v5286
    %v5288 = vrcp.pop %v5180
    %v5289 = vmul.f32 1.0, %v5288
    %v5290 = vrcp.pop %v5181
    %v5291 = vmul.f32 1.0, %v5290
    %v5292 = vrcp.pop %v5182
    %v5293 = vmul.f32 1.0, %v5292
    %v5294 = vrcp.pop %v5183
    %v5295 = vmul.f32 1.0, %v5294
    %v5296 = vrcp.pop %v5184
    %v5297 = vmul.f32 1.0, %v5296
    %v5298 = vrcp.pop %v5185
    %v5299 = vmul.f32 1.0, %v5298
    %v5300 = vrcp.pop %v5186
    %v5301 = vmul.f32 1.0, %v5300
    %v5302 = vrcp.pop %v5187
    %v5303 = vmul.f32 1.0, %v5302
    %v5304 = vrcp.pop %v5188
    %v5305 = vmul.f32 1.0, %v5304
    %v5306 = vrcp.pop %v5189
    %v5307 = vmul.f32 1.0, %v5306
    %v5308 = vrcp.pop %v5190
    %v5309 = vmul.f32 1.0, %v5308
    %v5310 = vrcp.pop %v5191
    %v5311 = vmul.f32 1.0, %v5310
    %v5312 = vrcp.pop %v5192
    %v5313 = vmul.f32 1.0, %v5312
    %v5314 = vrcp.pop %v5193
    %v5315 = vmul.f32 1.0, %v5314
    %v5316 = vrcp.pop %v5194
    %v5317 = vmul.f32 1.0, %v5316
    %v5318 = vrcp.pop %v5195
    %v5319 = vmul.f32 1.0, %v5318
    %v5320 = vrcp.pop %v5196
    %v5321 = vmul.f32 1.0, %v5320
    %v5322 = vrcp.pop %v5197
    %v5323 = vmul.f32 1.0, %v5322
    %v5324 = vrcp.pop %v5198
    %v5325 = vmul.f32 1.0, %v5324
    %v5326 = vrcp.pop %v5199
    %v5327 = vmul.f32 1.0, %v5326
    %5328 = vst.msk [vmem:[#allocation6] sm:$0xff] %vm3901, %v3782
    %5329 = vst.msk [vmem:[#allocation6 + $0x8] sm:$0xff] %vm3901, %v3783
    %5330 = vst.msk [vmem:[#allocation6 + $0x10] sm:$0xff] %vm3901, %v3784
    %5331 = vst.msk [vmem:[#allocation6 + $0x18] sm:$0xff] %vm3901, %v3785
    %5332 = vst.msk [vmem:[#allocation6 + $0x20] sm:$0xff] %vm3901, %v3786
    %5333 = vst.msk [vmem:[#allocation6 + $0x28] sm:$0xff] %vm3901, %v3787
    %5334 = vst.msk [vmem:[#allocation6 + $0x30] sm:$0xff] %vm3901, %v3788
    %5335 = vst.msk [vmem:[#allocation6 + $0x38] sm:$0xff] %vm3901, %v3789
    %5336 = vst.msk [vmem:[#allocation6 + $0x40] sm:$0xff] %vm3901, %v3790
    %5337 = vst.msk [vmem:[#allocation6 + $0x48] sm:$0xff] %vm3901, %v3791
    %5338 = vst.msk [vmem:[#allocation6 + $0x50] sm:$0xff] %vm3901, %v3792
    %5339 = vst.msk [vmem:[#allocation6 + $0x58] sm:$0xff] %vm3901, %v3793
    %5340 = vst.msk [vmem:[#allocation6 + $0x60] sm:$0xff] %vm3901, %v3794
    %5341 = vst.msk [vmem:[#allocation6 + $0x68] sm:$0xff] %vm3901, %v3795
    %5342 = vst.msk [vmem:[#allocation6 + $0x70] sm:$0xff] %vm3901, %v3796
    %5343 = vst.msk [vmem:[#allocation6 + $0x78] sm:$0xff] %vm3901, %v3797
    %5344 = vst.msk [vmem:[#allocation6 + $0x80] sm:$0xff] %vm3901, %v3798
    %5345 = vst.msk [vmem:[#allocation6 + $0x88] sm:$0xff] %vm3901, %v3799
    %5346 = vst.msk [vmem:[#allocation6 + $0x90] sm:$0xff] %vm3901, %v3800
    %5347 = vst.msk [vmem:[#allocation6 + $0x98] sm:$0xff] %vm3901, %v3801
    %5348 = vst.msk [vmem:[#allocation6 + $0xa0] sm:$0xff] %vm3901, %v3802
    %5349 = vst.msk [vmem:[#allocation6 + $0xa8] sm:$0xff] %vm3901, %v3803
    %5350 = vst.msk [vmem:[#allocation6 + $0xb0] sm:$0xff] %vm3901, %v3804
    %5351 = vst.msk [vmem:[#allocation6 + $0xb8] sm:$0xff] %vm3901, %v3805
    %5352 = vst.msk [vmem:[#allocation6 + $0xc0] sm:$0xff] %vm3901, %v3806
    %5353 = vst.msk [vmem:[#allocation6 + $0xc8] sm:$0xff] %vm3901, %v3807
    %5354 = vst.msk [vmem:[#allocation6 + $0xd0] sm:$0xff] %vm3901, %v3808
    %5355 = vst.msk [vmem:[#allocation6 + $0xd8] sm:$0xff] %vm3901, %v3809
    %5356 = vst.msk [vmem:[#allocation6 + $0xe0] sm:$0xff] %vm3901, %v3810
    %5357 = vst.msk [vmem:[#allocation6 + $0xe8] sm:$0xff] %vm3901, %v3811
    %5358 = vst.msk [vmem:[#allocation6 + $0xf0] sm:$0xff] %vm3901, %v3812
    %5359 = vst.msk [vmem:[#allocation6 + $0xf8] sm:$0xff] %vm3901, %v3813
    %5360 = vst.msk [vmem:[#allocation6 + $0x100] sm:$0xff] %vm3901, %v3814
    %5361 = vst.msk [vmem:[#allocation6 + $0x108] sm:$0xff] %vm3901, %v3815
    %5362 = vst.msk [vmem:[#allocation6 + $0x110] sm:$0xff] %vm3901, %v3816
    %5363 = vst.msk [vmem:[#allocation6 + $0x118] sm:$0xff] %vm3901, %v3817
    %5364 = vst.msk [vmem:[#allocation6 + $0x120] sm:$0xff] %vm3901, %v3818
    %5365 = vst.msk [vmem:[#allocation6 + $0x128] sm:$0xff] %vm3901, %v3819
    %5366 = vst.msk [vmem:[#allocation6 + $0x130] sm:$0xff] %vm3901, %v3820
    %5367 = vst.msk [vmem:[#allocation6 + $0x138] sm:$0xff] %vm3901, %v3821
    %5368 = vst.msk [vmem:[#allocation6 + $0x140] sm:$0xff] %vm3901, %v3822
    %5369 = vst.msk [vmem:[#allocation6 + $0x148] sm:$0xff] %vm3901, %v3823
    %5370 = vst.msk [vmem:[#allocation6 + $0x150] sm:$0xff] %vm3901, %v3824
    %5371 = vst.msk [vmem:[#allocation6 + $0x158] sm:$0xff] %vm3901, %v3825
    %5372 = vst.msk [vmem:[#allocation6 + $0x160] sm:$0xff] %vm3901, %v3826
    %5373 = vst.msk [vmem:[#allocation6 + $0x168] sm:$0xff] %vm3901, %v3827
    %5374 = vst.msk [vmem:[#allocation6 + $0x170] sm:$0xff] %vm3901, %v3828
    %5375 = vst.msk [vmem:[#allocation6 + $0x178] sm:$0xff] %vm3901, %v3829
    %5376 = vst.msk [vmem:[#allocation6 + $0x180] sm:$0xff] %vm3901, %v3830
    %5377 = vst.msk [vmem:[#allocation6 + $0x188] sm:$0xff] %vm3901, %v3831
    %5378 = vst.msk [vmem:[#allocation6 + $0x190] sm:$0xff] %vm3901, %v3832
    %5379 = vst.msk [vmem:[#allocation6 + $0x198] sm:$0xff] %vm3901, %v3833
    %5380 = vst.msk [vmem:[#allocation6 + $0x1a0] sm:$0xff] %vm3901, %v3834
    %5381 = vst.msk [vmem:[#allocation6 + $0x1a8] sm:$0xff] %vm3901, %v3835
    %5382 = vst.msk [vmem:[#allocation6 + $0x1b0] sm:$0xff] %vm3901, %v3836
    %5383 = vst.msk [vmem:[#allocation6 + $0x1b8] sm:$0xff] %vm3901, %v3837
    %5384 = vst.msk [vmem:[#allocation6 + $0x1c0] sm:$0xff] %vm3901, %v3838
    %5385 = vst.msk [vmem:[#allocation6 + $0x1c8] sm:$0xff] %vm3901, %v3839
    %5386 = vst.msk [vmem:[#allocation6 + $0x1d0] sm:$0xff] %vm3901, %v3840
    %5387 = vst.msk [vmem:[#allocation6 + $0x1d8] sm:$0xff] %vm3901, %v3841
    %5388 = vst.msk [vmem:[#allocation6 + $0x1e0] sm:$0xff] %vm3901, %v3842
    %5389 = vst.msk [vmem:[#allocation6 + $0x1e8] sm:$0xff] %vm3901, %v3843
    %5390 = vst.msk [vmem:[#allocation6 + $0x1f0] sm:$0xff] %vm3901, %v3844
    %5391 = vst.msk [vmem:[#allocation6 + $0x1f8] sm:$0xff] %vm3901, %v3845
    %5456 = vrot.lane.b32.xlu0 %v4033, 32
    %v5457 = vpop.permute.xlu0 %5456
    %5458 = vrot.lane.b32.xlu0 %v4036, 32
    %v5459 = vpop.permute.xlu0 %5458
    %5460 = vrot.lane.b32.xlu0 %v4041, 32
    %v5461 = vpop.permute.xlu0 %5460
    %5462 = vrot.lane.b32.xlu0 %v4044, 32
    %v5463 = vpop.permute.xlu0 %5462
    %5464 = vrot.lane.b32.xlu0 %v4049, 32
    %v5465 = vpop.permute.xlu0 %5464
    %5466 = vrot.lane.b32.xlu0 %v4052, 32
    %v5467 = vpop.permute.xlu0 %5466
    %5468 = vrot.lane.b32.xlu0 %v4057, 32
    %v5469 = vpop.permute.xlu0 %5468
    %5470 = vrot.lane.b32.xlu0 %v4060, 32
    %v5471 = vpop.permute.xlu0 %5470
    %5472 = vrot.lane.b32.xlu0 %v4065, 32
    %v5473 = vpop.permute.xlu0 %5472
    %5474 = vrot.lane.b32.xlu0 %v4068, 32
    %v5475 = vpop.permute.xlu0 %5474
    %5476 = vrot.lane.b32.xlu0 %v4073, 32
    %v5477 = vpop.permute.xlu0 %5476
    %5478 = vrot.lane.b32.xlu0 %v4076, 32
    %v5479 = vpop.permute.xlu0 %5478
    %5480 = vrot.lane.b32.xlu0 %v4081, 32
    %v5481 = vpop.permute.xlu0 %5480
    %5482 = vrot.lane.b32.xlu0 %v4084, 32
    %v5483 = vpop.permute.xlu0 %5482
    %5484 = vrot.lane.b32.xlu0 %v4089, 32
    %v5485 = vpop.permute.xlu0 %5484
    %5486 = vrot.lane.b32.xlu0 %v4092, 32
    %v5487 = vpop.permute.xlu0 %5486
    %5488 = vrot.lane.b32.xlu0 %v4097, 32
    %v5489 = vpop.permute.xlu0 %5488
    %5490 = vrot.lane.b32.xlu0 %v4100, 32
    %v5491 = vpop.permute.xlu0 %5490
    %5492 = vrot.lane.b32.xlu0 %v4105, 32
    %v5493 = vpop.permute.xlu0 %5492
    %5494 = vrot.lane.b32.xlu0 %v4108, 32
    %v5495 = vpop.permute.xlu0 %5494
    %5496 = vrot.lane.b32.xlu0 %v4113, 32
    %v5497 = vpop.permute.xlu0 %5496
    %5498 = vrot.lane.b32.xlu0 %v4116, 32
    %v5499 = vpop.permute.xlu0 %5498
    %5500 = vrot.lane.b32.xlu0 %v4121, 32
    %v5501 = vpop.permute.xlu0 %5500
    %5502 = vrot.lane.b32.xlu0 %v4124, 32
    %v5503 = vpop.permute.xlu0 %5502
    %5504 = vrot.lane.b32.xlu0 %v4129, 32
    %v5505 = vpop.permute.xlu0 %5504
    %5506 = vrot.lane.b32.xlu0 %v4132, 32
    %v5507 = vpop.permute.xlu0 %5506
    %5508 = vrot.lane.b32.xlu0 %v4137, 32
    %v5509 = vpop.permute.xlu0 %5508
    %5510 = vrot.lane.b32.xlu0 %v4140, 32
    %v5511 = vpop.permute.xlu0 %5510
    %5512 = vrot.lane.b32.xlu0 %v4145, 32
    %v5513 = vpop.permute.xlu0 %5512
    %5514 = vrot.lane.b32.xlu0 %v4148, 32
    %v5515 = vpop.permute.xlu0 %5514
    %5516 = vrot.lane.b32.xlu0 %v4153, 32
    %v5517 = vpop.permute.xlu0 %5516
    %5518 = vrot.lane.b32.xlu0 %v4156, 32
    %v5519 = vpop.permute.xlu0 %5518
    %5520 = vrot.lane.b32.xlu0 %v4161, 32
    %v5521 = vpop.permute.xlu0 %5520
    %5522 = vrot.lane.b32.xlu0 %v4164, 32
    %v5523 = vpop.permute.xlu0 %5522
    %5524 = vrot.lane.b32.xlu0 %v4169, 32
    %v5525 = vpop.permute.xlu0 %5524
    %5526 = vrot.lane.b32.xlu0 %v4172, 32
    %v5527 = vpop.permute.xlu0 %5526
    %5528 = vrot.lane.b32.xlu0 %v4177, 32
    %v5529 = vpop.permute.xlu0 %5528
    %5530 = vrot.lane.b32.xlu0 %v4180, 32
    %v5531 = vpop.permute.xlu0 %5530
    %5532 = vrot.lane.b32.xlu0 %v4185, 32
    %v5533 = vpop.permute.xlu0 %5532
    %5534 = vrot.lane.b32.xlu0 %v4188, 32
    %v5535 = vpop.permute.xlu0 %5534
    %5536 = vrot.lane.b32.xlu0 %v4193, 32
    %v5537 = vpop.permute.xlu0 %5536
    %5538 = vrot.lane.b32.xlu0 %v4196, 32
    %v5539 = vpop.permute.xlu0 %5538
    %5540 = vrot.lane.b32.xlu0 %v4201, 32
    %v5541 = vpop.permute.xlu0 %5540
    %5542 = vrot.lane.b32.xlu0 %v4204, 32
    %v5543 = vpop.permute.xlu0 %5542
    %5544 = vrot.lane.b32.xlu0 %v4209, 32
    %v5545 = vpop.permute.xlu0 %5544
    %5546 = vrot.lane.b32.xlu0 %v4212, 32
    %v5547 = vpop.permute.xlu0 %5546
    %5548 = vrot.lane.b32.xlu0 %v4217, 32
    %v5549 = vpop.permute.xlu0 %5548
    %5550 = vrot.lane.b32.xlu0 %v4220, 32
    %v5551 = vpop.permute.xlu0 %5550
    %5552 = vrot.lane.b32.xlu0 %v4225, 32
    %v5553 = vpop.permute.xlu0 %5552
    %5554 = vrot.lane.b32.xlu0 %v4228, 32
    %v5555 = vpop.permute.xlu0 %5554
    %5556 = vrot.lane.b32.xlu0 %v4233, 32
    %v5557 = vpop.permute.xlu0 %5556
    %5558 = vrot.lane.b32.xlu0 %v4236, 32
    %v5559 = vpop.permute.xlu0 %5558
    %5560 = vrot.lane.b32.xlu0 %v4241, 32
    %v5561 = vpop.permute.xlu0 %5560
    %5562 = vrot.lane.b32.xlu0 %v4244, 32
    %v5563 = vpop.permute.xlu0 %5562
    %5564 = vrot.lane.b32.xlu0 %v4249, 32
    %v5565 = vpop.permute.xlu0 %5564
    %5566 = vrot.lane.b32.xlu0 %v4252, 32
    %v5567 = vpop.permute.xlu0 %5566
    %5568 = vrot.lane.b32.xlu0 %v4257, 32
    %v5569 = vpop.permute.xlu0 %5568
    %5570 = vrot.lane.b32.xlu0 %v4260, 32
    %v5571 = vpop.permute.xlu0 %5570
    %5572 = vrot.lane.b32.xlu0 %v4265, 32
    %v5573 = vpop.permute.xlu0 %5572
    %5574 = vrot.lane.b32.xlu0 %v4268, 32
    %v5575 = vpop.permute.xlu0 %5574
    %5576 = vrot.lane.b32.xlu0 %v4273, 32
    %v5577 = vpop.permute.xlu0 %5576
    %5578 = vrot.lane.b32.xlu0 %v4276, 32
    %v5579 = vpop.permute.xlu0 %5578
    %5580 = vrot.lane.b32.xlu0 %v4281, 32
    %v5581 = vpop.permute.xlu0 %5580
    %5582 = vrot.lane.b32.xlu0 %v4284, 32
    %v5583 = vpop.permute.xlu0 %5582
    %vm5648 = vcmask 326912
    %5649 = vst.msk [vmem:[#allocation6] sm:$0xff] %vm5648, %v5457
    %5650 = vst.msk [vmem:[#allocation6 + $0x8] sm:$0xff] %vm5648, %v5459
    %5651 = vst.msk [vmem:[#allocation6 + $0x10] sm:$0xff] %vm5648, %v5461
    %5652 = vst.msk [vmem:[#allocation6 + $0x18] sm:$0xff] %vm5648, %v5463
    %5653 = vst.msk [vmem:[#allocation6 + $0x20] sm:$0xff] %vm5648, %v5465
    %5654 = vst.msk [vmem:[#allocation6 + $0x28] sm:$0xff] %vm5648, %v5467
    %5655 = vst.msk [vmem:[#allocation6 + $0x30] sm:$0xff] %vm5648, %v5469
    %5656 = vst.msk [vmem:[#allocation6 + $0x38] sm:$0xff] %vm5648, %v5471
    %5657 = vst.msk [vmem:[#allocation6 + $0x40] sm:$0xff] %vm5648, %v5473
    %5658 = vst.msk [vmem:[#allocation6 + $0x48] sm:$0xff] %vm5648, %v5475
    %5659 = vst.msk [vmem:[#allocation6 + $0x50] sm:$0xff] %vm5648, %v5477
    %5660 = vst.msk [vmem:[#allocation6 + $0x58] sm:$0xff] %vm5648, %v5479
    %5661 = vst.msk [vmem:[#allocation6 + $0x60] sm:$0xff] %vm5648, %v5481
    %5662 = vst.msk [vmem:[#allocation6 + $0x68] sm:$0xff] %vm5648, %v5483
    %5663 = vst.msk [vmem:[#allocation6 + $0x70] sm:$0xff] %vm5648, %v5485
    %5664 = vst.msk [vmem:[#allocation6 + $0x78] sm:$0xff] %vm5648, %v5487
    %5665 = vst.msk [vmem:[#allocation6 + $0x80] sm:$0xff] %vm5648, %v5489
    %5666 = vst.msk [vmem:[#allocation6 + $0x88] sm:$0xff] %vm5648, %v5491
    %5667 = vst.msk [vmem:[#allocation6 + $0x90] sm:$0xff] %vm5648, %v5493
    %5668 = vst.msk [vmem:[#allocation6 + $0x98] sm:$0xff] %vm5648, %v5495
    %5669 = vst.msk [vmem:[#allocation6 + $0xa0] sm:$0xff] %vm5648, %v5497
    %5670 = vst.msk [vmem:[#allocation6 + $0xa8] sm:$0xff] %vm5648, %v5499
    %5671 = vst.msk [vmem:[#allocation6 + $0xb0] sm:$0xff] %vm5648, %v5501
    %5672 = vst.msk [vmem:[#allocation6 + $0xb8] sm:$0xff] %vm5648, %v5503
    %5673 = vst.msk [vmem:[#allocation6 + $0xc0] sm:$0xff] %vm5648, %v5505
    %5674 = vst.msk [vmem:[#allocation6 + $0xc8] sm:$0xff] %vm5648, %v5507
    %5675 = vst.msk [vmem:[#allocation6 + $0xd0] sm:$0xff] %vm5648, %v5509
    %5676 = vst.msk [vmem:[#allocation6 + $0xd8] sm:$0xff] %vm5648, %v5511
    %5677 = vst.msk [vmem:[#allocation6 + $0xe0] sm:$0xff] %vm5648, %v5513
    %5678 = vst.msk [vmem:[#allocation6 + $0xe8] sm:$0xff] %vm5648, %v5515
    %5679 = vst.msk [vmem:[#allocation6 + $0xf0] sm:$0xff] %vm5648, %v5517
    %5680 = vst.msk [vmem:[#allocation6 + $0xf8] sm:$0xff] %vm5648, %v5519
    %5681 = vst.msk [vmem:[#allocation6 + $0x100] sm:$0xff] %vm5648, %v5521
    %5682 = vst.msk [vmem:[#allocation6 + $0x108] sm:$0xff] %vm5648, %v5523
    %5683 = vst.msk [vmem:[#allocation6 + $0x110] sm:$0xff] %vm5648, %v5525
    %5684 = vst.msk [vmem:[#allocation6 + $0x118] sm:$0xff] %vm5648, %v5527
    %5685 = vst.msk [vmem:[#allocation6 + $0x120] sm:$0xff] %vm5648, %v5529
    %5686 = vst.msk [vmem:[#allocation6 + $0x128] sm:$0xff] %vm5648, %v5531
    %5687 = vst.msk [vmem:[#allocation6 + $0x130] sm:$0xff] %vm5648, %v5533
    %5688 = vst.msk [vmem:[#allocation6 + $0x138] sm:$0xff] %vm5648, %v5535
    %5689 = vst.msk [vmem:[#allocation6 + $0x140] sm:$0xff] %vm5648, %v5537
    %5690 = vst.msk [vmem:[#allocation6 + $0x148] sm:$0xff] %vm5648, %v5539
    %5691 = vst.msk [vmem:[#allocation6 + $0x150] sm:$0xff] %vm5648, %v5541
    %5692 = vst.msk [vmem:[#allocation6 + $0x158] sm:$0xff] %vm5648, %v5543
    %5693 = vst.msk [vmem:[#allocation6 + $0x160] sm:$0xff] %vm5648, %v5545
    %5694 = vst.msk [vmem:[#allocation6 + $0x168] sm:$0xff] %vm5648, %v5547
    %5695 = vst.msk [vmem:[#allocation6 + $0x170] sm:$0xff] %vm5648, %v5549
    %5696 = vst.msk [vmem:[#allocation6 + $0x178] sm:$0xff] %vm5648, %v5551
    %5697 = vst.msk [vmem:[#allocation6 + $0x180] sm:$0xff] %vm5648, %v5553
    %5698 = vst.msk [vmem:[#allocation6 + $0x188] sm:$0xff] %vm5648, %v5555
    %5699 = vst.msk [vmem:[#allocation6 + $0x190] sm:$0xff] %vm5648, %v5557
    %5700 = vst.msk [vmem:[#allocation6 + $0x198] sm:$0xff] %vm5648, %v5559
    %5701 = vst.msk [vmem:[#allocation6 + $0x1a0] sm:$0xff] %vm5648, %v5561
    %5702 = vst.msk [vmem:[#allocation6 + $0x1a8] sm:$0xff] %vm5648, %v5563
    %5703 = vst.msk [vmem:[#allocation6 + $0x1b0] sm:$0xff] %vm5648, %v5565
    %5704 = vst.msk [vmem:[#allocation6 + $0x1b8] sm:$0xff] %vm5648, %v5567
    %5705 = vst.msk [vmem:[#allocation6 + $0x1c0] sm:$0xff] %vm5648, %v5569
    %5706 = vst.msk [vmem:[#allocation6 + $0x1c8] sm:$0xff] %vm5648, %v5571
    %5707 = vst.msk [vmem:[#allocation6 + $0x1d0] sm:$0xff] %vm5648, %v5573
    %5708 = vst.msk [vmem:[#allocation6 + $0x1d8] sm:$0xff] %vm5648, %v5575
    %5709 = vst.msk [vmem:[#allocation6 + $0x1e0] sm:$0xff] %vm5648, %v5577
    %5710 = vst.msk [vmem:[#allocation6 + $0x1e8] sm:$0xff] %vm5648, %v5579
    %5711 = vst.msk [vmem:[#allocation6 + $0x1f0] sm:$0xff] %vm5648, %v5581
    %5712 = vst.msk [vmem:[#allocation6 + $0x1f8] sm:$0xff] %vm5648, %v5583
    %5714 = vset.pattern.permute.xlu0 0
    %5715 = vperm.xlu0 %5714, %v5201
    %v5716 = vpop.permute.xlu0 %5715
    %5719 = vset.pattern.permute.xlu0 0
    %5720 = vperm.xlu0 %5719, %v5203
    %v5721 = vpop.permute.xlu0 %5720
    %5724 = vset.pattern.permute.xlu0 0
    %5725 = vperm.xlu0 %5724, %v5205
    %v5726 = vpop.permute.xlu0 %5725
    %5729 = vset.pattern.permute.xlu0 0
    %5730 = vperm.xlu0 %5729, %v5207
    %v5731 = vpop.permute.xlu0 %5730
    %5734 = vset.pattern.permute.xlu0 0
    %5735 = vperm.xlu0 %5734, %v5209
    %v5736 = vpop.permute.xlu0 %5735
    %5739 = vset.pattern.permute.xlu0 0
    %5740 = vperm.xlu0 %5739, %v5211
    %v5741 = vpop.permute.xlu0 %5740
    %5744 = vset.pattern.permute.xlu0 0
    %5745 = vperm.xlu0 %5744, %v5213
    %v5746 = vpop.permute.xlu0 %5745
    %5749 = vset.pattern.permute.xlu0 0
    %5750 = vperm.xlu0 %5749, %v5215
    %v5751 = vpop.permute.xlu0 %5750
    %5754 = vset.pattern.permute.xlu0 0
    %5755 = vperm.xlu0 %5754, %v5217
    %v5756 = vpop.permute.xlu0 %5755
    %5759 = vset.pattern.permute.xlu0 0
    %5760 = vperm.xlu0 %5759, %v5219
    %v5761 = vpop.permute.xlu0 %5760
    %5764 = vset.pattern.permute.xlu0 0
    %5765 = vperm.xlu0 %5764, %v5221
    %v5766 = vpop.permute.xlu0 %5765
    %5769 = vset.pattern.permute.xlu0 0
    %5770 = vperm.xlu0 %5769, %v5223
    %v5771 = vpop.permute.xlu0 %5770
    %5774 = vset.pattern.permute.xlu0 0
    %5775 = vperm.xlu0 %5774, %v5225
    %v5776 = vpop.permute.xlu0 %5775
    %5779 = vset.pattern.permute.xlu0 0
    %5780 = vperm.xlu0 %5779, %v5227
    %v5781 = vpop.permute.xlu0 %5780
    %5784 = vset.pattern.permute.xlu0 0
    %5785 = vperm.xlu0 %5784, %v5229
    %v5786 = vpop.permute.xlu0 %5785
    %5789 = vset.pattern.permute.xlu0 0
    %5790 = vperm.xlu0 %5789, %v5231
    %v5791 = vpop.permute.xlu0 %5790
    %5794 = vset.pattern.permute.xlu0 0
    %5795 = vperm.xlu0 %5794, %v5233
    %v5796 = vpop.permute.xlu0 %5795
    %5799 = vset.pattern.permute.xlu0 0
    %5800 = vperm.xlu0 %5799, %v5235
    %v5801 = vpop.permute.xlu0 %5800
    %5804 = vset.pattern.permute.xlu0 0
    %5805 = vperm.xlu0 %5804, %v5237
    %v5806 = vpop.permute.xlu0 %5805
    %5809 = vset.pattern.permute.xlu0 0
    %5810 = vperm.xlu0 %5809, %v5239
    %v5811 = vpop.permute.xlu0 %5810
    %5814 = vset.pattern.permute.xlu0 0
    %5815 = vperm.xlu0 %5814, %v5241
    %v5816 = vpop.permute.xlu0 %5815
    %5819 = vset.pattern.permute.xlu0 0
    %5820 = vperm.xlu0 %5819, %v5243
    %v5821 = vpop.permute.xlu0 %5820
    %5824 = vset.pattern.permute.xlu0 0
    %5825 = vperm.xlu0 %5824, %v5245
    %v5826 = vpop.permute.xlu0 %5825
    %5829 = vset.pattern.permute.xlu0 0
    %5830 = vperm.xlu0 %5829, %v5247
    %v5831 = vpop.permute.xlu0 %5830
    %5834 = vset.pattern.permute.xlu0 0
    %5835 = vperm.xlu0 %5834, %v5249
    %v5836 = vpop.permute.xlu0 %5835
    %5839 = vset.pattern.permute.xlu0 0
    %5840 = vperm.xlu0 %5839, %v5251
    %v5841 = vpop.permute.xlu0 %5840
    %5844 = vset.pattern.permute.xlu0 0
    %5845 = vperm.xlu0 %5844, %v5253
    %v5846 = vpop.permute.xlu0 %5845
    %5849 = vset.pattern.permute.xlu0 0
    %5850 = vperm.xlu0 %5849, %v5255
    %v5851 = vpop.permute.xlu0 %5850
    %5854 = vset.pattern.permute.xlu0 0
    %5855 = vperm.xlu0 %5854, %v5257
    %v5856 = vpop.permute.xlu0 %5855
    %5859 = vset.pattern.permute.xlu0 0
    %5860 = vperm.xlu0 %5859, %v5259
    %v5861 = vpop.permute.xlu0 %5860
    %5864 = vset.pattern.permute.xlu0 0
    %5865 = vperm.xlu0 %5864, %v5261
    %v5866 = vpop.permute.xlu0 %5865
    %5869 = vset.pattern.permute.xlu0 0
    %5870 = vperm.xlu0 %5869, %v5263
    %v5871 = vpop.permute.xlu0 %5870
    %5874 = vset.pattern.permute.xlu0 0
    %5875 = vperm.xlu0 %5874, %v5265
    %v5876 = vpop.permute.xlu0 %5875
    %5879 = vset.pattern.permute.xlu0 0
    %5880 = vperm.xlu0 %5879, %v5267
    %v5881 = vpop.permute.xlu0 %5880
    %5884 = vset.pattern.permute.xlu0 0
    %5885 = vperm.xlu0 %5884, %v5269
    %v5886 = vpop.permute.xlu0 %5885
    %5889 = vset.pattern.permute.xlu0 0
    %5890 = vperm.xlu0 %5889, %v5271
    %v5891 = vpop.permute.xlu0 %5890
    %5894 = vset.pattern.permute.xlu0 0
    %5895 = vperm.xlu0 %5894, %v5273
    %v5896 = vpop.permute.xlu0 %5895
    %5899 = vset.pattern.permute.xlu0 0
    %5900 = vperm.xlu0 %5899, %v5275
    %v5901 = vpop.permute.xlu0 %5900
    %5904 = vset.pattern.permute.xlu0 0
    %5905 = vperm.xlu0 %5904, %v5277
    %v5906 = vpop.permute.xlu0 %5905
    %5909 = vset.pattern.permute.xlu0 0
    %5910 = vperm.xlu0 %5909, %v5279
    %v5911 = vpop.permute.xlu0 %5910
    %5914 = vset.pattern.permute.xlu0 0
    %5915 = vperm.xlu0 %5914, %v5281
    %v5916 = vpop.permute.xlu0 %5915
    %5919 = vset.pattern.permute.xlu0 0
    %5920 = vperm.xlu0 %5919, %v5283
    %v5921 = vpop.permute.xlu0 %5920
    %5924 = vset.pattern.permute.xlu0 0
    %5925 = vperm.xlu0 %5924, %v5285
    %v5926 = vpop.permute.xlu0 %5925
    %5929 = vset.pattern.permute.xlu0 0
    %5930 = vperm.xlu0 %5929, %v5287
    %v5931 = vpop.permute.xlu0 %5930
    %5934 = vset.pattern.permute.xlu0 0
    %5935 = vperm.xlu0 %5934, %v5289
    %v5936 = vpop.permute.xlu0 %5935
    %5939 = vset.pattern.permute.xlu0 0
    %5940 = vperm.xlu0 %5939, %v5291
    %v5941 = vpop.permute.xlu0 %5940
    %5944 = vset.pattern.permute.xlu0 0
    %5945 = vperm.xlu0 %5944, %v5293
    %v5946 = vpop.permute.xlu0 %5945
    %5949 = vset.pattern.permute.xlu0 0
    %5950 = vperm.xlu0 %5949, %v5295
    %v5951 = vpop.permute.xlu0 %5950
    %5954 = vset.pattern.permute.xlu0 0
    %5955 = vperm.xlu0 %5954, %v5297
    %v5956 = vpop.permute.xlu0 %5955
    %5959 = vset.pattern.permute.xlu0 0
    %5960 = vperm.xlu0 %5959, %v5299
    %v5961 = vpop.permute.xlu0 %5960
    %5964 = vset.pattern.permute.xlu0 0
    %5965 = vperm.xlu0 %5964, %v5301
    %v5966 = vpop.permute.xlu0 %5965
    %5969 = vset.pattern.permute.xlu0 0
    %5970 = vperm.xlu0 %5969, %v5303
    %v5971 = vpop.permute.xlu0 %5970
    %5974 = vset.pattern.permute.xlu0 0
    %5975 = vperm.xlu0 %5974, %v5305
    %v5976 = vpop.permute.xlu0 %5975
    %5979 = vset.pattern.permute.xlu0 0
    %5980 = vperm.xlu0 %5979, %v5307
    %v5981 = vpop.permute.xlu0 %5980
    %5984 = vset.pattern.permute.xlu0 0
    %5985 = vperm.xlu0 %5984, %v5309
    %v5986 = vpop.permute.xlu0 %5985
    %5989 = vset.pattern.permute.xlu0 0
    %5990 = vperm.xlu0 %5989, %v5311
    %v5991 = vpop.permute.xlu0 %5990
    %5994 = vset.pattern.permute.xlu0 0
    %5995 = vperm.xlu0 %5994, %v5313
    %v5996 = vpop.permute.xlu0 %5995
    %5999 = vset.pattern.permute.xlu0 0
    %6000 = vperm.xlu0 %5999, %v5315
    %v6001 = vpop.permute.xlu0 %6000
    %6004 = vset.pattern.permute.xlu0 0
    %6005 = vperm.xlu0 %6004, %v5317
    %v6006 = vpop.permute.xlu0 %6005
    %6009 = vset.pattern.permute.xlu0 0
    %6010 = vperm.xlu0 %6009, %v5319
    %v6011 = vpop.permute.xlu0 %6010
    %6014 = vset.pattern.permute.xlu0 0
    %6015 = vperm.xlu0 %6014, %v5321
    %v6016 = vpop.permute.xlu0 %6015
    %6019 = vset.pattern.permute.xlu0 0
    %6020 = vperm.xlu0 %6019, %v5323
    %v6021 = vpop.permute.xlu0 %6020
    %6024 = vset.pattern.permute.xlu0 0
    %6025 = vperm.xlu0 %6024, %v5325
    %v6026 = vpop.permute.xlu0 %6025
    %6029 = vset.pattern.permute.xlu0 0
    %6030 = vperm.xlu0 %6029, %v5327
    %v6031 = vpop.permute.xlu0 %6030
    %vm6033 = vcmask 1047872
    %6034 = vst.msk [vmem:[#allocation6] sm:$0xff] %vm6033, %v5716
    %6035 = vst.msk [vmem:[#allocation6 + $0x8] sm:$0xff] %vm6033, %v5721
    %6036 = vst.msk [vmem:[#allocation6 + $0x10] sm:$0xff] %vm6033, %v5726
    %6037 = vst.msk [vmem:[#allocation6 + $0x18] sm:$0xff] %vm6033, %v5731
    %6038 = vst.msk [vmem:[#allocation6 + $0x20] sm:$0xff] %vm6033, %v5736
    %6039 = vst.msk [vmem:[#allocation6 + $0x28] sm:$0xff] %vm6033, %v5741
    %6040 = vst.msk [vmem:[#allocation6 + $0x30] sm:$0xff] %vm6033, %v5746
    %6041 = vst.msk [vmem:[#allocation6 + $0x38] sm:$0xff] %vm6033, %v5751
    %6042 = vst.msk [vmem:[#allocation6 + $0x40] sm:$0xff] %vm6033, %v5756
    %6043 = vst.msk [vmem:[#allocation6 + $0x48] sm:$0xff] %vm6033, %v5761
    %6044 = vst.msk [vmem:[#allocation6 + $0x50] sm:$0xff] %vm6033, %v5766
    %6045 = vst.msk [vmem:[#allocation6 + $0x58] sm:$0xff] %vm6033, %v5771
    %6046 = vst.msk [vmem:[#allocation6 + $0x60] sm:$0xff] %vm6033, %v5776
    %6047 = vst.msk [vmem:[#allocation6 + $0x68] sm:$0xff] %vm6033, %v5781
    %6048 = vst.msk [vmem:[#allocation6 + $0x70] sm:$0xff] %vm6033, %v5786
    %6049 = vst.msk [vmem:[#allocation6 + $0x78] sm:$0xff] %vm6033, %v5791
    %6050 = vst.msk [vmem:[#allocation6 + $0x80] sm:$0xff] %vm6033, %v5796
    %6051 = vst.msk [vmem:[#allocation6 + $0x88] sm:$0xff] %vm6033, %v5801
    %6052 = vst.msk [vmem:[#allocation6 + $0x90] sm:$0xff] %vm6033, %v5806
    %6053 = vst.msk [vmem:[#allocation6 + $0x98] sm:$0xff] %vm6033, %v5811
    %6054 = vst.msk [vmem:[#allocation6 + $0xa0] sm:$0xff] %vm6033, %v5816
    %6055 = vst.msk [vmem:[#allocation6 + $0xa8] sm:$0xff] %vm6033, %v5821
    %6056 = vst.msk [vmem:[#allocation6 + $0xb0] sm:$0xff] %vm6033, %v5826
    %6057 = vst.msk [vmem:[#allocation6 + $0xb8] sm:$0xff] %vm6033, %v5831
    %6058 = vst.msk [vmem:[#allocation6 + $0xc0] sm:$0xff] %vm6033, %v5836
    %6059 = vst.msk [vmem:[#allocation6 + $0xc8] sm:$0xff] %vm6033, %v5841
    %6060 = vst.msk [vmem:[#allocation6 + $0xd0] sm:$0xff] %vm6033, %v5846
    %6061 = vst.msk [vmem:[#allocation6 + $0xd8] sm:$0xff] %vm6033, %v5851
    %6062 = vst.msk [vmem:[#allocation6 + $0xe0] sm:$0xff] %vm6033, %v5856
    %6063 = vst.msk [vmem:[#allocation6 + $0xe8] sm:$0xff] %vm6033, %v5861
    %6064 = vst.msk [vmem:[#allocation6 + $0xf0] sm:$0xff] %vm6033, %v5866
    %6065 = vst.msk [vmem:[#allocation6 + $0xf8] sm:$0xff] %vm6033, %v5871
    %6066 = vst.msk [vmem:[#allocation6 + $0x100] sm:$0xff] %vm6033, %v5876
    %6067 = vst.msk [vmem:[#allocation6 + $0x108] sm:$0xff] %vm6033, %v5881
    %6068 = vst.msk [vmem:[#allocation6 + $0x110] sm:$0xff] %vm6033, %v5886
    %6069 = vst.msk [vmem:[#allocation6 + $0x118] sm:$0xff] %vm6033, %v5891
    %6070 = vst.msk [vmem:[#allocation6 + $0x120] sm:$0xff] %vm6033, %v5896
    %6071 = vst.msk [vmem:[#allocation6 + $0x128] sm:$0xff] %vm6033, %v5901
    %6072 = vst.msk [vmem:[#allocation6 + $0x130] sm:$0xff] %vm6033, %v5906
    %6073 = vst.msk [vmem:[#allocation6 + $0x138] sm:$0xff] %vm6033, %v5911
    %6074 = vst.msk [vmem:[#allocation6 + $0x140] sm:$0xff] %vm6033, %v5916
    %6075 = vst.msk [vmem:[#allocation6 + $0x148] sm:$0xff] %vm6033, %v5921
    %6076 = vst.msk [vmem:[#allocation6 + $0x150] sm:$0xff] %vm6033, %v5926
    %6077 = vst.msk [vmem:[#allocation6 + $0x158] sm:$0xff] %vm6033, %v5931
    %6078 = vst.msk [vmem:[#allocation6 + $0x160] sm:$0xff] %vm6033, %v5936
    %6079 = vst.msk [vmem:[#allocation6 + $0x168] sm:$0xff] %vm6033, %v5941
    %6080 = vst.msk [vmem:[#allocation6 + $0x170] sm:$0xff] %vm6033, %v5946
    %6081 = vst.msk [vmem:[#allocation6 + $0x178] sm:$0xff] %vm6033, %v5951
    %6082 = vst.msk [vmem:[#allocation6 + $0x180] sm:$0xff] %vm6033, %v5956
    %6083 = vst.msk [vmem:[#allocation6 + $0x188] sm:$0xff] %vm6033, %v5961
    %6084 = vst.msk [vmem:[#allocation6 + $0x190] sm:$0xff] %vm6033, %v5966
    %6085 = vst.msk [vmem:[#allocation6 + $0x198] sm:$0xff] %vm6033, %v5971
    %6086 = vst.msk [vmem:[#allocation6 + $0x1a0] sm:$0xff] %vm6033, %v5976
    %6087 = vst.msk [vmem:[#allocation6 + $0x1a8] sm:$0xff] %vm6033, %v5981
    %6088 = vst.msk [vmem:[#allocation6 + $0x1b0] sm:$0xff] %vm6033, %v5986
    %6089 = vst.msk [vmem:[#allocation6 + $0x1b8] sm:$0xff] %vm6033, %v5991
    %6090 = vst.msk [vmem:[#allocation6 + $0x1c0] sm:$0xff] %vm6033, %v5996
    %6091 = vst.msk [vmem:[#allocation6 + $0x1c8] sm:$0xff] %vm6033, %v6001
    %6092 = vst.msk [vmem:[#allocation6 + $0x1d0] sm:$0xff] %vm6033, %v6006
    %6093 = vst.msk [vmem:[#allocation6 + $0x1d8] sm:$0xff] %vm6033, %v6011
    %6094 = vst.msk [vmem:[#allocation6 + $0x1e0] sm:$0xff] %vm6033, %v6016
    %6095 = vst.msk [vmem:[#allocation6 + $0x1e8] sm:$0xff] %vm6033, %v6021
    %6096 = vst.msk [vmem:[#allocation6 + $0x1f0] sm:$0xff] %vm6033, %v6026
    %6097 = vst.msk [vmem:[#allocation6 + $0x1f8] sm:$0xff] %vm6033, %v6031
    // Predicated region
    $region42: #{tpu_custom_call.1} parent=1 // pred_check
      _
    $region43: #{tpu_custom_call.1} parent=1 // pred_check_branch
      %6099 = sbr.rel (0) target = $region45
    $region44: #{tpu_custom_call.1} parent=1 // pred_region
      %s6101 = ssub.s32 8192, 8192
      %6102 = vsyncadd [#allocation5], %s6101
      %s6103 = sshll.u32 [#allocation6], 4
      %s6104 = int_to_ptr.vmem [resolvable:$true] %s6103
      %6109 = dma.vmem_to_hbm [thread:$0]  %s6104, 8192, %s9, [#allocation5], 128, 128, 8
    $region45: #{tpu_custom_call.1} parent=1 // pred_fallthru
      _
    // Predicated region
    $region46: #{tpu_custom_call.1} parent=1 // pred_check
      _
    $region47: #{tpu_custom_call.1} parent=1 // pred_check_branch
      %6111 = sbr.rel (0) target = $region49
    $region48: #{tpu_custom_call.1} parent=1 // pred_region
      %6112 = dma.done [#allocation5], 8192
    $region49: #{tpu_custom_call.1} parent=1 // pred_fallthru
      _
    %6113 = vsyncpa [#allocation4], 1
    %6114 = vsyncpa [#allocation5], 1

</llo_original>
